<compile_context>
chip_gen: v6e
topology: v6e:2x2x1
jax: 0.10.0
libtpu: 0.0.40
codegen_flags: <defaults>
</compile_context>

<pallas_src>
import math
from functools import partial

import jax
import jax.numpy as jnp
from jax import lax
from jax.experimental import pallas as pl
from jax.experimental.pallas import tpu as pltpu


def _cnblock_kernel(x_ref, cw_ref, cb_ref, g_ref, be_ref,
                    w1_ref, b1_ref, w2_ref, b2_ref, ls_ref,
                    o_ref, slab_ref,
                    *, H, W, C, TH, RT, mxu_dtype):
    # x_ref   : (1, H, W, C)   full image, VMEM-resident across the row-tile axis
    # slab_ref: (TH+6, W+6, C) f32 scratch: zero-padded, haloed conv input
    # o_ref   : (1, TH, W, C)  output rows [r*TH, r*TH + TH)
    r = pl.program_id(1)

    # ---- build the zero-padded halo slab in VMEM (no HBM pad pass) ----------
    slab_ref[...] = jnp.zeros_like(slab_ref)
    if RT == 1:
        slab_ref[3:3 + H, 3:3 + W, :] = x_ref[0].astype(jnp.float32)
    else:
        @pl.when(r == 0)
        def _():  # top tile: rows 0 .. TH+3 land at slab rows 3 .. TH+6
            slab_ref[3:3 + TH + 3, 3:3 + W, :] = (
                x_ref[0, pl.ds(0, TH + 3), :, :].astype(jnp.float32))

        @pl.when(r == RT - 1)
        def _():  # bottom tile: rows H-TH-3 .. H land at slab rows 0 .. TH+3
            slab_ref[0:TH + 3, 3:3 + W, :] = (
                x_ref[0, pl.ds(H - (TH + 3), TH + 3), :, :].astype(jnp.float32))

        if RT > 2:
            @pl.when(jnp.logical_and(r > 0, r < RT - 1))
            def _():  # interior tile: full TH+6 row window
                start = r * TH - 3
                slab_ref[0:TH + 6, 3:3 + W, :] = (
                    x_ref[0, pl.ds(start, TH + 6), :, :].astype(jnp.float32))

    # ---- depthwise 7x7 conv (groups=C); bias folded into the acc init -------
    acc = jnp.broadcast_to(cb_ref[0].astype(jnp.float32), (TH, W, C))
    for dx in range(7):
        # One sublane-shifted slab per dx (7 shifts total); the dy slices below
        # are cheap major-axis slices of that slab.
        slab_dx = slab_ref[:, dx:dx + W, :]          # (TH+6, W, C)
        for dy in range(7):
            acc = acc + slab_dx[dy:dy + TH, :, :] * cw_ref[dy, dx, :]

    # ---- LayerNorm over the channel axis (eps=1e-6, biased variance) --------
    mean = jnp.mean(acc, axis=-1, keepdims=True)
    cent = acc - mean
    var = jnp.mean(cent * cent, axis=-1, keepdims=True)
    xn = cent * lax.rsqrt(var + 1e-6)
    xn = xn * g_ref[0] + be_ref[0]

    # ---- MLP: Linear(C -> 4C) -> exact GELU -> Linear(4C -> C) --------------
    # bf16 operands feed the MXU; accumulation stays f32.
    xf = xn.reshape(TH * W, C).astype(mxu_dtype)
    h = jnp.dot(xf, w1_ref[...], preferred_element_type=jnp.float32) + b1_ref[0]
    # exact GELU (matches torch.nn.GELU() default)
    h = 0.5 * h * (1.0 + lax.erf(h * (1.0 / math.sqrt(2.0))))
    y = jnp.dot(h.astype(mxu_dtype), w2_ref[...],
                preferred_element_type=jnp.float32) + b2_ref[0]
    y = y.reshape(TH, W, C)

    # ---- layer_scale + (identity) stochastic depth + residual ---------------
    row0 = pl.multiple_of(r * TH, TH)
    resid = x_ref[0, pl.ds(row0, TH), :, :].astype(jnp.float32)
    o_ref[0] = (y * ls_ref[0] + resid).astype(o_ref.dtype)


def _pick_row_tile(H, W):
    """Largest divisor TH of H with TH*W modest -> bounded GELU intermediate."""
    for cand in range(H, 0, -1):
        if H % cand != 0:
            continue
        if cand * W <= 1024 and (cand == H or cand >= 3):
            return cand
    return H


def cnblock_forward_nhwc(x_nhwc, params, *, row_tile=None,
                         mxu_dtype=jnp.bfloat16):
    """x_nhwc: (B, H, W, C). Returns (B, H, W, C)."""
    B, H, W, C = x_nhwc.shape
    TH = _pick_row_tile(H, W) if row_tile is None else int(row_tile)
    if H % TH != 0:
        raise ValueError(f"row_tile={TH} must divide H={H}")
    RT = H // TH
    if RT > 1 and TH < 3:
        raise ValueError("row_tile must be >= 3 when tiling spatially")

    # Note: conv_w is stored (kh, kw, C); importing PyTorch depthwise weights
    # of shape (C, 1, 7, 7) requires weight.squeeze(1).permute(1, 2, 0).
    conv_w = params["conv_w"].astype(jnp.float32)          # (7, 7, C)
    conv_b = params["conv_b"].reshape(1, C).astype(jnp.float32)
    gamma = params["ln_gamma"].reshape(1, C).astype(jnp.float32)
    beta = params["ln_beta"].reshape(1, C).astype(jnp.float32)
    # Weights stored (in, out): y = x @ W + b.  Cast at the MXU boundary only.
    w1 = params["w1"].astype(mxu_dtype)                    # (C, 4C)
    b1 = params["b1"].reshape(1, 4 * C).astype(jnp.float32)
    w2 = params["w2"].astype(mxu_dtype)                    # (4C, C)
    b2 = params["b2"].reshape(1, C).astype(jnp.float32)
    ls = params["layer_scale"].reshape(1, C).astype(jnp.float32)

    kernel = partial(_cnblock_kernel, H=H, W=W, C=C, TH=TH, RT=RT,
                     mxu_dtype=mxu_dtype)

    return pl.pallas_call(
        kernel,
        out_shape=jax.ShapeDtypeStruct((B, H, W, C), x_nhwc.dtype),
        grid=(B, RT),
        in_specs=[
            # Full image, indexed by batch only -> stays resident across the
            # inner row-tile axis; serves both the haloed conv input and the
            # residual (single HBM read of the activation).
            pl.BlockSpec((1, H, W, C), lambda b, r: (b, 0, 0, 0)),
            pl.BlockSpec((7, 7, C), lambda b, r: (0, 0, 0)),
            pl.BlockSpec((1, C), lambda b, r: (0, 0)),
            pl.BlockSpec((1, C), lambda b, r: (0, 0)),
            pl.BlockSpec((1, C), lambda b, r: (0, 0)),
            pl.BlockSpec((C, 4 * C), lambda b, r: (0, 0)),
            pl.BlockSpec((1, 4 * C), lambda b, r: (0, 0)),
            pl.BlockSpec((4 * C, C), lambda b, r: (0, 0)),
            pl.BlockSpec((1, C), lambda b, r: (0, 0)),
            pl.BlockSpec((1, C), lambda b, r: (0, 0)),
        ],
        out_specs=pl.BlockSpec((1, TH, W, C), lambda b, r: (b, r, 0, 0)),
        scratch_shapes=[pltpu.VMEM((TH + 6, W + 6, C), jnp.float32)],
        compiler_params=pltpu.CompilerParams(
            dimension_semantics=("parallel", "parallel"),
            vmem_limit_bytes=48 * 1024 * 1024),
    )(x_nhwc, conv_w, conv_b, gamma, beta, w1, b1, w2, b2, ls)


def cnblock_forward(x_nchw, params, *, row_tile=None, mxu_dtype=jnp.bfloat16):
    """PyTorch-layout entry point: (B, C, H, W) -> (B, C, H, W).

    When stacking CNBlocks, prefer `cnblock_forward_nhwc` to avoid the
    NCHW<->NHWC round trip (a full HBM read+write per transpose).
    """
    x_nhwc = jnp.transpose(x_nchw, (0, 2, 3, 1))
    out = cnblock_forward_nhwc(x_nhwc, params, row_tile=row_tile,
                               mxu_dtype=mxu_dtype)
    return jnp.transpose(out, (0, 3, 1, 2))


def make_params(key, dim, layer_scale=1e-6):
    ks = jax.random.split(key, 6)
    return {
        # depthwise conv weight stored as (kh, kw, C)
        "conv_w": 0.1 * jax.random.normal(ks[0], (7, 7, dim), jnp.float32),
        "conv_b": 0.1 * jax.random.normal(ks[1], (dim,), jnp.float32),
        "ln_gamma": jnp.ones((dim,), jnp.float32),
        "ln_beta": jnp.zeros((dim,), jnp.float32),
        "w1": 0.1 * jax.random.normal(ks[2], (dim, 4 * dim), jnp.float32),
        "b1": 0.1 * jax.random.normal(ks[3], (4 * dim,), jnp.float32),
        "w2": 0.1 * jax.random.normal(ks[4], (4 * dim, dim), jnp.float32),
        "b2": 0.1 * jax.random.normal(ks[5], (dim,), jnp.float32),
        "layer_scale": jnp.full((dim,), layer_scale, jnp.float32),
    }


def _reference_forward(x_nchw, params):
    """Pure-JAX f32 reference of CNBlock.forward (eval mode)."""
    B, C, H, W = x_nchw.shape
    x = jnp.transpose(x_nchw, (0, 2, 3, 1))
    xp = jnp.pad(x, ((0, 0), (3, 3), (3, 3), (0, 0)))
    acc = jnp.zeros((B, H, W, C), jnp.float32)
    cw = params["conv_w"]
    for dy in range(7):
        for dx in range(7):
            acc = acc + xp[:, dy:dy + H, dx:dx + W, :] * cw[dy, dx, :]
    acc = acc + params["conv_b"]
    mean = jnp.mean(acc, axis=-1, keepdims=True)
    cent = acc - mean
    var = jnp.mean(cent * cent, axis=-1, keepdims=True)
    xn = cent * lax.rsqrt(var + 1e-6) * params["ln_gamma"] + params["ln_beta"]
    h = jnp.einsum("bhwc,cd->bhwd", xn, params["w1"],
                   precision=lax.Precision.HIGHEST) + params["b1"]
    h = 0.5 * h * (1.0 + lax.erf(h * (1.0 / math.sqrt(2.0))))
    y = jnp.einsum("bhwd,dc->bhwc", h, params["w2"],
                   precision=lax.Precision.HIGHEST) + params["b2"]
    y = y * params["layer_scale"] + x
    return jnp.transpose(y, (0, 3, 1, 2))


if __name__ == "__main__":
    key = jax.random.PRNGKey(0)
    k_x, k_p = jax.random.split(key)

    B, C, H, W = 2, 4, 16, 16
    x = jax.random.normal(k_x, (B, C, H, W), jnp.float32)
    # layer_scale=1.0 so the correctness check exercises the whole block,
    # not just the residual path.
    params = make_params(k_p, C, layer_scale=1.0)

    ref = _reference_forward(x, params)

    # Exact-f32 MXU path (row_tile=8 -> grid (2, 2), exercises both halo tiles).
    out_f32 = cnblock_forward(x, params, row_tile=8, mxu_dtype=jnp.float32)
    jax.block_until_ready(out_f32)
    assert out_f32.shape == (B, C, H, W)
    assert bool(jnp.allclose(out_f32, ref, rtol=1e-3, atol=1e-3))

    # Default bf16-MXU path (what v6e/v7x should run).
    out = cnblock_forward(x, params, row_tile=8)
    jax.block_until_ready(out)
    assert out.shape == (B, C, H, W)
    assert bool(jnp.allclose(out, ref, rtol=5e-2, atol=5e-2))

    print("KERNEL_OK")
</pallas_src>

<mosaic_0001>
module attributes {stable_mosaic.version = 11 : i64} {
  func.func @_cnblock_kernel(%arg0: i32, %arg1: i32, %arg2: memref<1x16x16x4xf32, #tpu.memory_space<vmem>>, %arg3: memref<7x7x4xf32, #tpu.memory_space<vmem>>, %arg4: memref<1x4xf32, #tpu.memory_space<vmem>>, %arg5: memref<1x4xf32, #tpu.memory_space<vmem>>, %arg6: memref<1x4xf32, #tpu.memory_space<vmem>>, %arg7: memref<4x16xf32, #tpu.memory_space<vmem>>, %arg8: memref<1x16xf32, #tpu.memory_space<vmem>>, %arg9: memref<16x4xf32, #tpu.memory_space<vmem>>, %arg10: memref<1x4xf32, #tpu.memory_space<vmem>>, %arg11: memref<1x4xf32, #tpu.memory_space<vmem>>, %arg12: memref<1x8x16x4xf32, #tpu.memory_space<vmem>>, %arg13: memref<14x22x4xf32, #tpu.memory_space<vmem>>) attributes {dimension_semantics = [#tpu.dimension_semantics<parallel>, #tpu.dimension_semantics<parallel>], iteration_bounds = array<i64: 2, 2>, scalar_prefetch = 0 : i64, scratch_operands = 1 : i64, tpu.core_type = #tpu.core_type<tc>, window_params = [{transform_indices = @transform_0, window_bounds = array<i64: 1, 16, 16, 4>}, {pipeline_mode = #tpu.pipeline_mode<synchronous>, transform_indices = @transform_1, window_bounds = array<i64: 7, 7, 4>}, {pipeline_mode = #tpu.pipeline_mode<synchronous>, transform_indices = @transform_2, window_bounds = array<i64: 1, 4>}, {pipeline_mode = #tpu.pipeline_mode<synchronous>, transform_indices = @transform_3, window_bounds = array<i64: 1, 4>}, {pipeline_mode = #tpu.pipeline_mode<synchronous>, transform_indices = @transform_4, window_bounds = array<i64: 1, 4>}, {pipeline_mode = #tpu.pipeline_mode<synchronous>, transform_indices = @transform_5, window_bounds = array<i64: 4, 16>}, {pipeline_mode = #tpu.pipeline_mode<synchronous>, transform_indices = @transform_6, window_bounds = array<i64: 1, 16>}, {pipeline_mode = #tpu.pipeline_mode<synchronous>, transform_indices = @transform_7, window_bounds = array<i64: 16, 4>}, {pipeline_mode = #tpu.pipeline_mode<synchronous>, transform_indices = @transform_8, window_bounds = array<i64: 1, 4>}, {pipeline_mode = #tpu.pipeline_mode<synchronous>, transform_indices = @transform_9, window_bounds = array<i64: 1, 4>}, {transform_indices = @transform_10, window_bounds = array<i64: 1, 8, 16, 4>}]} {
    %cst = arith.constant 0.000000e+00 : f32
    %0 = vector.broadcast %cst : f32 to vector<14x22x4xf32>
    %c0 = arith.constant 0 : index
    %c0_0 = arith.constant 0 : index
    %c0_1 = arith.constant 0 : index
    %1 = vector.load %arg13[%c0, %c0_0, %c0_1] : memref<14x22x4xf32, #tpu.memory_space<vmem>>, vector<14x22x4xf32>
    tpu.vector_store %arg13[%c0, %c0_0, %c0_1], %0 {strides = array<i32>} : memref<14x22x4xf32, #tpu.memory_space<vmem>>, vector<14x22x4xf32>,
    %c0_i32 = arith.constant 0 : i32
    %2 = arith.cmpi eq, %arg1, %c0_i32 : i32
    %3 = arith.extui %2 : i1 to i32
    %c0_i32_2 = arith.constant 0 : i32
    %4 = arith.cmpi ne, %3, %c0_i32_2 : i32
    scf.if %4 {
      %c0_199 = arith.constant 0 : index
      %c0_200 = arith.constant 0 : index
      %c0_201 = arith.constant 0 : index
      %c0_202 = arith.constant 0 : index
      %426 = vector.load %arg2[%c0_199, %c0_200, %c0_201, %c0_202] : memref<1x16x16x4xf32, #tpu.memory_space<vmem>>, vector<1x11x16x4xf32>
      %427 = vector.shape_cast %426 : vector<1x11x16x4xf32> to vector<11x16x4xf32>
      %c3_203 = arith.constant 3 : index
      %c3_204 = arith.constant 3 : index
      %c0_205 = arith.constant 0 : index
      %428 = vector.load %arg13[%c3_203, %c3_204, %c0_205] : memref<14x22x4xf32, #tpu.memory_space<vmem>>, vector<11x16x4xf32>
      tpu.vector_store %arg13[%c3_203, %c3_204, %c0_205], %427 {strides = array<i32>} : memref<14x22x4xf32, #tpu.memory_space<vmem>>, vector<11x16x4xf32>,
    } else {
    }
    %c1_i32 = arith.constant 1 : i32
    %5 = arith.cmpi eq, %arg1, %c1_i32 : i32
    %6 = arith.extui %5 : i1 to i32
    %c0_i32_3 = arith.constant 0 : i32
    %7 = arith.cmpi ne, %6, %c0_i32_3 : i32
    scf.if %7 {
      %c0_199 = arith.constant 0 : index
      %c5_200 = arith.constant 5 : index
      %c0_201 = arith.constant 0 : index
      %c0_202 = arith.constant 0 : index
      %426 = vector.load %arg2[%c0_199, %c5_200, %c0_201, %c0_202] : memref<1x16x16x4xf32, #tpu.memory_space<vmem>>, vector<1x11x16x4xf32>
      %427 = vector.shape_cast %426 : vector<1x11x16x4xf32> to vector<11x16x4xf32>
      %c0_203 = arith.constant 0 : index
      %c3_204 = arith.constant 3 : index
      %c0_205 = arith.constant 0 : index
      %428 = vector.load %arg13[%c0_203, %c3_204, %c0_205] : memref<14x22x4xf32, #tpu.memory_space<vmem>>, vector<11x16x4xf32>
      tpu.vector_store %arg13[%c0_203, %c3_204, %c0_205], %427 {strides = array<i32>} : memref<14x22x4xf32, #tpu.memory_space<vmem>>, vector<11x16x4xf32>,
    } else {
    }
    %c0_4 = arith.constant 0 : index
    %c0_5 = arith.constant 0 : index
    %8 = vector.load %arg4[%c0_4, %c0_5] : memref<1x4xf32, #tpu.memory_space<vmem>>, vector<1x4xf32>
    %9 = vector.shape_cast %8 : vector<1x4xf32> to vector<4xf32>
    %10 = vector.shape_cast %9 : vector<4xf32> to vector<1x1x4xf32>
    %11 = vector.broadcast %10 : vector<1x1x4xf32> to vector<8x16x4xf32>
    %c0_6 = arith.constant 0 : index
    %c0_7 = arith.constant 0 : index
    %c0_8 = arith.constant 0 : index
    %12 = vector.load %arg13[%c0_6, %c0_7, %c0_8] : memref<14x22x4xf32, #tpu.memory_space<vmem>>, vector<14x16x4xf32>
    %13 = vector.extract_strided_slice %12 {offsets = [0, 0, 0], sizes = [8, 16, 4], strides = [1, 1, 1]} : vector<14x16x4xf32> to vector<8x16x4xf32>
    %c0_9 = arith.constant 0 : index
    %c0_10 = arith.constant 0 : index
    %c0_11 = arith.constant 0 : index
    %14 = vector.load %arg3[%c0_9, %c0_10, %c0_11] : memref<7x7x4xf32, #tpu.memory_space<vmem>>, vector<1x1x4xf32>
    %15 = vector.shape_cast %14 : vector<1x1x4xf32> to vector<4xf32>
    %16 = vector.shape_cast %15 : vector<4xf32> to vector<1x1x4xf32>
    %17 = vector.broadcast %16 : vector<1x1x4xf32> to vector<8x16x4xf32>
    %18 = arith.mulf %13, %17 : vector<8x16x4xf32>
    %19 = arith.addf %11, %18 : vector<8x16x4xf32>
    %20 = vector.extract_strided_slice %12 {offsets = [1, 0, 0], sizes = [8, 16, 4], strides = [1, 1, 1]} : vector<14x16x4xf32> to vector<8x16x4xf32>
    %c1 = arith.constant 1 : index
    %c0_12 = arith.constant 0 : index
    %c0_13 = arith.constant 0 : index
    %21 = vector.load %arg3[%c1, %c0_12, %c0_13] : memref<7x7x4xf32, #tpu.memory_space<vmem>>, vector<1x1x4xf32>
    %22 = vector.shape_cast %21 : vector<1x1x4xf32> to vector<4xf32>
    %23 = vector.shape_cast %22 : vector<4xf32> to vector<1x1x4xf32>
    %24 = vector.broadcast %23 : vector<1x1x4xf32> to vector<8x16x4xf32>
    %25 = arith.mulf %20, %24 : vector<8x16x4xf32>
    %26 = arith.addf %19, %25 : vector<8x16x4xf32>
    %27 = vector.extract_strided_slice %12 {offsets = [2, 0, 0], sizes = [8, 16, 4], strides = [1, 1, 1]} : vector<14x16x4xf32> to vector<8x16x4xf32>
    %c2 = arith.constant 2 : index
    %c0_14 = arith.constant 0 : index
    %c0_15 = arith.constant 0 : index
    %28 = vector.load %arg3[%c2, %c0_14, %c0_15] : memref<7x7x4xf32, #tpu.memory_space<vmem>>, vector<1x1x4xf32>
    %29 = vector.shape_cast %28 : vector<1x1x4xf32> to vector<4xf32>
    %30 = vector.shape_cast %29 : vector<4xf32> to vector<1x1x4xf32>
    %31 = vector.broadcast %30 : vector<1x1x4xf32> to vector<8x16x4xf32>
    %32 = arith.mulf %27, %31 : vector<8x16x4xf32>
    %33 = arith.addf %26, %32 : vector<8x16x4xf32>
    %34 = vector.extract_strided_slice %12 {offsets = [3, 0, 0], sizes = [8, 16, 4], strides = [1, 1, 1]} : vector<14x16x4xf32> to vector<8x16x4xf32>
    %c3 = arith.constant 3 : index
    %c0_16 = arith.constant 0 : index
    %c0_17 = arith.constant 0 : index
    %35 = vector.load %arg3[%c3, %c0_16, %c0_17] : memref<7x7x4xf32, #tpu.memory_space<vmem>>, vector<1x1x4xf32>
    %36 = vector.shape_cast %35 : vector<1x1x4xf32> to vector<4xf32>
    %37 = vector.shape_cast %36 : vector<4xf32> to vector<1x1x4xf32>
    %38 = vector.broadcast %37 : vector<1x1x4xf32> to vector<8x16x4xf32>
    %39 = arith.mulf %34, %38 : vector<8x16x4xf32>
    %40 = arith.addf %33, %39 : vector<8x16x4xf32>
    %41 = vector.extract_strided_slice %12 {offsets = [4, 0, 0], sizes = [8, 16, 4], strides = [1, 1, 1]} : vector<14x16x4xf32> to vector<8x16x4xf32>
    %c4 = arith.constant 4 : index
    %c0_18 = arith.constant 0 : index
    %c0_19 = arith.constant 0 : index
    %42 = vector.load %arg3[%c4, %c0_18, %c0_19] : memref<7x7x4xf32, #tpu.memory_space<vmem>>, vector<1x1x4xf32>
    %43 = vector.shape_cast %42 : vector<1x1x4xf32> to vector<4xf32>
    %44 = vector.shape_cast %43 : vector<4xf32> to vector<1x1x4xf32>
    %45 = vector.broadcast %44 : vector<1x1x4xf32> to vector<8x16x4xf32>
    %46 = arith.mulf %41, %45 : vector<8x16x4xf32>
    %47 = arith.addf %40, %46 : vector<8x16x4xf32>
    %48 = vector.extract_strided_slice %12 {offsets = [5, 0, 0], sizes = [8, 16, 4], strides = [1, 1, 1]} : vector<14x16x4xf32> to vector<8x16x4xf32>
    %c5 = arith.constant 5 : index
    %c0_20 = arith.constant 0 : index
    %c0_21 = arith.constant 0 : index
    %49 = vector.load %arg3[%c5, %c0_20, %c0_21] : memref<7x7x4xf32, #tpu.memory_space<vmem>>, vector<1x1x4xf32>
    %50 = vector.shape_cast %49 : vector<1x1x4xf32> to vector<4xf32>
    %51 = vector.shape_cast %50 : vector<4xf32> to vector<1x1x4xf32>
    %52 = vector.broadcast %51 : vector<1x1x4xf32> to vector<8x16x4xf32>
    %53 = arith.mulf %48, %52 : vector<8x16x4xf32>
    %54 = arith.addf %47, %53 : vector<8x16x4xf32>
    %55 = vector.extract_strided_slice %12 {offsets = [6, 0, 0], sizes = [8, 16, 4], strides = [1, 1, 1]} : vector<14x16x4xf32> to vector<8x16x4xf32>
    %c6 = arith.constant 6 : index
    %c0_22 = arith.constant 0 : index
    %c0_23 = arith.constant 0 : index
    %56 = vector.load %arg3[%c6, %c0_22, %c0_23] : memref<7x7x4xf32, #tpu.memory_space<vmem>>, vector<1x1x4xf32>
    %57 = vector.shape_cast %56 : vector<1x1x4xf32> to vector<4xf32>
    %58 = vector.shape_cast %57 : vector<4xf32> to vector<1x1x4xf32>
    %59 = vector.broadcast %58 : vector<1x1x4xf32> to vector<8x16x4xf32>
    %60 = arith.mulf %55, %59 : vector<8x16x4xf32>
    %61 = arith.addf %54, %60 : vector<8x16x4xf32>
    %c0_24 = arith.constant 0 : index
    %c1_25 = arith.constant 1 : index
    %c0_26 = arith.constant 0 : index
    %62 = vector.load %arg13[%c0_24, %c1_25, %c0_26] : memref<14x22x4xf32, #tpu.memory_space<vmem>>, vector<14x16x4xf32>
    %63 = vector.extract_strided_slice %62 {offsets = [0, 0, 0], sizes = [8, 16, 4], strides = [1, 1, 1]} : vector<14x16x4xf32> to vector<8x16x4xf32>
    %c0_27 = arith.constant 0 : index
    %c1_28 = arith.constant 1 : index
    %c0_29 = arith.constant 0 : index
    %64 = vector.load %arg3[%c0_27, %c1_28, %c0_29] : memref<7x7x4xf32, #tpu.memory_space<vmem>>, vector<1x1x4xf32>
    %65 = vector.shape_cast %64 : vector<1x1x4xf32> to vector<4xf32>
    %66 = vector.shape_cast %65 : vector<4xf32> to vector<1x1x4xf32>
    %67 = vector.broadcast %66 : vector<1x1x4xf32> to vector<8x16x4xf32>
    %68 = arith.mulf %63, %67 : vector<8x16x4xf32>
    %69 = arith.addf %61, %68 : vector<8x16x4xf32>
    %70 = vector.extract_strided_slice %62 {offsets = [1, 0, 0], sizes = [8, 16, 4], strides = [1, 1, 1]} : vector<14x16x4xf32> to vector<8x16x4xf32>
    %c1_30 = arith.constant 1 : index
    %c1_31 = arith.constant 1 : index
    %c0_32 = arith.constant 0 : index
    %71 = vector.load %arg3[%c1_30, %c1_31, %c0_32] : memref<7x7x4xf32, #tpu.memory_space<vmem>>, vector<1x1x4xf32>
    %72 = vector.shape_cast %71 : vector<1x1x4xf32> to vector<4xf32>
    %73 = vector.shape_cast %72 : vector<4xf32> to vector<1x1x4xf32>
    %74 = vector.broadcast %73 : vector<1x1x4xf32> to vector<8x16x4xf32>
    %75 = arith.mulf %70, %74 : vector<8x16x4xf32>
    %76 = arith.addf %69, %75 : vector<8x16x4xf32>
    %77 = vector.extract_strided_slice %62 {offsets = [2, 0, 0], sizes = [8, 16, 4], strides = [1, 1, 1]} : vector<14x16x4xf32> to vector<8x16x4xf32>
    %c2_33 = arith.constant 2 : index
    %c1_34 = arith.constant 1 : index
    %c0_35 = arith.constant 0 : index
    %78 = vector.load %arg3[%c2_33, %c1_34, %c0_35] : memref<7x7x4xf32, #tpu.memory_space<vmem>>, vector<1x1x4xf32>
    %79 = vector.shape_cast %78 : vector<1x1x4xf32> to vector<4xf32>
    %80 = vector.shape_cast %79 : vector<4xf32> to vector<1x1x4xf32>
    %81 = vector.broadcast %80 : vector<1x1x4xf32> to vector<8x16x4xf32>
    %82 = arith.mulf %77, %81 : vector<8x16x4xf32>
    %83 = arith.addf %76, %82 : vector<8x16x4xf32>
    %84 = vector.extract_strided_slice %62 {offsets = [3, 0, 0], sizes = [8, 16, 4], strides = [1, 1, 1]} : vector<14x16x4xf32> to vector<8x16x4xf32>
    %c3_36 = arith.constant 3 : index
    %c1_37 = arith.constant 1 : index
    %c0_38 = arith.constant 0 : index
    %85 = vector.load %arg3[%c3_36, %c1_37, %c0_38] : memref<7x7x4xf32, #tpu.memory_space<vmem>>, vector<1x1x4xf32>
    %86 = vector.shape_cast %85 : vector<1x1x4xf32> to vector<4xf32>
    %87 = vector.shape_cast %86 : vector<4xf32> to vector<1x1x4xf32>
    %88 = vector.broadcast %87 : vector<1x1x4xf32> to vector<8x16x4xf32>
    %89 = arith.mulf %84, %88 : vector<8x16x4xf32>
    %90 = arith.addf %83, %89 : vector<8x16x4xf32>
    %91 = vector.extract_strided_slice %62 {offsets = [4, 0, 0], sizes = [8, 16, 4], strides = [1, 1, 1]} : vector<14x16x4xf32> to vector<8x16x4xf32>
    %c4_39 = arith.constant 4 : index
    %c1_40 = arith.constant 1 : index
    %c0_41 = arith.constant 0 : index
    %92 = vector.load %arg3[%c4_39, %c1_40, %c0_41] : memref<7x7x4xf32, #tpu.memory_space<vmem>>, vector<1x1x4xf32>
    %93 = vector.shape_cast %92 : vector<1x1x4xf32> to vector<4xf32>
    %94 = vector.shape_cast %93 : vector<4xf32> to vector<1x1x4xf32>
    %95 = vector.broadcast %94 : vector<1x1x4xf32> to vector<8x16x4xf32>
    %96 = arith.mulf %91, %95 : vector<8x16x4xf32>
    %97 = arith.addf %90, %96 : vector<8x16x4xf32>
    %98 = vector.extract_strided_slice %62 {offsets = [5, 0, 0], sizes = [8, 16, 4], strides = [1, 1, 1]} : vector<14x16x4xf32> to vector<8x16x4xf32>
    %c5_42 = arith.constant 5 : index
    %c1_43 = arith.constant 1 : index
    %c0_44 = arith.constant 0 : index
    %99 = vector.load %arg3[%c5_42, %c1_43, %c0_44] : memref<7x7x4xf32, #tpu.memory_space<vmem>>, vector<1x1x4xf32>
    %100 = vector.shape_cast %99 : vector<1x1x4xf32> to vector<4xf32>
    %101 = vector.shape_cast %100 : vector<4xf32> to vector<1x1x4xf32>
    %102 = vector.broadcast %101 : vector<1x1x4xf32> to vector<8x16x4xf32>
    %103 = arith.mulf %98, %102 : vector<8x16x4xf32>
    %104 = arith.addf %97, %103 : vector<8x16x4xf32>
    %105 = vector.extract_strided_slice %62 {offsets = [6, 0, 0], sizes = [8, 16, 4], strides = [1, 1, 1]} : vector<14x16x4xf32> to vector<8x16x4xf32>
    %c6_45 = arith.constant 6 : index
    %c1_46 = arith.constant 1 : index
    %c0_47 = arith.constant 0 : index
    %106 = vector.load %arg3[%c6_45, %c1_46, %c0_47] : memref<7x7x4xf32, #tpu.memory_space<vmem>>, vector<1x1x4xf32>
    %107 = vector.shape_cast %106 : vector<1x1x4xf32> to vector<4xf32>
    %108 = vector.shape_cast %107 : vector<4xf32> to vector<1x1x4xf32>
    %109 = vector.broadcast %108 : vector<1x1x4xf32> to vector<8x16x4xf32>
    %110 = arith.mulf %105, %109 : vector<8x16x4xf32>
    %111 = arith.addf %104, %110 : vector<8x16x4xf32>
    %c0_48 = arith.constant 0 : index
    %c2_49 = arith.constant 2 : index
    %c0_50 = arith.constant 0 : index
    %112 = vector.load %arg13[%c0_48, %c2_49, %c0_50] : memref<14x22x4xf32, #tpu.memory_space<vmem>>, vector<14x16x4xf32>
    %113 = vector.extract_strided_slice %112 {offsets = [0, 0, 0], sizes = [8, 16, 4], strides = [1, 1, 1]} : vector<14x16x4xf32> to vector<8x16x4xf32>
    %c0_51 = arith.constant 0 : index
    %c2_52 = arith.constant 2 : index
    %c0_53 = arith.constant 0 : index
    %114 = vector.load %arg3[%c0_51, %c2_52, %c0_53] : memref<7x7x4xf32, #tpu.memory_space<vmem>>, vector<1x1x4xf32>
    %115 = vector.shape_cast %114 : vector<1x1x4xf32> to vector<4xf32>
    %116 = vector.shape_cast %115 : vector<4xf32> to vector<1x1x4xf32>
    %117 = vector.broadcast %116 : vector<1x1x4xf32> to vector<8x16x4xf32>
    %118 = arith.mulf %113, %117 : vector<8x16x4xf32>
    %119 = arith.addf %111, %118 : vector<8x16x4xf32>
    %120 = vector.extract_strided_slice %112 {offsets = [1, 0, 0], sizes = [8, 16, 4], strides = [1, 1, 1]} : vector<14x16x4xf32> to vector<8x16x4xf32>
    %c1_54 = arith.constant 1 : index
    %c2_55 = arith.constant 2 : index
    %c0_56 = arith.constant 0 : index
    %121 = vector.load %arg3[%c1_54, %c2_55, %c0_56] : memref<7x7x4xf32, #tpu.memory_space<vmem>>, vector<1x1x4xf32>
    %122 = vector.shape_cast %121 : vector<1x1x4xf32> to vector<4xf32>
    %123 = vector.shape_cast %122 : vector<4xf32> to vector<1x1x4xf32>
    %124 = vector.broadcast %123 : vector<1x1x4xf32> to vector<8x16x4xf32>
    %125 = arith.mulf %120, %124 : vector<8x16x4xf32>
    %126 = arith.addf %119, %125 : vector<8x16x4xf32>
    %127 = vector.extract_strided_slice %112 {offsets = [2, 0, 0], sizes = [8, 16, 4], strides = [1, 1, 1]} : vector<14x16x4xf32> to vector<8x16x4xf32>
    %c2_57 = arith.constant 2 : index
    %c2_58 = arith.constant 2 : index
    %c0_59 = arith.constant 0 : index
    %128 = vector.load %arg3[%c2_57, %c2_58, %c0_59] : memref<7x7x4xf32, #tpu.memory_space<vmem>>, vector<1x1x4xf32>
    %129 = vector.shape_cast %128 : vector<1x1x4xf32> to vector<4xf32>
    %130 = vector.shape_cast %129 : vector<4xf32> to vector<1x1x4xf32>
    %131 = vector.broadcast %130 : vector<1x1x4xf32> to vector<8x16x4xf32>
    %132 = arith.mulf %127, %131 : vector<8x16x4xf32>
    %133 = arith.addf %126, %132 : vector<8x16x4xf32>
    %134 = vector.extract_strided_slice %112 {offsets = [3, 0, 0], sizes = [8, 16, 4], strides = [1, 1, 1]} : vector<14x16x4xf32> to vector<8x16x4xf32>
    %c3_60 = arith.constant 3 : index
    %c2_61 = arith.constant 2 : index
    %c0_62 = arith.constant 0 : index
    %135 = vector.load %arg3[%c3_60, %c2_61, %c0_62] : memref<7x7x4xf32, #tpu.memory_space<vmem>>, vector<1x1x4xf32>
    %136 = vector.shape_cast %135 : vector<1x1x4xf32> to vector<4xf32>
    %137 = vector.shape_cast %136 : vector<4xf32> to vector<1x1x4xf32>
    %138 = vector.broadcast %137 : vector<1x1x4xf32> to vector<8x16x4xf32>
    %139 = arith.mulf %134, %138 : vector<8x16x4xf32>
    %140 = arith.addf %133, %139 : vector<8x16x4xf32>
    %141 = vector.extract_strided_slice %112 {offsets = [4, 0, 0], sizes = [8, 16, 4], strides = [1, 1, 1]} : vector<14x16x4xf32> to vector<8x16x4xf32>
    %c4_63 = arith.constant 4 : index
    %c2_64 = arith.constant 2 : index
    %c0_65 = arith.constant 0 : index
    %142 = vector.load %arg3[%c4_63, %c2_64, %c0_65] : memref<7x7x4xf32, #tpu.memory_space<vmem>>, vector<1x1x4xf32>
    %143 = vector.shape_cast %142 : vector<1x1x4xf32> to vector<4xf32>
    %144 = vector.shape_cast %143 : vector<4xf32> to vector<1x1x4xf32>
    %145 = vector.broadcast %144 : vector<1x1x4xf32> to vector<8x16x4xf32>
    %146 = arith.mulf %141, %145 : vector<8x16x4xf32>
    %147 = arith.addf %140, %146 : vector<8x16x4xf32>
    %148 = vector.extract_strided_slice %112 {offsets = [5, 0, 0], sizes = [8, 16, 4], strides = [1, 1, 1]} : vector<14x16x4xf32> to vector<8x16x4xf32>
    %c5_66 = arith.constant 5 : index
    %c2_67 = arith.constant 2 : index
    %c0_68 = arith.constant 0 : index
    %149 = vector.load %arg3[%c5_66, %c2_67, %c0_68] : memref<7x7x4xf32, #tpu.memory_space<vmem>>, vector<1x1x4xf32>
    %150 = vector.shape_cast %149 : vector<1x1x4xf32> to vector<4xf32>
    %151 = vector.shape_cast %150 : vector<4xf32> to vector<1x1x4xf32>
    %152 = vector.broadcast %151 : vector<1x1x4xf32> to vector<8x16x4xf32>
    %153 = arith.mulf %148, %152 : vector<8x16x4xf32>
    %154 = arith.addf %147, %153 : vector<8x16x4xf32>
    %155 = vector.extract_strided_slice %112 {offsets = [6, 0, 0], sizes = [8, 16, 4], strides = [1, 1, 1]} : vector<14x16x4xf32> to vector<8x16x4xf32>
    %c6_69 = arith.constant 6 : index
    %c2_70 = arith.constant 2 : index
    %c0_71 = arith.constant 0 : index
    %156 = vector.load %arg3[%c6_69, %c2_70, %c0_71] : memref<7x7x4xf32, #tpu.memory_space<vmem>>, vector<1x1x4xf32>
    %157 = vector.shape_cast %156 : vector<1x1x4xf32> to vector<4xf32>
    %158 = vector.shape_cast %157 : vector<4xf32> to vector<1x1x4xf32>
    %159 = vector.broadcast %158 : vector<1x1x4xf32> to vector<8x16x4xf32>
    %160 = arith.mulf %155, %159 : vector<8x16x4xf32>
    %161 = arith.addf %154, %160 : vector<8x16x4xf32>
    %c0_72 = arith.constant 0 : index
    %c3_73 = arith.constant 3 : index
    %c0_74 = arith.constant 0 : index
    %162 = vector.load %arg13[%c0_72, %c3_73, %c0_74] : memref<14x22x4xf32, #tpu.memory_space<vmem>>, vector<14x16x4xf32>
    %163 = vector.extract_strided_slice %162 {offsets = [0, 0, 0], sizes = [8, 16, 4], strides = [1, 1, 1]} : vector<14x16x4xf32> to vector<8x16x4xf32>
    %c0_75 = arith.constant 0 : index
    %c3_76 = arith.constant 3 : index
    %c0_77 = arith.constant 0 : index
    %164 = vector.load %arg3[%c0_75, %c3_76, %c0_77] : memref<7x7x4xf32, #tpu.memory_space<vmem>>, vector<1x1x4xf32>
    %165 = vector.shape_cast %164 : vector<1x1x4xf32> to vector<4xf32>
    %166 = vector.shape_cast %165 : vector<4xf32> to vector<1x1x4xf32>
    %167 = vector.broadcast %166 : vector<1x1x4xf32> to vector<8x16x4xf32>
    %168 = arith.mulf %163, %167 : vector<8x16x4xf32>
    %169 = arith.addf %161, %168 : vector<8x16x4xf32>
    %170 = vector.extract_strided_slice %162 {offsets = [1, 0, 0], sizes = [8, 16, 4], strides = [1, 1, 1]} : vector<14x16x4xf32> to vector<8x16x4xf32>
    %c1_78 = arith.constant 1 : index
    %c3_79 = arith.constant 3 : index
    %c0_80 = arith.constant 0 : index
    %171 = vector.load %arg3[%c1_78, %c3_79, %c0_80] : memref<7x7x4xf32, #tpu.memory_space<vmem>>, vector<1x1x4xf32>
    %172 = vector.shape_cast %171 : vector<1x1x4xf32> to vector<4xf32>
    %173 = vector.shape_cast %172 : vector<4xf32> to vector<1x1x4xf32>
    %174 = vector.broadcast %173 : vector<1x1x4xf32> to vector<8x16x4xf32>
    %175 = arith.mulf %170, %174 : vector<8x16x4xf32>
    %176 = arith.addf %169, %175 : vector<8x16x4xf32>
    %177 = vector.extract_strided_slice %162 {offsets = [2, 0, 0], sizes = [8, 16, 4], strides = [1, 1, 1]} : vector<14x16x4xf32> to vector<8x16x4xf32>
    %c2_81 = arith.constant 2 : index
    %c3_82 = arith.constant 3 : index
    %c0_83 = arith.constant 0 : index
    %178 = vector.load %arg3[%c2_81, %c3_82, %c0_83] : memref<7x7x4xf32, #tpu.memory_space<vmem>>, vector<1x1x4xf32>
    %179 = vector.shape_cast %178 : vector<1x1x4xf32> to vector<4xf32>
    %180 = vector.shape_cast %179 : vector<4xf32> to vector<1x1x4xf32>
    %181 = vector.broadcast %180 : vector<1x1x4xf32> to vector<8x16x4xf32>
    %182 = arith.mulf %177, %181 : vector<8x16x4xf32>
    %183 = arith.addf %176, %182 : vector<8x16x4xf32>
    %184 = vector.extract_strided_slice %162 {offsets = [3, 0, 0], sizes = [8, 16, 4], strides = [1, 1, 1]} : vector<14x16x4xf32> to vector<8x16x4xf32>
    %c3_84 = arith.constant 3 : index
    %c3_85 = arith.constant 3 : index
    %c0_86 = arith.constant 0 : index
    %185 = vector.load %arg3[%c3_84, %c3_85, %c0_86] : memref<7x7x4xf32, #tpu.memory_space<vmem>>, vector<1x1x4xf32>
    %186 = vector.shape_cast %185 : vector<1x1x4xf32> to vector<4xf32>
    %187 = vector.shape_cast %186 : vector<4xf32> to vector<1x1x4xf32>
    %188 = vector.broadcast %187 : vector<1x1x4xf32> to vector<8x16x4xf32>
    %189 = arith.mulf %184, %188 : vector<8x16x4xf32>
    %190 = arith.addf %183, %189 : vector<8x16x4xf32>
    %191 = vector.extract_strided_slice %162 {offsets = [4, 0, 0], sizes = [8, 16, 4], strides = [1, 1, 1]} : vector<14x16x4xf32> to vector<8x16x4xf32>
    %c4_87 = arith.constant 4 : index
    %c3_88 = arith.constant 3 : index
    %c0_89 = arith.constant 0 : index
    %192 = vector.load %arg3[%c4_87, %c3_88, %c0_89] : memref<7x7x4xf32, #tpu.memory_space<vmem>>, vector<1x1x4xf32>
    %193 = vector.shape_cast %192 : vector<1x1x4xf32> to vector<4xf32>
    %194 = vector.shape_cast %193 : vector<4xf32> to vector<1x1x4xf32>
    %195 = vector.broadcast %194 : vector<1x1x4xf32> to vector<8x16x4xf32>
    %196 = arith.mulf %191, %195 : vector<8x16x4xf32>
    %197 = arith.addf %190, %196 : vector<8x16x4xf32>
    %198 = vector.extract_strided_slice %162 {offsets = [5, 0, 0], sizes = [8, 16, 4], strides = [1, 1, 1]} : vector<14x16x4xf32> to vector<8x16x4xf32>
    %c5_90 = arith.constant 5 : index
    %c3_91 = arith.constant 3 : index
    %c0_92 = arith.constant 0 : index
    %199 = vector.load %arg3[%c5_90, %c3_91, %c0_92] : memref<7x7x4xf32, #tpu.memory_space<vmem>>, vector<1x1x4xf32>
    %200 = vector.shape_cast %199 : vector<1x1x4xf32> to vector<4xf32>
    %201 = vector.shape_cast %200 : vector<4xf32> to vector<1x1x4xf32>
    %202 = vector.broadcast %201 : vector<1x1x4xf32> to vector<8x16x4xf32>
    %203 = arith.mulf %198, %202 : vector<8x16x4xf32>
    %204 = arith.addf %197, %203 : vector<8x16x4xf32>
    %205 = vector.extract_strided_slice %162 {offsets = [6, 0, 0], sizes = [8, 16, 4], strides = [1, 1, 1]} : vector<14x16x4xf32> to vector<8x16x4xf32>
    %c6_93 = arith.constant 6 : index
    %c3_94 = arith.constant 3 : index
    %c0_95 = arith.constant 0 : index
    %206 = vector.load %arg3[%c6_93, %c3_94, %c0_95] : memref<7x7x4xf32, #tpu.memory_space<vmem>>, vector<1x1x4xf32>
    %207 = vector.shape_cast %206 : vector<1x1x4xf32> to vector<4xf32>
    %208 = vector.shape_cast %207 : vector<4xf32> to vector<1x1x4xf32>
    %209 = vector.broadcast %208 : vector<1x1x4xf32> to vector<8x16x4xf32>
    %210 = arith.mulf %205, %209 : vector<8x16x4xf32>
    %211 = arith.addf %204, %210 : vector<8x16x4xf32>
    %c0_96 = arith.constant 0 : index
    %c4_97 = arith.constant 4 : index
    %c0_98 = arith.constant 0 : index
    %212 = vector.load %arg13[%c0_96, %c4_97, %c0_98] : memref<14x22x4xf32, #tpu.memory_space<vmem>>, vector<14x16x4xf32>
    %213 = vector.extract_strided_slice %212 {offsets = [0, 0, 0], sizes = [8, 16, 4], strides = [1, 1, 1]} : vector<14x16x4xf32> to vector<8x16x4xf32>
    %c0_99 = arith.constant 0 : index
    %c4_100 = arith.constant 4 : index
    %c0_101 = arith.constant 0 : index
    %214 = vector.load %arg3[%c0_99, %c4_100, %c0_101] : memref<7x7x4xf32, #tpu.memory_space<vmem>>, vector<1x1x4xf32>
    %215 = vector.shape_cast %214 : vector<1x1x4xf32> to vector<4xf32>
    %216 = vector.shape_cast %215 : vector<4xf32> to vector<1x1x4xf32>
    %217 = vector.broadcast %216 : vector<1x1x4xf32> to vector<8x16x4xf32>
    %218 = arith.mulf %213, %217 : vector<8x16x4xf32>
    %219 = arith.addf %211, %218 : vector<8x16x4xf32>
    %220 = vector.extract_strided_slice %212 {offsets = [1, 0, 0], sizes = [8, 16, 4], strides = [1, 1, 1]} : vector<14x16x4xf32> to vector<8x16x4xf32>
    %c1_102 = arith.constant 1 : index
    %c4_103 = arith.constant 4 : index
    %c0_104 = arith.constant 0 : index
    %221 = vector.load %arg3[%c1_102, %c4_103, %c0_104] : memref<7x7x4xf32, #tpu.memory_space<vmem>>, vector<1x1x4xf32>
    %222 = vector.shape_cast %221 : vector<1x1x4xf32> to vector<4xf32>
    %223 = vector.shape_cast %222 : vector<4xf32> to vector<1x1x4xf32>
    %224 = vector.broadcast %223 : vector<1x1x4xf32> to vector<8x16x4xf32>
    %225 = arith.mulf %220, %224 : vector<8x16x4xf32>
    %226 = arith.addf %219, %225 : vector<8x16x4xf32>
    %227 = vector.extract_strided_slice %212 {offsets = [2, 0, 0], sizes = [8, 16, 4], strides = [1, 1, 1]} : vector<14x16x4xf32> to vector<8x16x4xf32>
    %c2_105 = arith.constant 2 : index
    %c4_106 = arith.constant 4 : index
    %c0_107 = arith.constant 0 : index
    %228 = vector.load %arg3[%c2_105, %c4_106, %c0_107] : memref<7x7x4xf32, #tpu.memory_space<vmem>>, vector<1x1x4xf32>
    %229 = vector.shape_cast %228 : vector<1x1x4xf32> to vector<4xf32>
    %230 = vector.shape_cast %229 : vector<4xf32> to vector<1x1x4xf32>
    %231 = vector.broadcast %230 : vector<1x1x4xf32> to vector<8x16x4xf32>
    %232 = arith.mulf %227, %231 : vector<8x16x4xf32>
    %233 = arith.addf %226, %232 : vector<8x16x4xf32>
    %234 = vector.extract_strided_slice %212 {offsets = [3, 0, 0], sizes = [8, 16, 4], strides = [1, 1, 1]} : vector<14x16x4xf32> to vector<8x16x4xf32>
    %c3_108 = arith.constant 3 : index
    %c4_109 = arith.constant 4 : index
    %c0_110 = arith.constant 0 : index
    %235 = vector.load %arg3[%c3_108, %c4_109, %c0_110] : memref<7x7x4xf32, #tpu.memory_space<vmem>>, vector<1x1x4xf32>
    %236 = vector.shape_cast %235 : vector<1x1x4xf32> to vector<4xf32>
    %237 = vector.shape_cast %236 : vector<4xf32> to vector<1x1x4xf32>
    %238 = vector.broadcast %237 : vector<1x1x4xf32> to vector<8x16x4xf32>
    %239 = arith.mulf %234, %238 : vector<8x16x4xf32>
    %240 = arith.addf %233, %239 : vector<8x16x4xf32>
    %241 = vector.extract_strided_slice %212 {offsets = [4, 0, 0], sizes = [8, 16, 4], strides = [1, 1, 1]} : vector<14x16x4xf32> to vector<8x16x4xf32>
    %c4_111 = arith.constant 4 : index
    %c4_112 = arith.constant 4 : index
    %c0_113 = arith.constant 0 : index
    %242 = vector.load %arg3[%c4_111, %c4_112, %c0_113] : memref<7x7x4xf32, #tpu.memory_space<vmem>>, vector<1x1x4xf32>
    %243 = vector.shape_cast %242 : vector<1x1x4xf32> to vector<4xf32>
    %244 = vector.shape_cast %243 : vector<4xf32> to vector<1x1x4xf32>
    %245 = vector.broadcast %244 : vector<1x1x4xf32> to vector<8x16x4xf32>
    %246 = arith.mulf %241, %245 : vector<8x16x4xf32>
    %247 = arith.addf %240, %246 : vector<8x16x4xf32>
    %248 = vector.extract_strided_slice %212 {offsets = [5, 0, 0], sizes = [8, 16, 4], strides = [1, 1, 1]} : vector<14x16x4xf32> to vector<8x16x4xf32>
    %c5_114 = arith.constant 5 : index
    %c4_115 = arith.constant 4 : index
    %c0_116 = arith.constant 0 : index
    %249 = vector.load %arg3[%c5_114, %c4_115, %c0_116] : memref<7x7x4xf32, #tpu.memory_space<vmem>>, vector<1x1x4xf32>
    %250 = vector.shape_cast %249 : vector<1x1x4xf32> to vector<4xf32>
    %251 = vector.shape_cast %250 : vector<4xf32> to vector<1x1x4xf32>
    %252 = vector.broadcast %251 : vector<1x1x4xf32> to vector<8x16x4xf32>
    %253 = arith.mulf %248, %252 : vector<8x16x4xf32>
    %254 = arith.addf %247, %253 : vector<8x16x4xf32>
    %255 = vector.extract_strided_slice %212 {offsets = [6, 0, 0], sizes = [8, 16, 4], strides = [1, 1, 1]} : vector<14x16x4xf32> to vector<8x16x4xf32>
    %c6_117 = arith.constant 6 : index
    %c4_118 = arith.constant 4 : index
    %c0_119 = arith.constant 0 : index
    %256 = vector.load %arg3[%c6_117, %c4_118, %c0_119] : memref<7x7x4xf32, #tpu.memory_space<vmem>>, vector<1x1x4xf32>
    %257 = vector.shape_cast %256 : vector<1x1x4xf32> to vector<4xf32>
    %258 = vector.shape_cast %257 : vector<4xf32> to vector<1x1x4xf32>
    %259 = vector.broadcast %258 : vector<1x1x4xf32> to vector<8x16x4xf32>
    %260 = arith.mulf %255, %259 : vector<8x16x4xf32>
    %261 = arith.addf %254, %260 : vector<8x16x4xf32>
    %c0_120 = arith.constant 0 : index
    %c5_121 = arith.constant 5 : index
    %c0_122 = arith.constant 0 : index
    %262 = vector.load %arg13[%c0_120, %c5_121, %c0_122] : memref<14x22x4xf32, #tpu.memory_space<vmem>>, vector<14x16x4xf32>
    %263 = vector.extract_strided_slice %262 {offsets = [0, 0, 0], sizes = [8, 16, 4], strides = [1, 1, 1]} : vector<14x16x4xf32> to vector<8x16x4xf32>
    %c0_123 = arith.constant 0 : index
    %c5_124 = arith.constant 5 : index
    %c0_125 = arith.constant 0 : index
    %264 = vector.load %arg3[%c0_123, %c5_124, %c0_125] : memref<7x7x4xf32, #tpu.memory_space<vmem>>, vector<1x1x4xf32>
    %265 = vector.shape_cast %264 : vector<1x1x4xf32> to vector<4xf32>
    %266 = vector.shape_cast %265 : vector<4xf32> to vector<1x1x4xf32>
    %267 = vector.broadcast %266 : vector<1x1x4xf32> to vector<8x16x4xf32>
    %268 = arith.mulf %263, %267 : vector<8x16x4xf32>
    %269 = arith.addf %261, %268 : vector<8x16x4xf32>
    %270 = vector.extract_strided_slice %262 {offsets = [1, 0, 0], sizes = [8, 16, 4], strides = [1, 1, 1]} : vector<14x16x4xf32> to vector<8x16x4xf32>
    %c1_126 = arith.constant 1 : index
    %c5_127 = arith.constant 5 : index
    %c0_128 = arith.constant 0 : index
    %271 = vector.load %arg3[%c1_126, %c5_127, %c0_128] : memref<7x7x4xf32, #tpu.memory_space<vmem>>, vector<1x1x4xf32>
    %272 = vector.shape_cast %271 : vector<1x1x4xf32> to vector<4xf32>
    %273 = vector.shape_cast %272 : vector<4xf32> to vector<1x1x4xf32>
    %274 = vector.broadcast %273 : vector<1x1x4xf32> to vector<8x16x4xf32>
    %275 = arith.mulf %270, %274 : vector<8x16x4xf32>
    %276 = arith.addf %269, %275 : vector<8x16x4xf32>
    %277 = vector.extract_strided_slice %262 {offsets = [2, 0, 0], sizes = [8, 16, 4], strides = [1, 1, 1]} : vector<14x16x4xf32> to vector<8x16x4xf32>
    %c2_129 = arith.constant 2 : index
    %c5_130 = arith.constant 5 : index
    %c0_131 = arith.constant 0 : index
    %278 = vector.load %arg3[%c2_129, %c5_130, %c0_131] : memref<7x7x4xf32, #tpu.memory_space<vmem>>, vector<1x1x4xf32>
    %279 = vector.shape_cast %278 : vector<1x1x4xf32> to vector<4xf32>
    %280 = vector.shape_cast %279 : vector<4xf32> to vector<1x1x4xf32>
    %281 = vector.broadcast %280 : vector<1x1x4xf32> to vector<8x16x4xf32>
    %282 = arith.mulf %277, %281 : vector<8x16x4xf32>
    %283 = arith.addf %276, %282 : vector<8x16x4xf32>
    %284 = vector.extract_strided_slice %262 {offsets = [3, 0, 0], sizes = [8, 16, 4], strides = [1, 1, 1]} : vector<14x16x4xf32> to vector<8x16x4xf32>
    %c3_132 = arith.constant 3 : index
    %c5_133 = arith.constant 5 : index
    %c0_134 = arith.constant 0 : index
    %285 = vector.load %arg3[%c3_132, %c5_133, %c0_134] : memref<7x7x4xf32, #tpu.memory_space<vmem>>, vector<1x1x4xf32>
    %286 = vector.shape_cast %285 : vector<1x1x4xf32> to vector<4xf32>
    %287 = vector.shape_cast %286 : vector<4xf32> to vector<1x1x4xf32>
    %288 = vector.broadcast %287 : vector<1x1x4xf32> to vector<8x16x4xf32>
    %289 = arith.mulf %284, %288 : vector<8x16x4xf32>
    %290 = arith.addf %283, %289 : vector<8x16x4xf32>
    %291 = vector.extract_strided_slice %262 {offsets = [4, 0, 0], sizes = [8, 16, 4], strides = [1, 1, 1]} : vector<14x16x4xf32> to vector<8x16x4xf32>
    %c4_135 = arith.constant 4 : index
    %c5_136 = arith.constant 5 : index
    %c0_137 = arith.constant 0 : index
    %292 = vector.load %arg3[%c4_135, %c5_136, %c0_137] : memref<7x7x4xf32, #tpu.memory_space<vmem>>, vector<1x1x4xf32>
    %293 = vector.shape_cast %292 : vector<1x1x4xf32> to vector<4xf32>
    %294 = vector.shape_cast %293 : vector<4xf32> to vector<1x1x4xf32>
    %295 = vector.broadcast %294 : vector<1x1x4xf32> to vector<8x16x4xf32>
    %296 = arith.mulf %291, %295 : vector<8x16x4xf32>
    %297 = arith.addf %290, %296 : vector<8x16x4xf32>
    %298 = vector.extract_strided_slice %262 {offsets = [5, 0, 0], sizes = [8, 16, 4], strides = [1, 1, 1]} : vector<14x16x4xf32> to vector<8x16x4xf32>
    %c5_138 = arith.constant 5 : index
    %c5_139 = arith.constant 5 : index
    %c0_140 = arith.constant 0 : index
    %299 = vector.load %arg3[%c5_138, %c5_139, %c0_140] : memref<7x7x4xf32, #tpu.memory_space<vmem>>, vector<1x1x4xf32>
    %300 = vector.shape_cast %299 : vector<1x1x4xf32> to vector<4xf32>
    %301 = vector.shape_cast %300 : vector<4xf32> to vector<1x1x4xf32>
    %302 = vector.broadcast %301 : vector<1x1x4xf32> to vector<8x16x4xf32>
    %303 = arith.mulf %298, %302 : vector<8x16x4xf32>
    %304 = arith.addf %297, %303 : vector<8x16x4xf32>
    %305 = vector.extract_strided_slice %262 {offsets = [6, 0, 0], sizes = [8, 16, 4], strides = [1, 1, 1]} : vector<14x16x4xf32> to vector<8x16x4xf32>
    %c6_141 = arith.constant 6 : index
    %c5_142 = arith.constant 5 : index
    %c0_143 = arith.constant 0 : index
    %306 = vector.load %arg3[%c6_141, %c5_142, %c0_143] : memref<7x7x4xf32, #tpu.memory_space<vmem>>, vector<1x1x4xf32>
    %307 = vector.shape_cast %306 : vector<1x1x4xf32> to vector<4xf32>
    %308 = vector.shape_cast %307 : vector<4xf32> to vector<1x1x4xf32>
    %309 = vector.broadcast %308 : vector<1x1x4xf32> to vector<8x16x4xf32>
    %310 = arith.mulf %305, %309 : vector<8x16x4xf32>
    %311 = arith.addf %304, %310 : vector<8x16x4xf32>
    %c0_144 = arith.constant 0 : index
    %c6_145 = arith.constant 6 : index
    %c0_146 = arith.constant 0 : index
    %312 = vector.load %arg13[%c0_144, %c6_145, %c0_146] : memref<14x22x4xf32, #tpu.memory_space<vmem>>, vector<14x16x4xf32>
    %313 = vector.extract_strided_slice %312 {offsets = [0, 0, 0], sizes = [8, 16, 4], strides = [1, 1, 1]} : vector<14x16x4xf32> to vector<8x16x4xf32>
    %c0_147 = arith.constant 0 : index
    %c6_148 = arith.constant 6 : index
    %c0_149 = arith.constant 0 : index
    %314 = vector.load %arg3[%c0_147, %c6_148, %c0_149] : memref<7x7x4xf32, #tpu.memory_space<vmem>>, vector<1x1x4xf32>
    %315 = vector.shape_cast %314 : vector<1x1x4xf32> to vector<4xf32>
    %316 = vector.shape_cast %315 : vector<4xf32> to vector<1x1x4xf32>
    %317 = vector.broadcast %316 : vector<1x1x4xf32> to vector<8x16x4xf32>
    %318 = arith.mulf %313, %317 : vector<8x16x4xf32>
    %319 = arith.addf %311, %318 : vector<8x16x4xf32>
    %320 = vector.extract_strided_slice %312 {offsets = [1, 0, 0], sizes = [8, 16, 4], strides = [1, 1, 1]} : vector<14x16x4xf32> to vector<8x16x4xf32>
    %c1_150 = arith.constant 1 : index
    %c6_151 = arith.constant 6 : index
    %c0_152 = arith.constant 0 : index
    %321 = vector.load %arg3[%c1_150, %c6_151, %c0_152] : memref<7x7x4xf32, #tpu.memory_space<vmem>>, vector<1x1x4xf32>
    %322 = vector.shape_cast %321 : vector<1x1x4xf32> to vector<4xf32>
    %323 = vector.shape_cast %322 : vector<4xf32> to vector<1x1x4xf32>
    %324 = vector.broadcast %323 : vector<1x1x4xf32> to vector<8x16x4xf32>
    %325 = arith.mulf %320, %324 : vector<8x16x4xf32>
    %326 = arith.addf %319, %325 : vector<8x16x4xf32>
    %327 = vector.extract_strided_slice %312 {offsets = [2, 0, 0], sizes = [8, 16, 4], strides = [1, 1, 1]} : vector<14x16x4xf32> to vector<8x16x4xf32>
    %c2_153 = arith.constant 2 : index
    %c6_154 = arith.constant 6 : index
    %c0_155 = arith.constant 0 : index
    %328 = vector.load %arg3[%c2_153, %c6_154, %c0_155] : memref<7x7x4xf32, #tpu.memory_space<vmem>>, vector<1x1x4xf32>
    %329 = vector.shape_cast %328 : vector<1x1x4xf32> to vector<4xf32>
    %330 = vector.shape_cast %329 : vector<4xf32> to vector<1x1x4xf32>
    %331 = vector.broadcast %330 : vector<1x1x4xf32> to vector<8x16x4xf32>
    %332 = arith.mulf %327, %331 : vector<8x16x4xf32>
    %333 = arith.addf %326, %332 : vector<8x16x4xf32>
    %334 = vector.extract_strided_slice %312 {offsets = [3, 0, 0], sizes = [8, 16, 4], strides = [1, 1, 1]} : vector<14x16x4xf32> to vector<8x16x4xf32>
    %c3_156 = arith.constant 3 : index
    %c6_157 = arith.constant 6 : index
    %c0_158 = arith.constant 0 : index
    %335 = vector.load %arg3[%c3_156, %c6_157, %c0_158] : memref<7x7x4xf32, #tpu.memory_space<vmem>>, vector<1x1x4xf32>
    %336 = vector.shape_cast %335 : vector<1x1x4xf32> to vector<4xf32>
    %337 = vector.shape_cast %336 : vector<4xf32> to vector<1x1x4xf32>
    %338 = vector.broadcast %337 : vector<1x1x4xf32> to vector<8x16x4xf32>
    %339 = arith.mulf %334, %338 : vector<8x16x4xf32>
    %340 = arith.addf %333, %339 : vector<8x16x4xf32>
    %341 = vector.extract_strided_slice %312 {offsets = [4, 0, 0], sizes = [8, 16, 4], strides = [1, 1, 1]} : vector<14x16x4xf32> to vector<8x16x4xf32>
    %c4_159 = arith.constant 4 : index
    %c6_160 = arith.constant 6 : index
    %c0_161 = arith.constant 0 : index
    %342 = vector.load %arg3[%c4_159, %c6_160, %c0_161] : memref<7x7x4xf32, #tpu.memory_space<vmem>>, vector<1x1x4xf32>
    %343 = vector.shape_cast %342 : vector<1x1x4xf32> to vector<4xf32>
    %344 = vector.shape_cast %343 : vector<4xf32> to vector<1x1x4xf32>
    %345 = vector.broadcast %344 : vector<1x1x4xf32> to vector<8x16x4xf32>
    %346 = arith.mulf %341, %345 : vector<8x16x4xf32>
    %347 = arith.addf %340, %346 : vector<8x16x4xf32>
    %348 = vector.extract_strided_slice %312 {offsets = [5, 0, 0], sizes = [8, 16, 4], strides = [1, 1, 1]} : vector<14x16x4xf32> to vector<8x16x4xf32>
    %c5_162 = arith.constant 5 : index
    %c6_163 = arith.constant 6 : index
    %c0_164 = arith.constant 0 : index
    %349 = vector.load %arg3[%c5_162, %c6_163, %c0_164] : memref<7x7x4xf32, #tpu.memory_space<vmem>>, vector<1x1x4xf32>
    %350 = vector.shape_cast %349 : vector<1x1x4xf32> to vector<4xf32>
    %351 = vector.shape_cast %350 : vector<4xf32> to vector<1x1x4xf32>
    %352 = vector.broadcast %351 : vector<1x1x4xf32> to vector<8x16x4xf32>
    %353 = arith.mulf %348, %352 : vector<8x16x4xf32>
    %354 = arith.addf %347, %353 : vector<8x16x4xf32>
    %355 = vector.extract_strided_slice %312 {offsets = [6, 0, 0], sizes = [8, 16, 4], strides = [1, 1, 1]} : vector<14x16x4xf32> to vector<8x16x4xf32>
    %c6_165 = arith.constant 6 : index
    %c6_166 = arith.constant 6 : index
    %c0_167 = arith.constant 0 : index
    %356 = vector.load %arg3[%c6_165, %c6_166, %c0_167] : memref<7x7x4xf32, #tpu.memory_space<vmem>>, vector<1x1x4xf32>
    %357 = vector.shape_cast %356 : vector<1x1x4xf32> to vector<4xf32>
    %358 = vector.shape_cast %357 : vector<4xf32> to vector<1x1x4xf32>
    %359 = vector.broadcast %358 : vector<1x1x4xf32> to vector<8x16x4xf32>
    %360 = arith.mulf %355, %359 : vector<8x16x4xf32>
    %361 = arith.addf %354, %360 : vector<8x16x4xf32>
    %cst_168 = arith.constant dense<0.000000e+00> : vector<8x16xf32>
    %362 = vector.multi_reduction <add>, %361, %cst_168 [2] : vector<8x16x4xf32> to vector<8x16xf32>
    %363 = vector.shape_cast %362 : vector<8x16xf32> to vector<8x16x1xf32>
    %cst_169 = arith.constant 4.000000e+00 : f32
    %364 = vector.broadcast %cst_169 : f32 to vector<8x16x1xf32>
    %365 = arith.divf %363, %364 : vector<8x16x1xf32>
    %366 = vector.broadcast %365 : vector<8x16x1xf32> to vector<8x16x4xf32>
    %367 = arith.subf %361, %366 : vector<8x16x4xf32>
    %368 = arith.mulf %367, %367 : vector<8x16x4xf32>
    %cst_170 = arith.constant dense<0.000000e+00> : vector<8x16xf32>
    %369 = vector.multi_reduction <add>, %368, %cst_170 [2] : vector<8x16x4xf32> to vector<8x16xf32>
    %370 = vector.shape_cast %369 : vector<8x16xf32> to vector<8x16x1xf32>
    %cst_171 = arith.constant 4.000000e+00 : f32
    %371 = vector.broadcast %cst_171 : f32 to vector<8x16x1xf32>
    %372 = arith.divf %370, %371 : vector<8x16x1xf32>
    %cst_172 = arith.constant 9.99999997E-7 : f32
    %373 = vector.broadcast %cst_172 : f32 to vector<8x16x1xf32>
    %374 = arith.addf %372, %373 : vector<8x16x1xf32>
    %375 = math.rsqrt %374 : vector<8x16x1xf32>
    %376 = vector.broadcast %375 : vector<8x16x1xf32> to vector<8x16x4xf32>
    %377 = arith.mulf %367, %376 : vector<8x16x4xf32>
    %c0_173 = arith.constant 0 : index
    %c0_174 = arith.constant 0 : index
    %378 = vector.load %arg5[%c0_173, %c0_174] : memref<1x4xf32, #tpu.memory_space<vmem>>, vector<1x4xf32>
    %379 = vector.shape_cast %378 : vector<1x4xf32> to vector<4xf32>
    %380 = vector.shape_cast %379 : vector<4xf32> to vector<1x1x4xf32>
    %381 = vector.broadcast %380 : vector<1x1x4xf32> to vector<8x16x4xf32>
    %382 = arith.mulf %377, %381 : vector<8x16x4xf32>
    %c0_175 = arith.constant 0 : index
    %c0_176 = arith.constant 0 : index
    %383 = vector.load %arg6[%c0_175, %c0_176] : memref<1x4xf32, #tpu.memory_space<vmem>>, vector<1x4xf32>
    %384 = vector.shape_cast %383 : vector<1x4xf32> to vector<4xf32>
    %385 = vector.shape_cast %384 : vector<4xf32> to vector<1x1x4xf32>
    %386 = vector.broadcast %385 : vector<1x1x4xf32> to vector<8x16x4xf32>
    %387 = arith.addf %382, %386 : vector<8x16x4xf32>
    %388 = vector.shape_cast %387 : vector<8x16x4xf32> to vector<128x4xf32>
    %c0_177 = arith.constant 0 : index
    %c0_178 = arith.constant 0 : index
    %389 = vector.load %arg7[%c0_177, %c0_178] : memref<4x16xf32, #tpu.memory_space<vmem>>, vector<4x16xf32>
    %cst_179 = arith.constant dense<0.000000e+00> : vector<128x16xf32>
    %390 = tpu.matmul %388, %389, %cst_179 {dimension_numbers = #tpu.dot_dimension_numbers<[1], [0], [0], [1], [0, 0, 1, 1], [], []>} : vector<128x4xf32>, vector<4x16xf32>, vector<128x16xf32> -> vector<128x16xf32>
    %c0_180 = arith.constant 0 : index
    %c0_181 = arith.constant 0 : index
    %391 = vector.load %arg8[%c0_180, %c0_181] : memref<1x16xf32, #tpu.memory_space<vmem>>, vector<1x16xf32>
    %392 = vector.shape_cast %391 : vector<1x16xf32> to vector<16xf32>
    %393 = vector.shape_cast %392 : vector<16xf32> to vector<1x16xf32>
    %394 = vector.broadcast %393 : vector<1x16xf32> to vector<128x16xf32>
    %395 = arith.addf %390, %394 : vector<128x16xf32>
    %cst_182 = arith.constant 5.000000e-01 : f32
    %396 = vector.broadcast %cst_182 : f32 to vector<128x16xf32>
    %397 = arith.mulf %396, %395 : vector<128x16xf32>
    %cst_183 = arith.constant 0.707106769 : f32
    %398 = vector.broadcast %cst_183 : f32 to vector<128x16xf32>
    %399 = arith.mulf %395, %398 : vector<128x16xf32>
    %400 = math.erf %399 : vector<128x16xf32>
    %cst_184 = arith.constant 1.000000e+00 : f32
    %401 = vector.broadcast %cst_184 : f32 to vector<128x16xf32>
    %402 = arith.addf %401, %400 : vector<128x16xf32>
    %403 = arith.mulf %397, %402 : vector<128x16xf32>
    %c0_185 = arith.constant 0 : index
    %c0_186 = arith.constant 0 : index
    %404 = vector.load %arg9[%c0_185, %c0_186] : memref<16x4xf32, #tpu.memory_space<vmem>>, vector<16x4xf32>
    %cst_187 = arith.constant dense<0.000000e+00> : vector<128x4xf32>
    %405 = tpu.matmul %403, %404, %cst_187 {dimension_numbers = #tpu.dot_dimension_numbers<[1], [0], [0], [1], [0, 0, 1, 1], [], []>} : vector<128x16xf32>, vector<16x4xf32>, vector<128x4xf32> -> vector<128x4xf32>
    %c0_188 = arith.constant 0 : index
    %c0_189 = arith.constant 0 : index
    %406 = vector.load %arg10[%c0_188, %c0_189] : memref<1x4xf32, #tpu.memory_space<vmem>>, vector<1x4xf32>
    %407 = vector.shape_cast %406 : vector<1x4xf32> to vector<4xf32>
    %408 = vector.shape_cast %407 : vector<4xf32> to vector<1x4xf32>
    %409 = vector.broadcast %408 : vector<1x4xf32> to vector<128x4xf32>
    %410 = arith.addf %405, %409 : vector<128x4xf32>
    %411 = vector.shape_cast %410 : vector<128x4xf32> to vector<8x16x4xf32>
    %c8_i32 = arith.constant 8 : i32
    %412 = arith.muli %arg1, %c8_i32 : i32
    %413 = tpu.assume_multiple %412, 8 : i32
    %c0_190 = arith.constant 0 : index
    %414 = arith.index_cast %413 : i32 to index
    %c0_191 = arith.constant 0 : index
    %c0_192 = arith.constant 0 : index
    %415 = vector.load %arg2[%c0_190, %414, %c0_191, %c0_192] : memref<1x16x16x4xf32, #tpu.memory_space<vmem>>, vector<1x8x16x4xf32>
    %416 = vector.shape_cast %415 : vector<1x8x16x4xf32> to vector<8x16x4xf32>
    %c0_193 = arith.constant 0 : index
    %c0_194 = arith.constant 0 : index
    %417 = vector.load %arg11[%c0_193, %c0_194] : memref<1x4xf32, #tpu.memory_space<vmem>>, vector<1x4xf32>
    %418 = vector.shape_cast %417 : vector<1x4xf32> to vector<4xf32>
    %419 = vector.shape_cast %418 : vector<4xf32> to vector<1x1x4xf32>
    %420 = vector.broadcast %419 : vector<1x1x4xf32> to vector<8x16x4xf32>
    %421 = arith.mulf %411, %420 : vector<8x16x4xf32>
    %422 = arith.addf %421, %416 : vector<8x16x4xf32>
    %c0_195 = arith.constant 0 : index
    %c0_196 = arith.constant 0 : index
    %c0_197 = arith.constant 0 : index
    %c0_198 = arith.constant 0 : index
    %423 = vector.load %arg12[%c0_195, %c0_196, %c0_197, %c0_198] : memref<1x8x16x4xf32, #tpu.memory_space<vmem>>, vector<1x8x16x4xf32>
    %424 = vector.shape_cast %423 : vector<1x8x16x4xf32> to vector<8x16x4xf32>
    %425 = vector.shape_cast %422 : vector<8x16x4xf32> to vector<1x8x16x4xf32>
    tpu.vector_store %arg12[%c0_195, %c0_196, %c0_197, %c0_198], %425 {strides = array<i32>} : memref<1x8x16x4xf32, #tpu.memory_space<vmem>>, vector<1x8x16x4xf32>,
    return
  }
  func.func @transform_0(%arg0: i32, %arg1: i32) -> (i32, i32, i32, i32) {
    %c0_i32 = arith.constant 0 : i32
    %c0_i32_0 = arith.constant 0 : i32
    %c0_i32_1 = arith.constant 0 : i32
    %c0_i32_2 = arith.constant 0 : i32
    return %arg0, %c0_i32, %c0_i32_0, %c0_i32_1 : i32, i32, i32, i32
  }
  func.func @transform_1(%arg0: i32, %arg1: i32) -> (i32, i32, i32) {
    %c0_i32 = arith.constant 0 : i32
    %c0_i32_0 = arith.constant 0 : i32
    %c0_i32_1 = arith.constant 0 : i32
    %c0_i32_2 = arith.constant 0 : i32
    return %c0_i32, %c0_i32_0, %c0_i32_1 : i32, i32, i32
  }
  func.func @transform_2(%arg0: i32, %arg1: i32) -> (i32, i32) {
    %c0_i32 = arith.constant 0 : i32
    %c0_i32_0 = arith.constant 0 : i32
    %c0_i32_1 = arith.constant 0 : i32
    return %c0_i32, %c0_i32_0 : i32, i32
  }
  func.func @transform_3(%arg0: i32, %arg1: i32) -> (i32, i32) {
    %c0_i32 = arith.constant 0 : i32
    %c0_i32_0 = arith.constant 0 : i32
    %c0_i32_1 = arith.constant 0 : i32
    return %c0_i32, %c0_i32_0 : i32, i32
  }
  func.func @transform_4(%arg0: i32, %arg1: i32) -> (i32, i32) {
    %c0_i32 = arith.constant 0 : i32
    %c0_i32_0 = arith.constant 0 : i32
    %c0_i32_1 = arith.constant 0 : i32
    return %c0_i32, %c0_i32_0 : i32, i32
  }
  func.func @transform_5(%arg0: i32, %arg1: i32) -> (i32, i32) {
    %c0_i32 = arith.constant 0 : i32
    %c0_i32_0 = arith.constant 0 : i32
    %c0_i32_1 = arith.constant 0 : i32
    return %c0_i32, %c0_i32_0 : i32, i32
  }
  func.func @transform_6(%arg0: i32, %arg1: i32) -> (i32, i32) {
    %c0_i32 = arith.constant 0 : i32
    %c0_i32_0 = arith.constant 0 : i32
    %c0_i32_1 = arith.constant 0 : i32
    return %c0_i32, %c0_i32_0 : i32, i32
  }
  func.func @transform_7(%arg0: i32, %arg1: i32) -> (i32, i32) {
    %c0_i32 = arith.constant 0 : i32
    %c0_i32_0 = arith.constant 0 : i32
    %c0_i32_1 = arith.constant 0 : i32
    return %c0_i32, %c0_i32_0 : i32, i32
  }
  func.func @transform_8(%arg0: i32, %arg1: i32) -> (i32, i32) {
    %c0_i32 = arith.constant 0 : i32
    %c0_i32_0 = arith.constant 0 : i32
    %c0_i32_1 = arith.constant 0 : i32
    return %c0_i32, %c0_i32_0 : i32, i32
  }
  func.func @transform_9(%arg0: i32, %arg1: i32) -> (i32, i32) {
    %c0_i32 = arith.constant 0 : i32
    %c0_i32_0 = arith.constant 0 : i32
    %c0_i32_1 = arith.constant 0 : i32
    return %c0_i32, %c0_i32_0 : i32, i32
  }
  func.func @transform_10(%arg0: i32, %arg1: i32) -> (i32, i32, i32, i32) {
    %c0_i32 = arith.constant 0 : i32
    %c0_i32_0 = arith.constant 0 : i32
    %c0_i32_1 = arith.constant 0 : i32
    return %arg0, %arg1, %c0_i32, %c0_i32_0 : i32, i32, i32, i32
  }
}

</mosaic_0001>

<llo_original>
// kernel: tpu_custom_call.1
$region0: #{tpu_custom_call.1}
  #allocation0 [shape = 'u32[]', space=smem, size = 0x4, offset = 0x4, fixed_abs, tag = 'smem constant byte address 0x4 - core index']
  #allocation1 [shape = 'u32[144,128]{1,0:T(1,128)}', space=vmem, size = 0x12000, scoped, tag = 'internal scratch']
  #allocation2 [shape = 'f32[14,22,4]{2,1,0:T(8,128)}', space=vmem, size = 0x2a000, scoped, tag = 'scratch operand']
  %s0 = inlined_call_operand.vmem [shape: f32[2,16,16,4], index: 0, kind: input, shape index: {}]
  %s1 = inlined_call_operand.vmem [shape: f32[7,7,4], index: 1, kind: input, shape index: {}]
  %s2 = inlined_call_operand.vmem [shape: f32[1,4], index: 2, kind: input, shape index: {}]
  %s3 = inlined_call_operand.vmem [shape: f32[1,4], index: 3, kind: input, shape index: {}]
  %s4 = inlined_call_operand.vmem [shape: f32[1,4], index: 4, kind: input, shape index: {}]
  %s5 = inlined_call_operand.vmem [shape: f32[4,16], index: 5, kind: input, shape index: {}]
  %s6 = inlined_call_operand.vmem [shape: f32[1,16], index: 6, kind: input, shape index: {}]
  %s7 = inlined_call_operand.vmem [shape: f32[16,4], index: 7, kind: input, shape index: {}]
  %s8 = inlined_call_operand.vmem [shape: f32[1,4], index: 8, kind: input, shape index: {}]
  %s9 = inlined_call_operand.vmem [shape: f32[1,4], index: 9, kind: input, shape index: {}]
  %s10 = inlined_call_operand.vmem [shape: f32[2,16,16,4], index: 10, kind: output, shape index: {}]
  %s11 = sld [smem:[#allocation0]]
  $region81: #{tpu_custom_call.1} parent=0
    _
  %s13 = ssub.s32 1, %s11
  %s14 = scalar_select 0, %s13, %s11
  loop: start=0, step=1, limit=6
  $region2: #{tpu_custom_call.1} parent=0 // loop_pre_header
    _
  $region3: #{tpu_custom_call.1} parent=0 // loop_header
    %s16 = sphi 0, %s20
    %p17 = scmp.ge.s32.totalorder %s16, 6
    %s23 = sphi 0, %s35
    %s24 = sphi 0, %s31
    %s25 = sphi 0, %s23
    %s26 = sphi 0, %s24
    %s27 = sphi 0, %s25
    %s28 = sphi 0, %s26
    %s38 = sphi 0, %s40
    %s41 = sphi 0, %s38
    %s42 = sphi 0, %s41
    %s58 = sphi 0, %s42
    %s62 = sphi 0, %s62
    %s64 = sphi 0, %s62
    %s65 = sphi 0, %s64
    %s79 = sphi 0, %s65
    %s83 = sphi 0, %s83
    %s85 = sphi 0, %s83
    %s86 = sphi 0, %s85
    %s100 = sphi 0, %s86
    %s104 = sphi 0, %s104
    %s106 = sphi 0, %s104
    %s107 = sphi 0, %s106
    %s121 = sphi 0, %s107
    %s125 = sphi 0, %s125
    %s127 = sphi 0, %s125
    %s128 = sphi 0, %s127
    %s142 = sphi 0, %s128
    %s146 = sphi 0, %s146
    %s148 = sphi 0, %s146
    %s149 = sphi 0, %s148
    %s163 = sphi 0, %s149
    %s167 = sphi 0, %s167
    %s169 = sphi 0, %s167
    %s170 = sphi 0, %s169
    %s184 = sphi 0, %s170
    %s188 = sphi 0, %s188
    %s190 = sphi 0, %s188
    %s191 = sphi 0, %s190
    %s205 = sphi 0, %s191
    %s209 = sphi 0, %s209
    %s211 = sphi 0, %s209
    %s212 = sphi 0, %s211
    %s226 = sphi 0, %s212
    %s230 = sphi 0, %s230
    %s232 = sphi 0, %s230
    %s233 = sphi 0, %s232
    %s247 = sphi 0, %s233
    %s255 = sphi 0, %s257
    %s258 = sphi 0, %s255
    %s259 = sphi 0, %s258
    %s275 = sphi 0, %s259
  $region4: #{tpu_custom_call.1} parent=0 // loop_header_branch
    %19 = sbr.rel (%p17) target = $region8
  $region5: #{tpu_custom_call.1} parent=0 // loop_body
    %s21 = ssub.s32 %s16, 1
    %s22 = ssub.s32 %s16, 2
    %s29 = sadd.s32 1, %s24
    %p30 = scmp.ge.s32.totalorder %s29, 2
    %s31 = scalar_select %p30, 0, %s29
    %s32 = sadd.s32 1, %s23
    %s33 = scalar_select %p30, %s32, %s23
    %p34 = scmp.ge.s32.totalorder %s33, 2
    %s35 = scalar_select %p34, 0, %s33
    %s36 = ssub.s32 %s23, %s35
    %p37 = scmp.eq.s32.totalorder %s36, 0
    %s39 = sadd.s32 %s38, 1
    %s40 = scalar_select %p37, %s38, %s39
    %p43 = pneg %p37
    %p44 = scmp.eq.s32.totalorder %s16, 3
    %p45 = por %p43, %p44
    %p46 = scmp.ne.s32.totalorder %s38, %s41
    %p47 = scmp.eq.s32.totalorder %s16, 0
    %p48 = por %p46, %p47
    %p49 = scmp.ne.s32.totalorder %s38, %s41
    %p50 = scmp.eq.s32.totalorder %s21, 3
    %p51 = por %p49, %p50
    %p52 = scmp.ne.s32.totalorder %s41, %s42
    %p53 = scmp.eq.s32.totalorder %s21, 0
    %p54 = por %p52, %p53
    %p55 = scmp.ne.s32.totalorder %s41, %s42
    %p56 = scmp.eq.s32.totalorder %s22, 3
    %p57 = por %p55, %p56
    %p59 = scmp.ne.s32.totalorder %s42, %s58
    %p60 = scmp.eq.s32.totalorder %s22, 0
    %p61 = por %p59, %p60
    %s63 = sadd.s32 %s62, 1
    %p66 = scmp.eq.s32.totalorder %s16, 3
    %p67 = scmp.ne.s32.totalorder %s62, %s64
    %p68 = scmp.eq.s32.totalorder %s16, 0
    %p69 = por %p67, %p68
    %p70 = scmp.ne.s32.totalorder %s62, %s64
    %p71 = scmp.eq.s32.totalorder %s21, 3
    %p72 = por %p70, %p71
    %p73 = scmp.ne.s32.totalorder %s64, %s65
    %p74 = scmp.eq.s32.totalorder %s21, 0
    %p75 = por %p73, %p74
    %p76 = scmp.ne.s32.totalorder %s64, %s65
    %p77 = scmp.eq.s32.totalorder %s22, 3
    %p78 = por %p76, %p77
    %p80 = scmp.ne.s32.totalorder %s65, %s79
    %p81 = scmp.eq.s32.totalorder %s22, 0
    %p82 = por %p80, %p81
    %s84 = sadd.s32 %s83, 1
    %p87 = scmp.eq.s32.totalorder %s16, 3
    %p88 = scmp.ne.s32.totalorder %s83, %s85
    %p89 = scmp.eq.s32.totalorder %s16, 0
    %p90 = por %p88, %p89
    %p91 = scmp.ne.s32.totalorder %s83, %s85
    %p92 = scmp.eq.s32.totalorder %s21, 3
    %p93 = por %p91, %p92
    %p94 = scmp.ne.s32.totalorder %s85, %s86
    %p95 = scmp.eq.s32.totalorder %s21, 0
    %p96 = por %p94, %p95
    %p97 = scmp.ne.s32.totalorder %s85, %s86
    %p98 = scmp.eq.s32.totalorder %s22, 3
    %p99 = por %p97, %p98
    %p101 = scmp.ne.s32.totalorder %s86, %s100
    %p102 = scmp.eq.s32.totalorder %s22, 0
    %p103 = por %p101, %p102
    %s105 = sadd.s32 %s104, 1
    %p108 = scmp.eq.s32.totalorder %s16, 3
    %p109 = scmp.ne.s32.totalorder %s104, %s106
    %p110 = scmp.eq.s32.totalorder %s16, 0
    %p111 = por %p109, %p110
    %p112 = scmp.ne.s32.totalorder %s104, %s106
    %p113 = scmp.eq.s32.totalorder %s21, 3
    %p114 = por %p112, %p113
    %p115 = scmp.ne.s32.totalorder %s106, %s107
    %p116 = scmp.eq.s32.totalorder %s21, 0
    %p117 = por %p115, %p116
    %p118 = scmp.ne.s32.totalorder %s106, %s107
    %p119 = scmp.eq.s32.totalorder %s22, 3
    %p120 = por %p118, %p119
    %p122 = scmp.ne.s32.totalorder %s107, %s121
    %p123 = scmp.eq.s32.totalorder %s22, 0
    %p124 = por %p122, %p123
    %s126 = sadd.s32 %s125, 1
    %p129 = scmp.eq.s32.totalorder %s16, 3
    %p130 = scmp.ne.s32.totalorder %s125, %s127
    %p131 = scmp.eq.s32.totalorder %s16, 0
    %p132 = por %p130, %p131
    %p133 = scmp.ne.s32.totalorder %s125, %s127
    %p134 = scmp.eq.s32.totalorder %s21, 3
    %p135 = por %p133, %p134
    %p136 = scmp.ne.s32.totalorder %s127, %s128
    %p137 = scmp.eq.s32.totalorder %s21, 0
    %p138 = por %p136, %p137
    %p139 = scmp.ne.s32.totalorder %s127, %s128
    %p140 = scmp.eq.s32.totalorder %s22, 3
    %p141 = por %p139, %p140
    %p143 = scmp.ne.s32.totalorder %s128, %s142
    %p144 = scmp.eq.s32.totalorder %s22, 0
    %p145 = por %p143, %p144
    %s147 = sadd.s32 %s146, 1
    %p150 = scmp.eq.s32.totalorder %s16, 3
    %p151 = scmp.ne.s32.totalorder %s146, %s148
    %p152 = scmp.eq.s32.totalorder %s16, 0
    %p153 = por %p151, %p152
    %p154 = scmp.ne.s32.totalorder %s146, %s148
    %p155 = scmp.eq.s32.totalorder %s21, 3
    %p156 = por %p154, %p155
    %p157 = scmp.ne.s32.totalorder %s148, %s149
    %p158 = scmp.eq.s32.totalorder %s21, 0
    %p159 = por %p157, %p158
    %p160 = scmp.ne.s32.totalorder %s148, %s149
    %p161 = scmp.eq.s32.totalorder %s22, 3
    %p162 = por %p160, %p161
    %p164 = scmp.ne.s32.totalorder %s149, %s163
    %p165 = scmp.eq.s32.totalorder %s22, 0
    %p166 = por %p164, %p165
    %s168 = sadd.s32 %s167, 1
    %p171 = scmp.eq.s32.totalorder %s16, 3
    %p172 = scmp.ne.s32.totalorder %s167, %s169
    %p173 = scmp.eq.s32.totalorder %s16, 0
    %p174 = por %p172, %p173
    %p175 = scmp.ne.s32.totalorder %s167, %s169
    %p176 = scmp.eq.s32.totalorder %s21, 3
    %p177 = por %p175, %p176
    %p178 = scmp.ne.s32.totalorder %s169, %s170
    %p179 = scmp.eq.s32.totalorder %s21, 0
    %p180 = por %p178, %p179
    %p181 = scmp.ne.s32.totalorder %s169, %s170
    %p182 = scmp.eq.s32.totalorder %s22, 3
    %p183 = por %p181, %p182
    %p185 = scmp.ne.s32.totalorder %s170, %s184
    %p186 = scmp.eq.s32.totalorder %s22, 0
    %p187 = por %p185, %p186
    %s189 = sadd.s32 %s188, 1
    %p192 = scmp.eq.s32.totalorder %s16, 3
    %p193 = scmp.ne.s32.totalorder %s188, %s190
    %p194 = scmp.eq.s32.totalorder %s16, 0
    %p195 = por %p193, %p194
    %p196 = scmp.ne.s32.totalorder %s188, %s190
    %p197 = scmp.eq.s32.totalorder %s21, 3
    %p198 = por %p196, %p197
    %p199 = scmp.ne.s32.totalorder %s190, %s191
    %p200 = scmp.eq.s32.totalorder %s21, 0
    %p201 = por %p199, %p200
    %p202 = scmp.ne.s32.totalorder %s190, %s191
    %p203 = scmp.eq.s32.totalorder %s22, 3
    %p204 = por %p202, %p203
    %p206 = scmp.ne.s32.totalorder %s191, %s205
    %p207 = scmp.eq.s32.totalorder %s22, 0
    %p208 = por %p206, %p207
    %s210 = sadd.s32 %s209, 1
    %p213 = scmp.eq.s32.totalorder %s16, 3
    %p214 = scmp.ne.s32.totalorder %s209, %s211
    %p215 = scmp.eq.s32.totalorder %s16, 0
    %p216 = por %p214, %p215
    %p217 = scmp.ne.s32.totalorder %s209, %s211
    %p218 = scmp.eq.s32.totalorder %s21, 3
    %p219 = por %p217, %p218
    %p220 = scmp.ne.s32.totalorder %s211, %s212
    %p221 = scmp.eq.s32.totalorder %s21, 0
    %p222 = por %p220, %p221
    %p223 = scmp.ne.s32.totalorder %s211, %s212
    %p224 = scmp.eq.s32.totalorder %s22, 3
    %p225 = por %p223, %p224
    %p227 = scmp.ne.s32.totalorder %s212, %s226
    %p228 = scmp.eq.s32.totalorder %s22, 0
    %p229 = por %p227, %p228
    %s231 = sadd.s32 %s230, 1
    %p234 = scmp.eq.s32.totalorder %s16, 3
    %p235 = scmp.ne.s32.totalorder %s230, %s232
    %p236 = scmp.eq.s32.totalorder %s16, 0
    %p237 = por %p235, %p236
    %p238 = scmp.ne.s32.totalorder %s230, %s232
    %p239 = scmp.eq.s32.totalorder %s21, 3
    %p240 = por %p238, %p239
    %p241 = scmp.ne.s32.totalorder %s232, %s233
    %p242 = scmp.eq.s32.totalorder %s21, 0
    %p243 = por %p241, %p242
    %p244 = scmp.ne.s32.totalorder %s232, %s233
    %p245 = scmp.eq.s32.totalorder %s22, 3
    %p246 = por %p244, %p245
    %p248 = scmp.ne.s32.totalorder %s233, %s247
    %p249 = scmp.eq.s32.totalorder %s22, 0
    %p250 = por %p248, %p249
    %s251 = ssub.s32 %s23, %s35
    %s252 = ssub.s32 %s24, %s31
    %s253 = sor.u32 %s251, %s252
    %p254 = scmp.eq.s32.totalorder %s253, 0
    %s256 = sadd.s32 %s255, 1
    %s257 = scalar_select %p254, %s255, %s256
    %p260 = pneg %p254
    %p261 = scmp.eq.s32.totalorder %s16, 3
    %p262 = por %p260, %p261
    %p263 = scmp.ne.s32.totalorder %s255, %s258
    %p264 = scmp.eq.s32.totalorder %s16, 0
    %p265 = por %p263, %p264
    %p266 = scmp.ne.s32.totalorder %s255, %s258
    %p267 = scmp.eq.s32.totalorder %s21, 3
    %p268 = por %p266, %p267
    %p269 = scmp.ne.s32.totalorder %s258, %s259
    %p270 = scmp.eq.s32.totalorder %s21, 0
    %p271 = por %p269, %p270
    %p272 = scmp.ne.s32.totalorder %s258, %s259
    %p273 = scmp.eq.s32.totalorder %s22, 3
    %p274 = por %p272, %p273
    %p276 = scmp.ne.s32.totalorder %s259, %s275
    %p277 = scmp.eq.s32.totalorder %s22, 0
    %p278 = por %p276, %p277
    %p279 = scmp.le.s32.totalorder 1, %s16
    %p280 = scmp.lt.s32.totalorder %s16, 5
    %p281 = pnand %p279, %p280
    %p282 = pneg %p281
    // Predicated region
    $region9: #{tpu_custom_call.1} parent=5 // pred_check
      _
    $region10: #{tpu_custom_call.1} parent=5 // pred_check_branch
      %284 = sbr.rel (%p281) target = $region12
    $region11: #{tpu_custom_call.1} parent=5 // pred_region
      %s285 = ssub.s32 %s16, 1
      // Predicated region
      $region13: #{tpu_custom_call.1} parent=11 // pred_check
        %p286 = pneg %p75
      $region14: #{tpu_custom_call.1} parent=11 // pred_check_branch
        %288 = sbr.rel (%p286) target = $region16
      $region15: #{tpu_custom_call.1} parent=11 // pred_region
        _
      $region16: #{tpu_custom_call.1} parent=11 // pred_fallthru
        _
      // Predicated region
      $region17: #{tpu_custom_call.1} parent=11 // pred_check
        %p289 = pneg %p96
      $region18: #{tpu_custom_call.1} parent=11 // pred_check_branch
        %291 = sbr.rel (%p289) target = $region20
      $region19: #{tpu_custom_call.1} parent=11 // pred_region
        _
      $region20: #{tpu_custom_call.1} parent=11 // pred_fallthru
        _
      // Predicated region
      $region21: #{tpu_custom_call.1} parent=11 // pred_check
        %p292 = pneg %p117
      $region22: #{tpu_custom_call.1} parent=11 // pred_check_branch
        %294 = sbr.rel (%p292) target = $region24
      $region23: #{tpu_custom_call.1} parent=11 // pred_region
        _
      $region24: #{tpu_custom_call.1} parent=11 // pred_fallthru
        _
      // Predicated region
      $region25: #{tpu_custom_call.1} parent=11 // pred_check
        %p295 = pneg %p138
      $region26: #{tpu_custom_call.1} parent=11 // pred_check_branch
        %297 = sbr.rel (%p295) target = $region28
      $region27: #{tpu_custom_call.1} parent=11 // pred_region
        _
      $region28: #{tpu_custom_call.1} parent=11 // pred_fallthru
        _
      // Predicated region
      $region29: #{tpu_custom_call.1} parent=11 // pred_check
        %p298 = pneg %p159
      $region30: #{tpu_custom_call.1} parent=11 // pred_check_branch
        %300 = sbr.rel (%p298) target = $region32
      $region31: #{tpu_custom_call.1} parent=11 // pred_region
        _
      $region32: #{tpu_custom_call.1} parent=11 // pred_fallthru
        _
      // Predicated region
      $region33: #{tpu_custom_call.1} parent=11 // pred_check
        %p301 = pneg %p180
      $region34: #{tpu_custom_call.1} parent=11 // pred_check_branch
        %303 = sbr.rel (%p301) target = $region36
      $region35: #{tpu_custom_call.1} parent=11 // pred_region
        _
      $region36: #{tpu_custom_call.1} parent=11 // pred_fallthru
        _
      // Predicated region
      $region37: #{tpu_custom_call.1} parent=11 // pred_check
        %p304 = pneg %p201
      $region38: #{tpu_custom_call.1} parent=11 // pred_check_branch
        %306 = sbr.rel (%p304) target = $region40
      $region39: #{tpu_custom_call.1} parent=11 // pred_region
        _
      $region40: #{tpu_custom_call.1} parent=11 // pred_fallthru
        _
      // Predicated region
      $region41: #{tpu_custom_call.1} parent=11 // pred_check
        %p307 = pneg %p222
      $region42: #{tpu_custom_call.1} parent=11 // pred_check_branch
        %309 = sbr.rel (%p307) target = $region44
      $region43: #{tpu_custom_call.1} parent=11 // pred_region
        _
      $region44: #{tpu_custom_call.1} parent=11 // pred_fallthru
        _
      // Predicated region
      $region45: #{tpu_custom_call.1} parent=11 // pred_check
        %p310 = pneg %p243
      $region46: #{tpu_custom_call.1} parent=11 // pred_check_branch
        %312 = sbr.rel (%p310) target = $region48
      $region47: #{tpu_custom_call.1} parent=11 // pred_region
        _
      $region48: #{tpu_custom_call.1} parent=11 // pred_fallthru
        _
    $region12: #{tpu_custom_call.1} parent=5 // pred_fallthru
      _
    %p313 = scmp.lt.s32.totalorder %s16, 4
    // Predicated region
    $region49: #{tpu_custom_call.1} parent=5 // pred_check
      %p314 = pneg %p313
    $region50: #{tpu_custom_call.1} parent=5 // pred_check_branch
      %316 = sbr.rel (%p314) target = $region52
    $region51: #{tpu_custom_call.1} parent=5 // pred_region
      // Predicated region
      $region53: #{tpu_custom_call.1} parent=51 // pred_check
        %p317 = pneg %p48
      $region54: #{tpu_custom_call.1} parent=51 // pred_check_branch
        %319 = sbr.rel (%p317) target = $region56
      $region55: #{tpu_custom_call.1} parent=51 // pred_region
        %p320 = scmp.lt.s32.totalorder %s23, 1
        %s321 = scalar_select %p320, %s23, 1
        %s322 = smul.addr %s321, 32
        %s323 = smul.addr %s322, 8
        %s324 = scalar_lea.vmem %s0, %s323
      $region56: #{tpu_custom_call.1} parent=51 // pred_fallthru
        _
    $region52: #{tpu_custom_call.1} parent=5 // pred_fallthru
      _
    %p325 = scmp.le.s32.totalorder 1, %s16
    %p326 = scmp.lt.s32.totalorder %s16, 5
    %p327 = pnand %p325, %p326
    %p328 = pneg %p327
    // Predicated region
    $region57: #{tpu_custom_call.1} parent=5 // pred_check
      _
    $region58: #{tpu_custom_call.1} parent=5 // pred_check_branch
      %330 = sbr.rel (%p327) target = $region60
    $region59: #{tpu_custom_call.1} parent=5 // pred_region
      %s331 = ssub.s32 %s16, 1
      %p332 = scmp.lt.s32.totalorder %s25, 1
      %s333 = scalar_select %p332, %s25, 1
      %s334 = smul.addr %s333, 32
      %s335 = smul.addr %s334, 8
      %s336 = scalar_lea.vmem %s0, %s335
      %p337 = pneg %p54
      %p338 = pneg %p51
      %p339 = pneg %p75
      %p340 = pneg %p72
      %p341 = pneg %p96
      %p342 = pneg %p93
      %p343 = pneg %p117
      %p344 = pneg %p114
      %p345 = pneg %p138
      %p346 = pneg %p135
      %p347 = pneg %p159
      %p348 = pneg %p156
      %p349 = pneg %p180
      %p350 = pneg %p177
      %p351 = pneg %p201
      %p352 = pneg %p198
      %p353 = pneg %p222
      %p354 = pneg %p219
      %p355 = pneg %p243
      %p356 = pneg %p240
      %p357 = pneg %p271
      %p358 = pneg %p268
      %s359 = smul.u32 8, %s26
      %p360 = scmp.lt.s32.totalorder %s25, 1
      %s361 = scalar_select %p360, %s25, 1
      %p362 = scmp.lt.s32.totalorder %s359, 15
      %s363 = scalar_select %p362, %s359, 15
      %s364 = smul.addr %s363, 2
      %s365 = smul.addr %s361, 32
      %s366 = sadd.s32 %s364, %s365
      %s367 = smul.addr %s366, 8
      %s368 = scalar_lea.vmem %s10, %s367
      %p369 = scmp.lt.s32.totalorder %s25, 1
      %s370 = scalar_select %p369, %s25, 1
      %s371 = smul.addr %s370, 32
      %s372 = smul.addr %s371, 8
      %s373 = scalar_lea.vmem %s0, %s372
      %s374 = smul.u32 8, %s26
      %p375 = scmp.lt.s32.totalorder %s25, 1
      %s376 = scalar_select %p375, %s25, 1
      %p377 = scmp.lt.s32.totalorder %s374, 15
      %s378 = scalar_select %p377, %s374, 15
      %s379 = smul.addr %s378, 2
      %s380 = smul.addr %s376, 32
      %s381 = sadd.s32 %s379, %s380
      %s382 = smul.addr %s381, 8
      %s383 = scalar_lea.vmem %s10, %s382
      %s384 = smul.u32 8, %s26
      %vm385 = vcmask 31744
      %386 = vst.msk [vmem:[#allocation2] sm:$0xff] %vm385, 0.0
      %387 = vst.msk [vmem:[#allocation2 + $0x8] sm:$0xff] %vm385, 0.0
      %vm388 = vcmask 29696
      %389 = vst.msk [vmem:[#allocation2 + $0x10] sm:$0x3f] %vm388, 0.0
      %390 = vst.msk [vmem:[#allocation2 + $0x18] sm:$0xff] %vm385, 0.0
      %391 = vst.msk [vmem:[#allocation2 + $0x20] sm:$0xff] %vm385, 0.0
      %392 = vst.msk [vmem:[#allocation2 + $0x28] sm:$0x3f] %vm388, 0.0
      %393 = vst.msk [vmem:[#allocation2 + $0x30] sm:$0xff] %vm385, 0.0
      %394 = vst.msk [vmem:[#allocation2 + $0x38] sm:$0xff] %vm385, 0.0
      %395 = vst.msk [vmem:[#allocation2 + $0x40] sm:$0x3f] %vm388, 0.0
      %396 = vst.msk [vmem:[#allocation2 + $0x48] sm:$0xff] %vm385, 0.0
      %397 = vst.msk [vmem:[#allocation2 + $0x50] sm:$0xff] %vm385, 0.0
      %398 = vst.msk [vmem:[#allocation2 + $0x58] sm:$0x3f] %vm388, 0.0
      %399 = vst.msk [vmem:[#allocation2 + $0x60] sm:$0xff] %vm385, 0.0
      %400 = vst.msk [vmem:[#allocation2 + $0x68] sm:$0xff] %vm385, 0.0
      %401 = vst.msk [vmem:[#allocation2 + $0x70] sm:$0x3f] %vm388, 0.0
      %402 = vst.msk [vmem:[#allocation2 + $0x78] sm:$0xff] %vm385, 0.0
      %403 = vst.msk [vmem:[#allocation2 + $0x80] sm:$0xff] %vm385, 0.0
      %404 = vst.msk [vmem:[#allocation2 + $0x88] sm:$0x3f] %vm388, 0.0
      %405 = vst.msk [vmem:[#allocation2 + $0x90] sm:$0xff] %vm385, 0.0
      %406 = vst.msk [vmem:[#allocation2 + $0x98] sm:$0xff] %vm385, 0.0
      %407 = vst.msk [vmem:[#allocation2 + $0xa0] sm:$0x3f] %vm388, 0.0
      %408 = vst.msk [vmem:[#allocation2 + $0xa8] sm:$0xff] %vm385, 0.0
      %409 = vst.msk [vmem:[#allocation2 + $0xb0] sm:$0xff] %vm385, 0.0
      %410 = vst.msk [vmem:[#allocation2 + $0xb8] sm:$0x3f] %vm388, 0.0
      %411 = vst.msk [vmem:[#allocation2 + $0xc0] sm:$0xff] %vm385, 0.0
      %412 = vst.msk [vmem:[#allocation2 + $0xc8] sm:$0xff] %vm385, 0.0
      %413 = vst.msk [vmem:[#allocation2 + $0xd0] sm:$0x3f] %vm388, 0.0
      %414 = vst.msk [vmem:[#allocation2 + $0xd8] sm:$0xff] %vm385, 0.0
      %415 = vst.msk [vmem:[#allocation2 + $0xe0] sm:$0xff] %vm385, 0.0
      %416 = vst.msk [vmem:[#allocation2 + $0xe8] sm:$0x3f] %vm388, 0.0
      %417 = vst.msk [vmem:[#allocation2 + $0xf0] sm:$0xff] %vm385, 0.0
      %418 = vst.msk [vmem:[#allocation2 + $0xf8] sm:$0xff] %vm385, 0.0
      %419 = vst.msk [vmem:[#allocation2 + $0x100] sm:$0x3f] %vm388, 0.0
      %420 = vst.msk [vmem:[#allocation2 + $0x108] sm:$0xff] %vm385, 0.0
      %421 = vst.msk [vmem:[#allocation2 + $0x110] sm:$0xff] %vm385, 0.0
      %422 = vst.msk [vmem:[#allocation2 + $0x118] sm:$0x3f] %vm388, 0.0
      %423 = vst.msk [vmem:[#allocation2 + $0x120] sm:$0xff] %vm385, 0.0
      %424 = vst.msk [vmem:[#allocation2 + $0x128] sm:$0xff] %vm385, 0.0
      %425 = vst.msk [vmem:[#allocation2 + $0x130] sm:$0x3f] %vm388, 0.0
      %426 = vst.msk [vmem:[#allocation2 + $0x138] sm:$0xff] %vm385, 0.0
      %427 = vst.msk [vmem:[#allocation2 + $0x140] sm:$0xff] %vm385, 0.0
      %428 = vst.msk [vmem:[#allocation2 + $0x148] sm:$0x3f] %vm388, 0.0
      %p429 = scmp.eq.s32.totalorder %s26, 0
      // Predicated region
      $region61: #{tpu_custom_call.1} parent=59 // pred_check
        %p430 = pneg %p429
      $region62: #{tpu_custom_call.1} parent=59 // pred_check_branch
        %432 = sbr.rel (%p430) target = $region64
      $region63: #{tpu_custom_call.1} parent=59 // pred_region
        %v433 = vld [vmem:[%s373] sm:$0xff]
        %v434 = vld [vmem:[%s373 + $0x8] sm:$0xff]
        %v435 = vld [vmem:[%s373 + $0x10] sm:$0xff]
        %v436 = vld [vmem:[%s373 + $0x18] sm:$0xff]
        %v437 = vld [vmem:[%s373 + $0x20] sm:$0xff]
        %v438 = vld [vmem:[%s373 + $0x28] sm:$0xff]
        %v439 = vld [vmem:[%s373 + $0x30] sm:$0xff]
        %v440 = vld [vmem:[%s373 + $0x38] sm:$0xff]
        %v441 = vld [vmem:[%s373 + $0x40] sm:$0xff]
        %v442 = vld [vmem:[%s373 + $0x48] sm:$0xff]
        %v443 = vld [vmem:[%s373 + $0x50] sm:$0xff]
        %v444 = vld [vmem:[%s373 + $0x58] sm:$0xff]
        %v445 = vld [vmem:[%s373 + $0x60] sm:$0xff]
        %v446 = vld [vmem:[%s373 + $0x68] sm:$0xff]
        %v447 = vld [vmem:[%s373 + $0x70] sm:$0xff]
        %v448 = vld [vmem:[%s373 + $0x78] sm:$0xff]
        %v449 = vld [vmem:[%s373 + $0x80] sm:$0xff]
        %v450 = vld [vmem:[%s373 + $0x88] sm:$0xff]
        %v451 = vld [vmem:[%s373 + $0x90] sm:$0xff]
        %v452 = vld [vmem:[%s373 + $0x98] sm:$0xff]
        %v453 = vld [vmem:[%s373 + $0xa0] sm:$0xff]
        %v454 = vld [vmem:[%s373 + $0xa8] sm:$0xff]
        %s455 = scalar_lea.vmem [#allocation2], 72
        %456 = vst.msk [vmem:[%s455 + $0x3] sm:$0xff] %vm385, %v433
        %457 = vst.msk [vmem:[%s455 + $0xb] sm:$0xff] %vm385, %v434
        %458 = vst.msk [vmem:[%s455 + $0x1b] sm:$0xff] %vm385, %v435
        %459 = vst.msk [vmem:[%s455 + $0x23] sm:$0xff] %vm385, %v436
        %460 = vst.msk [vmem:[%s455 + $0x33] sm:$0xff] %vm385, %v437
        %461 = vst.msk [vmem:[%s455 + $0x3b] sm:$0xff] %vm385, %v438
        %462 = vst.msk [vmem:[%s455 + $0x4b] sm:$0xff] %vm385, %v439
        %463 = vst.msk [vmem:[%s455 + $0x53] sm:$0xff] %vm385, %v440
        %464 = vst.msk [vmem:[%s455 + $0x63] sm:$0xff] %vm385, %v441
        %465 = vst.msk [vmem:[%s455 + $0x6b] sm:$0xff] %vm385, %v442
        %466 = vst.msk [vmem:[%s455 + $0x7b] sm:$0xff] %vm385, %v443
        %467 = vst.msk [vmem:[%s455 + $0x83] sm:$0xff] %vm385, %v444
        %468 = vst.msk [vmem:[%s455 + $0x93] sm:$0xff] %vm385, %v445
        %469 = vst.msk [vmem:[%s455 + $0x9b] sm:$0xff] %vm385, %v446
        %470 = vst.msk [vmem:[%s455 + $0xab] sm:$0xff] %vm385, %v447
        %471 = vst.msk [vmem:[%s455 + $0xb3] sm:$0xff] %vm385, %v448
        %472 = vst.msk [vmem:[%s455 + $0xc3] sm:$0xff] %vm385, %v449
        %473 = vst.msk [vmem:[%s455 + $0xcb] sm:$0xff] %vm385, %v450
        %474 = vst.msk [vmem:[%s455 + $0xdb] sm:$0xff] %vm385, %v451
        %475 = vst.msk [vmem:[%s455 + $0xe3] sm:$0xff] %vm385, %v452
        %476 = vst.msk [vmem:[%s455 + $0xf3] sm:$0xff] %vm385, %v453
        %477 = vst.msk [vmem:[%s455 + $0xfb] sm:$0xff] %vm385, %v454
      $region64: #{tpu_custom_call.1} parent=59 // pred_fallthru
        _
      %p478 = scmp.eq.s32.totalorder %s26, 1
      // Predicated region
      $region65: #{tpu_custom_call.1} parent=59 // pred_check
        %p479 = pneg %p478
      $region66: #{tpu_custom_call.1} parent=59 // pred_check_branch
        %481 = sbr.rel (%p479) target = $region68
      $region67: #{tpu_custom_call.1} parent=59 // pred_region
        %s482 = scalar_lea.vmem %s373, 80
        %v483 = vld [vmem:[%s482] sm:$0xff]
        %v484 = vld [vmem:[%s482 + $0x8] sm:$0xff]
        %v485 = vld [vmem:[%s482 + $0x10] sm:$0xff]
        %v486 = vld [vmem:[%s482 + $0x18] sm:$0xff]
        %v487 = vld [vmem:[%s482 + $0x20] sm:$0xff]
        %v488 = vld [vmem:[%s482 + $0x28] sm:$0xff]
        %v489 = vld [vmem:[%s482 + $0x30] sm:$0xff]
        %v490 = vld [vmem:[%s482 + $0x38] sm:$0xff]
        %v491 = vld [vmem:[%s482 + $0x40] sm:$0xff]
        %v492 = vld [vmem:[%s482 + $0x48] sm:$0xff]
        %v493 = vld [vmem:[%s482 + $0x50] sm:$0xff]
        %v494 = vld [vmem:[%s482 + $0x58] sm:$0xff]
        %v495 = vld [vmem:[%s482 + $0x60] sm:$0xff]
        %v496 = vld [vmem:[%s482 + $0x68] sm:$0xff]
        %v497 = vld [vmem:[%s482 + $0x70] sm:$0xff]
        %v498 = vld [vmem:[%s482 + $0x78] sm:$0xff]
        %v499 = vld [vmem:[%s482 + $0x80] sm:$0xff]
        %v500 = vld [vmem:[%s482 + $0x88] sm:$0xff]
        %v501 = vld [vmem:[%s482 + $0x90] sm:$0xff]
        %v502 = vld [vmem:[%s482 + $0x98] sm:$0xff]
        %v503 = vld [vmem:[%s482 + $0xa0] sm:$0xff]
        %v504 = vld [vmem:[%s482 + $0xa8] sm:$0xff]
        %505 = vst.msk [vmem:[#allocation2 + $0x3] sm:$0xff] %vm385, %v483
        %506 = vst.msk [vmem:[#allocation2 + $0xb] sm:$0xff] %vm385, %v484
        %507 = vst.msk [vmem:[#allocation2 + $0x1b] sm:$0xff] %vm385, %v485
        %508 = vst.msk [vmem:[#allocation2 + $0x23] sm:$0xff] %vm385, %v486
        %509 = vst.msk [vmem:[#allocation2 + $0x33] sm:$0xff] %vm385, %v487
        %510 = vst.msk [vmem:[#allocation2 + $0x3b] sm:$0xff] %vm385, %v488
        %511 = vst.msk [vmem:[#allocation2 + $0x4b] sm:$0xff] %vm385, %v489
        %512 = vst.msk [vmem:[#allocation2 + $0x53] sm:$0xff] %vm385, %v490
        %513 = vst.msk [vmem:[#allocation2 + $0x63] sm:$0xff] %vm385, %v491
        %514 = vst.msk [vmem:[#allocation2 + $0x6b] sm:$0xff] %vm385, %v492
        %515 = vst.msk [vmem:[#allocation2 + $0x7b] sm:$0xff] %vm385, %v493
        %516 = vst.msk [vmem:[#allocation2 + $0x83] sm:$0xff] %vm385, %v494
        %517 = vst.msk [vmem:[#allocation2 + $0x93] sm:$0xff] %vm385, %v495
        %518 = vst.msk [vmem:[#allocation2 + $0x9b] sm:$0xff] %vm385, %v496
        %519 = vst.msk [vmem:[#allocation2 + $0xab] sm:$0xff] %vm385, %v497
        %520 = vst.msk [vmem:[#allocation2 + $0xb3] sm:$0xff] %vm385, %v498
        %521 = vst.msk [vmem:[#allocation2 + $0xc3] sm:$0xff] %vm385, %v499
        %522 = vst.msk [vmem:[#allocation2 + $0xcb] sm:$0xff] %vm385, %v500
        %523 = vst.msk [vmem:[#allocation2 + $0xdb] sm:$0xff] %vm385, %v501
        %524 = vst.msk [vmem:[#allocation2 + $0xe3] sm:$0xff] %vm385, %v502
        %525 = vst.msk [vmem:[#allocation2 + $0xf3] sm:$0xff] %vm385, %v503
        %526 = vst.msk [vmem:[#allocation2 + $0xfb] sm:$0xff] %vm385, %v504
      $region68: #{tpu_custom_call.1} parent=59 // pred_fallthru
        _
      %v527 = vld [vmem:[%s2] sm:$0x1]
      %v529 = vlaneseq
      %v530 = vshrl.u32 %v529, 7
      %v531 = vsub.s32 0, %v530
      %v532 = vrot.slane %v527, %v531
      %v534 = vld [vmem:[#allocation2] sm:$0xff]
      %v535 = vld [vmem:[#allocation2 + $0x8] sm:$0xff]
      %v536 = vld [vmem:[#allocation2 + $0x18] sm:$0xff]
      %v537 = vld [vmem:[#allocation2 + $0x20] sm:$0xff]
      %v538 = vld [vmem:[#allocation2 + $0x30] sm:$0xff]
      %v539 = vld [vmem:[#allocation2 + $0x38] sm:$0xff]
      %v540 = vld [vmem:[#allocation2 + $0x48] sm:$0xff]
      %v541 = vld [vmem:[#allocation2 + $0x50] sm:$0xff]
      %v542 = vld [vmem:[#allocation2 + $0x60] sm:$0xff]
      %v543 = vld [vmem:[#allocation2 + $0x68] sm:$0xff]
      %v544 = vld [vmem:[#allocation2 + $0x78] sm:$0xff]
      %v545 = vld [vmem:[#allocation2 + $0x80] sm:$0xff]
      %v546 = vld [vmem:[#allocation2 + $0x90] sm:$0xff]
      %v547 = vld [vmem:[#allocation2 + $0x98] sm:$0xff]
      %v548 = vld [vmem:[#allocation2 + $0xa8] sm:$0xff]
      %v549 = vld [vmem:[#allocation2 + $0xb0] sm:$0xff]
      %v550 = vld [vmem:[#allocation2 + $0xc0] sm:$0xff]
      %v551 = vld [vmem:[#allocation2 + $0xc8] sm:$0xff]
      %v552 = vld [vmem:[#allocation2 + $0xd8] sm:$0xff]
      %v553 = vld [vmem:[#allocation2 + $0xe0] sm:$0xff]
      %v554 = vld [vmem:[#allocation2 + $0xf0] sm:$0xff]
      %v555 = vld [vmem:[#allocation2 + $0xf8] sm:$0xff]
      %v556 = vld [vmem:[#allocation2 + $0x108] sm:$0xff]
      %v557 = vld [vmem:[#allocation2 + $0x110] sm:$0xff]
      %v558 = vld [vmem:[#allocation2 + $0x120] sm:$0xff]
      %v559 = vld [vmem:[#allocation2 + $0x128] sm:$0xff]
      %v560 = vld [vmem:[#allocation2 + $0x138] sm:$0xff]
      %v561 = vld [vmem:[#allocation2 + $0x140] sm:$0xff]
      %v562 = vld [vmem:[%s1] sm:$0x1]
      %v563 = vlaneseq
      %v564 = vshrl.u32 %v563, 7
      %v565 = vsub.s32 0, %v564
      %v566 = vrot.slane %v562, %v565
      %v567 = vmul.f32 %v534, %v566
      %v568 = vmul.f32 %v535, %v566
      %v569 = vmul.f32 %v536, %v566
      %v570 = vmul.f32 %v537, %v566
      %v571 = vmul.f32 %v538, %v566
      %v572 = vmul.f32 %v539, %v566
      %v573 = vmul.f32 %v540, %v566
      %v574 = vmul.f32 %v541, %v566
      %v575 = vmul.f32 %v542, %v566
      %v576 = vmul.f32 %v543, %v566
      %v577 = vmul.f32 %v544, %v566
      %v578 = vmul.f32 %v545, %v566
      %v579 = vmul.f32 %v546, %v566
      %v580 = vmul.f32 %v547, %v566
      %v581 = vmul.f32 %v548, %v566
      %v582 = vmul.f32 %v549, %v566
      %v583 = vadd.f32 %v532, %v567
      %v584 = vadd.f32 %v532, %v568
      %v585 = vadd.f32 %v532, %v569
      %v586 = vadd.f32 %v532, %v570
      %v587 = vadd.f32 %v532, %v571
      %v588 = vadd.f32 %v532, %v572
      %v589 = vadd.f32 %v532, %v573
      %v590 = vadd.f32 %v532, %v574
      %v591 = vadd.f32 %v532, %v575
      %v592 = vadd.f32 %v532, %v576
      %v593 = vadd.f32 %v532, %v577
      %v594 = vadd.f32 %v532, %v578
      %v595 = vadd.f32 %v532, %v579
      %v596 = vadd.f32 %v532, %v580
      %v597 = vadd.f32 %v532, %v581
      %v598 = vadd.f32 %v532, %v582
      %s599 = scalar_lea.vmem %s1, 8
      %v600 = vld [vmem:[%s599] sm:$0x1]
      %v601 = vlaneseq
      %v602 = vshrl.u32 %v601, 7
      %v603 = vsub.s32 0, %v602
      %v604 = vrot.slane %v600, %v603
      %v605 = vmul.f32 %v536, %v604
      %v606 = vmul.f32 %v537, %v604
      %v607 = vmul.f32 %v538, %v604
      %v608 = vmul.f32 %v539, %v604
      %v609 = vmul.f32 %v540, %v604
      %v610 = vmul.f32 %v541, %v604
      %v611 = vmul.f32 %v542, %v604
      %v612 = vmul.f32 %v543, %v604
      %v613 = vmul.f32 %v544, %v604
      %v614 = vmul.f32 %v545, %v604
      %v615 = vmul.f32 %v546, %v604
      %v616 = vmul.f32 %v547, %v604
      %v617 = vmul.f32 %v548, %v604
      %v618 = vmul.f32 %v549, %v604
      %v619 = vmul.f32 %v550, %v604
      %v620 = vmul.f32 %v551, %v604
      %v621 = vadd.f32 %v583, %v605
      %v622 = vadd.f32 %v584, %v606
      %v623 = vadd.f32 %v585, %v607
      %v624 = vadd.f32 %v586, %v608
      %v625 = vadd.f32 %v587, %v609
      %v626 = vadd.f32 %v588, %v610
      %v627 = vadd.f32 %v589, %v611
      %v628 = vadd.f32 %v590, %v612
      %v629 = vadd.f32 %v591, %v613
      %v630 = vadd.f32 %v592, %v614
      %v631 = vadd.f32 %v593, %v615
      %v632 = vadd.f32 %v594, %v616
      %v633 = vadd.f32 %v595, %v617
      %v634 = vadd.f32 %v596, %v618
      %v635 = vadd.f32 %v597, %v619
      %v636 = vadd.f32 %v598, %v620
      %s637 = scalar_lea.vmem %s1, 16
      %v638 = vld [vmem:[%s637] sm:$0x1]
      %v639 = vlaneseq
      %v640 = vshrl.u32 %v639, 7
      %v641 = vsub.s32 0, %v640
      %v642 = vrot.slane %v638, %v641
      %v643 = vmul.f32 %v538, %v642
      %v644 = vmul.f32 %v539, %v642
      %v645 = vmul.f32 %v540, %v642
      %v646 = vmul.f32 %v541, %v642
      %v647 = vmul.f32 %v542, %v642
      %v648 = vmul.f32 %v543, %v642
      %v649 = vmul.f32 %v544, %v642
      %v650 = vmul.f32 %v545, %v642
      %v651 = vmul.f32 %v546, %v642
      %v652 = vmul.f32 %v547, %v642
      %v653 = vmul.f32 %v548, %v642
      %v654 = vmul.f32 %v549, %v642
      %v655 = vmul.f32 %v550, %v642
      %v656 = vmul.f32 %v551, %v642
      %v657 = vmul.f32 %v552, %v642
      %v658 = vmul.f32 %v553, %v642
      %v659 = vadd.f32 %v621, %v643
      %v660 = vadd.f32 %v622, %v644
      %v661 = vadd.f32 %v623, %v645
      %v662 = vadd.f32 %v624, %v646
      %v663 = vadd.f32 %v625, %v647
      %v664 = vadd.f32 %v626, %v648
      %v665 = vadd.f32 %v627, %v649
      %v666 = vadd.f32 %v628, %v650
      %v667 = vadd.f32 %v629, %v651
      %v668 = vadd.f32 %v630, %v652
      %v669 = vadd.f32 %v631, %v653
      %v670 = vadd.f32 %v632, %v654
      %v671 = vadd.f32 %v633, %v655
      %v672 = vadd.f32 %v634, %v656
      %v673 = vadd.f32 %v635, %v657
      %v674 = vadd.f32 %v636, %v658
      %s675 = scalar_lea.vmem %s1, 24
      %v676 = vld [vmem:[%s675] sm:$0x1]
      %v677 = vlaneseq
      %v678 = vshrl.u32 %v677, 7
      %v679 = vsub.s32 0, %v678
      %v680 = vrot.slane %v676, %v679
      %v681 = vmul.f32 %v540, %v680
      %v682 = vmul.f32 %v541, %v680
      %v683 = vmul.f32 %v542, %v680
      %v684 = vmul.f32 %v543, %v680
      %v685 = vmul.f32 %v544, %v680
      %v686 = vmul.f32 %v545, %v680
      %v687 = vmul.f32 %v546, %v680
      %v688 = vmul.f32 %v547, %v680
      %v689 = vmul.f32 %v548, %v680
      %v690 = vmul.f32 %v549, %v680
      %v691 = vmul.f32 %v550, %v680
      %v692 = vmul.f32 %v551, %v680
      %v693 = vmul.f32 %v552, %v680
      %v694 = vmul.f32 %v553, %v680
      %v695 = vmul.f32 %v554, %v680
      %v696 = vmul.f32 %v555, %v680
      %v697 = vadd.f32 %v659, %v681
      %v698 = vadd.f32 %v660, %v682
      %v699 = vadd.f32 %v661, %v683
      %v700 = vadd.f32 %v662, %v684
      %v701 = vadd.f32 %v663, %v685
      %v702 = vadd.f32 %v664, %v686
      %v703 = vadd.f32 %v665, %v687
      %v704 = vadd.f32 %v666, %v688
      %v705 = vadd.f32 %v667, %v689
      %v706 = vadd.f32 %v668, %v690
      %v707 = vadd.f32 %v669, %v691
      %v708 = vadd.f32 %v670, %v692
      %v709 = vadd.f32 %v671, %v693
      %v710 = vadd.f32 %v672, %v694
      %v711 = vadd.f32 %v673, %v695
      %v712 = vadd.f32 %v674, %v696
      %s713 = scalar_lea.vmem %s1, 32
      %v714 = vld [vmem:[%s713] sm:$0x1]
      %v715 = vlaneseq
      %v716 = vshrl.u32 %v715, 7
      %v717 = vsub.s32 0, %v716
      %v718 = vrot.slane %v714, %v717
      %v719 = vmul.f32 %v542, %v718
      %v720 = vmul.f32 %v543, %v718
      %v721 = vmul.f32 %v544, %v718
      %v722 = vmul.f32 %v545, %v718
      %v723 = vmul.f32 %v546, %v718
      %v724 = vmul.f32 %v547, %v718
      %v725 = vmul.f32 %v548, %v718
      %v726 = vmul.f32 %v549, %v718
      %v727 = vmul.f32 %v550, %v718
      %v728 = vmul.f32 %v551, %v718
      %v729 = vmul.f32 %v552, %v718
      %v730 = vmul.f32 %v553, %v718
      %v731 = vmul.f32 %v554, %v718
      %v732 = vmul.f32 %v555, %v718
      %v733 = vmul.f32 %v556, %v718
      %v734 = vmul.f32 %v557, %v718
      %v735 = vadd.f32 %v697, %v719
      %v736 = vadd.f32 %v698, %v720
      %v737 = vadd.f32 %v699, %v721
      %v738 = vadd.f32 %v700, %v722
      %v739 = vadd.f32 %v701, %v723
      %v740 = vadd.f32 %v702, %v724
      %v741 = vadd.f32 %v703, %v725
      %v742 = vadd.f32 %v704, %v726
      %v743 = vadd.f32 %v705, %v727
      %v744 = vadd.f32 %v706, %v728
      %v745 = vadd.f32 %v707, %v729
      %v746 = vadd.f32 %v708, %v730
      %v747 = vadd.f32 %v709, %v731
      %v748 = vadd.f32 %v710, %v732
      %v749 = vadd.f32 %v711, %v733
      %v750 = vadd.f32 %v712, %v734
      %s751 = scalar_lea.vmem %s1, 40
      %v752 = vld [vmem:[%s751] sm:$0x1]
      %v753 = vlaneseq
      %v754 = vshrl.u32 %v753, 7
      %v755 = vsub.s32 0, %v754
      %v756 = vrot.slane %v752, %v755
      %v757 = vmul.f32 %v544, %v756
      %v758 = vmul.f32 %v545, %v756
      %v759 = vmul.f32 %v546, %v756
      %v760 = vmul.f32 %v547, %v756
      %v761 = vmul.f32 %v548, %v756
      %v762 = vmul.f32 %v549, %v756
      %v763 = vmul.f32 %v550, %v756
      %v764 = vmul.f32 %v551, %v756
      %v765 = vmul.f32 %v552, %v756
      %v766 = vmul.f32 %v553, %v756
      %v767 = vmul.f32 %v554, %v756
      %v768 = vmul.f32 %v555, %v756
      %v769 = vmul.f32 %v556, %v756
      %v770 = vmul.f32 %v557, %v756
      %v771 = vmul.f32 %v558, %v756
      %v772 = vmul.f32 %v559, %v756
      %v773 = vadd.f32 %v735, %v757
      %v774 = vadd.f32 %v736, %v758
      %v775 = vadd.f32 %v737, %v759
      %v776 = vadd.f32 %v738, %v760
      %v777 = vadd.f32 %v739, %v761
      %v778 = vadd.f32 %v740, %v762
      %v779 = vadd.f32 %v741, %v763
      %v780 = vadd.f32 %v742, %v764
      %v781 = vadd.f32 %v743, %v765
      %v782 = vadd.f32 %v744, %v766
      %v783 = vadd.f32 %v745, %v767
      %v784 = vadd.f32 %v746, %v768
      %v785 = vadd.f32 %v747, %v769
      %v786 = vadd.f32 %v748, %v770
      %v787 = vadd.f32 %v749, %v771
      %v788 = vadd.f32 %v750, %v772
      %s789 = scalar_lea.vmem %s1, 48
      %v790 = vld [vmem:[%s789] sm:$0x1]
      %v791 = vlaneseq
      %v792 = vshrl.u32 %v791, 7
      %v793 = vsub.s32 0, %v792
      %v794 = vrot.slane %v790, %v793
      %v795 = vmul.f32 %v546, %v794
      %v796 = vmul.f32 %v547, %v794
      %v797 = vmul.f32 %v548, %v794
      %v798 = vmul.f32 %v549, %v794
      %v799 = vmul.f32 %v550, %v794
      %v800 = vmul.f32 %v551, %v794
      %v801 = vmul.f32 %v552, %v794
      %v802 = vmul.f32 %v553, %v794
      %v803 = vmul.f32 %v554, %v794
      %v804 = vmul.f32 %v555, %v794
      %v805 = vmul.f32 %v556, %v794
      %v806 = vmul.f32 %v557, %v794
      %v807 = vmul.f32 %v558, %v794
      %v808 = vmul.f32 %v559, %v794
      %v809 = vmul.f32 %v560, %v794
      %v810 = vmul.f32 %v561, %v794
      %v811 = vadd.f32 %v773, %v795
      %v812 = vadd.f32 %v774, %v796
      %v813 = vadd.f32 %v775, %v797
      %v814 = vadd.f32 %v776, %v798
      %v815 = vadd.f32 %v777, %v799
      %v816 = vadd.f32 %v778, %v800
      %v817 = vadd.f32 %v779, %v801
      %v818 = vadd.f32 %v780, %v802
      %v819 = vadd.f32 %v781, %v803
      %v820 = vadd.f32 %v782, %v804
      %v821 = vadd.f32 %v783, %v805
      %v822 = vadd.f32 %v784, %v806
      %v823 = vadd.f32 %v785, %v807
      %v824 = vadd.f32 %v786, %v808
      %v825 = vadd.f32 %v787, %v809
      %v826 = vadd.f32 %v788, %v810
      %v827 = vld [vmem:[#allocation2 + $0x1] sm:$0xff]
      %v828 = vld [vmem:[#allocation2 + $0x9] sm:$0xff]
      %v829 = vld [vmem:[#allocation2 + $0x19] sm:$0xff]
      %v830 = vld [vmem:[#allocation2 + $0x21] sm:$0xff]
      %v831 = vld [vmem:[#allocation2 + $0x31] sm:$0xff]
      %v832 = vld [vmem:[#allocation2 + $0x39] sm:$0xff]
      %v833 = vld [vmem:[#allocation2 + $0x49] sm:$0xff]
      %v834 = vld [vmem:[#allocation2 + $0x51] sm:$0xff]
      %v835 = vld [vmem:[#allocation2 + $0x61] sm:$0xff]
      %v836 = vld [vmem:[#allocation2 + $0x69] sm:$0xff]
      %v837 = vld [vmem:[#allocation2 + $0x79] sm:$0xff]
      %v838 = vld [vmem:[#allocation2 + $0x81] sm:$0xff]
      %v839 = vld [vmem:[#allocation2 + $0x91] sm:$0xff]
      %v840 = vld [vmem:[#allocation2 + $0x99] sm:$0xff]
      %v841 = vld [vmem:[#allocation2 + $0xa9] sm:$0xff]
      %v842 = vld [vmem:[#allocation2 + $0xb1] sm:$0xff]
      %v843 = vld [vmem:[#allocation2 + $0xc1] sm:$0xff]
      %v844 = vld [vmem:[#allocation2 + $0xc9] sm:$0xff]
      %v845 = vld [vmem:[#allocation2 + $0xd9] sm:$0xff]
      %v846 = vld [vmem:[#allocation2 + $0xe1] sm:$0xff]
      %v847 = vld [vmem:[#allocation2 + $0xf1] sm:$0xff]
      %v848 = vld [vmem:[#allocation2 + $0xf9] sm:$0xff]
      %v849 = vld [vmem:[#allocation2 + $0x109] sm:$0xff]
      %v850 = vld [vmem:[#allocation2 + $0x111] sm:$0xff]
      %v851 = vld [vmem:[#allocation2 + $0x121] sm:$0xff]
      %v852 = vld [vmem:[#allocation2 + $0x129] sm:$0xff]
      %v853 = vld [vmem:[#allocation2 + $0x139] sm:$0xff]
      %v854 = vld [vmem:[#allocation2 + $0x141] sm:$0xff]
      %v855 = vld [vmem:[%s1 + $0x1] sm:$0x1]
      %v856 = vlaneseq
      %v857 = vshrl.u32 %v856, 7
      %v858 = vsub.s32 0, %v857
      %v859 = vrot.slane %v855, %v858
      %v860 = vmul.f32 %v827, %v859
      %v861 = vmul.f32 %v828, %v859
      %v862 = vmul.f32 %v829, %v859
      %v863 = vmul.f32 %v830, %v859
      %v864 = vmul.f32 %v831, %v859
      %v865 = vmul.f32 %v832, %v859
      %v866 = vmul.f32 %v833, %v859
      %v867 = vmul.f32 %v834, %v859
      %v868 = vmul.f32 %v835, %v859
      %v869 = vmul.f32 %v836, %v859
      %v870 = vmul.f32 %v837, %v859
      %v871 = vmul.f32 %v838, %v859
      %v872 = vmul.f32 %v839, %v859
      %v873 = vmul.f32 %v840, %v859
      %v874 = vmul.f32 %v841, %v859
      %v875 = vmul.f32 %v842, %v859
      %v876 = vadd.f32 %v811, %v860
      %v877 = vadd.f32 %v812, %v861
      %v878 = vadd.f32 %v813, %v862
      %v879 = vadd.f32 %v814, %v863
      %v880 = vadd.f32 %v815, %v864
      %v881 = vadd.f32 %v816, %v865
      %v882 = vadd.f32 %v817, %v866
      %v883 = vadd.f32 %v818, %v867
      %v884 = vadd.f32 %v819, %v868
      %v885 = vadd.f32 %v820, %v869
      %v886 = vadd.f32 %v821, %v870
      %v887 = vadd.f32 %v822, %v871
      %v888 = vadd.f32 %v823, %v872
      %v889 = vadd.f32 %v824, %v873
      %v890 = vadd.f32 %v825, %v874
      %v891 = vadd.f32 %v826, %v875
      %v892 = vld [vmem:[%s599 + $0x1] sm:$0x1]
      %v893 = vlaneseq
      %v894 = vshrl.u32 %v893, 7
      %v895 = vsub.s32 0, %v894
      %v896 = vrot.slane %v892, %v895
      %v897 = vmul.f32 %v829, %v896
      %v898 = vmul.f32 %v830, %v896
      %v899 = vmul.f32 %v831, %v896
      %v900 = vmul.f32 %v832, %v896
      %v901 = vmul.f32 %v833, %v896
      %v902 = vmul.f32 %v834, %v896
      %v903 = vmul.f32 %v835, %v896
      %v904 = vmul.f32 %v836, %v896
      %v905 = vmul.f32 %v837, %v896
      %v906 = vmul.f32 %v838, %v896
      %v907 = vmul.f32 %v839, %v896
      %v908 = vmul.f32 %v840, %v896
      %v909 = vmul.f32 %v841, %v896
      %v910 = vmul.f32 %v842, %v896
      %v911 = vmul.f32 %v843, %v896
      %v912 = vmul.f32 %v844, %v896
      %v913 = vadd.f32 %v876, %v897
      %v914 = vadd.f32 %v877, %v898
      %v915 = vadd.f32 %v878, %v899
      %v916 = vadd.f32 %v879, %v900
      %v917 = vadd.f32 %v880, %v901
      %v918 = vadd.f32 %v881, %v902
      %v919 = vadd.f32 %v882, %v903
      %v920 = vadd.f32 %v883, %v904
      %v921 = vadd.f32 %v884, %v905
      %v922 = vadd.f32 %v885, %v906
      %v923 = vadd.f32 %v886, %v907
      %v924 = vadd.f32 %v887, %v908
      %v925 = vadd.f32 %v888, %v909
      %v926 = vadd.f32 %v889, %v910
      %v927 = vadd.f32 %v890, %v911
      %v928 = vadd.f32 %v891, %v912
      %v929 = vld [vmem:[%s637 + $0x1] sm:$0x1]
      %v930 = vlaneseq
      %v931 = vshrl.u32 %v930, 7
      %v932 = vsub.s32 0, %v931
      %v933 = vrot.slane %v929, %v932
      %v934 = vmul.f32 %v831, %v933
      %v935 = vmul.f32 %v832, %v933
      %v936 = vmul.f32 %v833, %v933
      %v937 = vmul.f32 %v834, %v933
      %v938 = vmul.f32 %v835, %v933
      %v939 = vmul.f32 %v836, %v933
      %v940 = vmul.f32 %v837, %v933
      %v941 = vmul.f32 %v838, %v933
      %v942 = vmul.f32 %v839, %v933
      %v943 = vmul.f32 %v840, %v933
      %v944 = vmul.f32 %v841, %v933
      %v945 = vmul.f32 %v842, %v933
      %v946 = vmul.f32 %v843, %v933
      %v947 = vmul.f32 %v844, %v933
      %v948 = vmul.f32 %v845, %v933
      %v949 = vmul.f32 %v846, %v933
      %v950 = vadd.f32 %v913, %v934
      %v951 = vadd.f32 %v914, %v935
      %v952 = vadd.f32 %v915, %v936
      %v953 = vadd.f32 %v916, %v937
      %v954 = vadd.f32 %v917, %v938
      %v955 = vadd.f32 %v918, %v939
      %v956 = vadd.f32 %v919, %v940
      %v957 = vadd.f32 %v920, %v941
      %v958 = vadd.f32 %v921, %v942
      %v959 = vadd.f32 %v922, %v943
      %v960 = vadd.f32 %v923, %v944
      %v961 = vadd.f32 %v924, %v945
      %v962 = vadd.f32 %v925, %v946
      %v963 = vadd.f32 %v926, %v947
      %v964 = vadd.f32 %v927, %v948
      %v965 = vadd.f32 %v928, %v949
      %v966 = vld [vmem:[%s675 + $0x1] sm:$0x1]
      %v967 = vlaneseq
      %v968 = vshrl.u32 %v967, 7
      %v969 = vsub.s32 0, %v968
      %v970 = vrot.slane %v966, %v969
      %v971 = vmul.f32 %v833, %v970
      %v972 = vmul.f32 %v834, %v970
      %v973 = vmul.f32 %v835, %v970
      %v974 = vmul.f32 %v836, %v970
      %v975 = vmul.f32 %v837, %v970
      %v976 = vmul.f32 %v838, %v970
      %v977 = vmul.f32 %v839, %v970
      %v978 = vmul.f32 %v840, %v970
      %v979 = vmul.f32 %v841, %v970
      %v980 = vmul.f32 %v842, %v970
      %v981 = vmul.f32 %v843, %v970
      %v982 = vmul.f32 %v844, %v970
      %v983 = vmul.f32 %v845, %v970
      %v984 = vmul.f32 %v846, %v970
      %v985 = vmul.f32 %v847, %v970
      %v986 = vmul.f32 %v848, %v970
      %v987 = vadd.f32 %v950, %v971
      %v988 = vadd.f32 %v951, %v972
      %v989 = vadd.f32 %v952, %v973
      %v990 = vadd.f32 %v953, %v974
      %v991 = vadd.f32 %v954, %v975
      %v992 = vadd.f32 %v955, %v976
      %v993 = vadd.f32 %v956, %v977
      %v994 = vadd.f32 %v957, %v978
      %v995 = vadd.f32 %v958, %v979
      %v996 = vadd.f32 %v959, %v980
      %v997 = vadd.f32 %v960, %v981
      %v998 = vadd.f32 %v961, %v982
      %v999 = vadd.f32 %v962, %v983
      %v1000 = vadd.f32 %v963, %v984
      %v1001 = vadd.f32 %v964, %v985
      %v1002 = vadd.f32 %v965, %v986
      %v1003 = vld [vmem:[%s713 + $0x1] sm:$0x1]
      %v1004 = vlaneseq
      %v1005 = vshrl.u32 %v1004, 7
      %v1006 = vsub.s32 0, %v1005
      %v1007 = vrot.slane %v1003, %v1006
      %v1008 = vmul.f32 %v835, %v1007
      %v1009 = vmul.f32 %v836, %v1007
      %v1010 = vmul.f32 %v837, %v1007
      %v1011 = vmul.f32 %v838, %v1007
      %v1012 = vmul.f32 %v839, %v1007
      %v1013 = vmul.f32 %v840, %v1007
      %v1014 = vmul.f32 %v841, %v1007
      %v1015 = vmul.f32 %v842, %v1007
      %v1016 = vmul.f32 %v843, %v1007
      %v1017 = vmul.f32 %v844, %v1007
      %v1018 = vmul.f32 %v845, %v1007
      %v1019 = vmul.f32 %v846, %v1007
      %v1020 = vmul.f32 %v847, %v1007
      %v1021 = vmul.f32 %v848, %v1007
      %v1022 = vmul.f32 %v849, %v1007
      %v1023 = vmul.f32 %v850, %v1007
      %v1024 = vadd.f32 %v987, %v1008
      %v1025 = vadd.f32 %v988, %v1009
      %v1026 = vadd.f32 %v989, %v1010
      %v1027 = vadd.f32 %v990, %v1011
      %v1028 = vadd.f32 %v991, %v1012
      %v1029 = vadd.f32 %v992, %v1013
      %v1030 = vadd.f32 %v993, %v1014
      %v1031 = vadd.f32 %v994, %v1015
      %v1032 = vadd.f32 %v995, %v1016
      %v1033 = vadd.f32 %v996, %v1017
      %v1034 = vadd.f32 %v997, %v1018
      %v1035 = vadd.f32 %v998, %v1019
      %v1036 = vadd.f32 %v999, %v1020
      %v1037 = vadd.f32 %v1000, %v1021
      %v1038 = vadd.f32 %v1001, %v1022
      %v1039 = vadd.f32 %v1002, %v1023
      %v1040 = vld [vmem:[%s751 + $0x1] sm:$0x1]
      %v1041 = vlaneseq
      %v1042 = vshrl.u32 %v1041, 7
      %v1043 = vsub.s32 0, %v1042
      %v1044 = vrot.slane %v1040, %v1043
      %v1045 = vmul.f32 %v837, %v1044
      %v1046 = vmul.f32 %v838, %v1044
      %v1047 = vmul.f32 %v839, %v1044
      %v1048 = vmul.f32 %v840, %v1044
      %v1049 = vmul.f32 %v841, %v1044
      %v1050 = vmul.f32 %v842, %v1044
      %v1051 = vmul.f32 %v843, %v1044
      %v1052 = vmul.f32 %v844, %v1044
      %v1053 = vmul.f32 %v845, %v1044
      %v1054 = vmul.f32 %v846, %v1044
      %v1055 = vmul.f32 %v847, %v1044
      %v1056 = vmul.f32 %v848, %v1044
      %v1057 = vmul.f32 %v849, %v1044
      %v1058 = vmul.f32 %v850, %v1044
      %v1059 = vmul.f32 %v851, %v1044
      %v1060 = vmul.f32 %v852, %v1044
      %v1061 = vadd.f32 %v1024, %v1045
      %v1062 = vadd.f32 %v1025, %v1046
      %v1063 = vadd.f32 %v1026, %v1047
      %v1064 = vadd.f32 %v1027, %v1048
      %v1065 = vadd.f32 %v1028, %v1049
      %v1066 = vadd.f32 %v1029, %v1050
      %v1067 = vadd.f32 %v1030, %v1051
      %v1068 = vadd.f32 %v1031, %v1052
      %v1069 = vadd.f32 %v1032, %v1053
      %v1070 = vadd.f32 %v1033, %v1054
      %v1071 = vadd.f32 %v1034, %v1055
      %v1072 = vadd.f32 %v1035, %v1056
      %v1073 = vadd.f32 %v1036, %v1057
      %v1074 = vadd.f32 %v1037, %v1058
      %v1075 = vadd.f32 %v1038, %v1059
      %v1076 = vadd.f32 %v1039, %v1060
      %v1077 = vld [vmem:[%s789 + $0x1] sm:$0x1]
      %v1078 = vlaneseq
      %v1079 = vshrl.u32 %v1078, 7
      %v1080 = vsub.s32 0, %v1079
      %v1081 = vrot.slane %v1077, %v1080
      %v1082 = vmul.f32 %v839, %v1081
      %v1083 = vmul.f32 %v840, %v1081
      %v1084 = vmul.f32 %v841, %v1081
      %v1085 = vmul.f32 %v842, %v1081
      %v1086 = vmul.f32 %v843, %v1081
      %v1087 = vmul.f32 %v844, %v1081
      %v1088 = vmul.f32 %v845, %v1081
      %v1089 = vmul.f32 %v846, %v1081
      %v1090 = vmul.f32 %v847, %v1081
      %v1091 = vmul.f32 %v848, %v1081
      %v1092 = vmul.f32 %v849, %v1081
      %v1093 = vmul.f32 %v850, %v1081
      %v1094 = vmul.f32 %v851, %v1081
      %v1095 = vmul.f32 %v852, %v1081
      %v1096 = vmul.f32 %v853, %v1081
      %v1097 = vmul.f32 %v854, %v1081
      %v1098 = vadd.f32 %v1061, %v1082
      %v1099 = vadd.f32 %v1062, %v1083
      %v1100 = vadd.f32 %v1063, %v1084
      %v1101 = vadd.f32 %v1064, %v1085
      %v1102 = vadd.f32 %v1065, %v1086
      %v1103 = vadd.f32 %v1066, %v1087
      %v1104 = vadd.f32 %v1067, %v1088
      %v1105 = vadd.f32 %v1068, %v1089
      %v1106 = vadd.f32 %v1069, %v1090
      %v1107 = vadd.f32 %v1070, %v1091
      %v1108 = vadd.f32 %v1071, %v1092
      %v1109 = vadd.f32 %v1072, %v1093
      %v1110 = vadd.f32 %v1073, %v1094
      %v1111 = vadd.f32 %v1074, %v1095
      %v1112 = vadd.f32 %v1075, %v1096
      %v1113 = vadd.f32 %v1076, %v1097
      %v1114 = vld [vmem:[#allocation2 + $0x2] sm:$0xff]
      %v1115 = vld [vmem:[#allocation2 + $0xa] sm:$0xff]
      %v1116 = vld [vmem:[#allocation2 + $0x1a] sm:$0xff]
      %v1117 = vld [vmem:[#allocation2 + $0x22] sm:$0xff]
      %v1118 = vld [vmem:[#allocation2 + $0x32] sm:$0xff]
      %v1119 = vld [vmem:[#allocation2 + $0x3a] sm:$0xff]
      %v1120 = vld [vmem:[#allocation2 + $0x4a] sm:$0xff]
      %v1121 = vld [vmem:[#allocation2 + $0x52] sm:$0xff]
      %v1122 = vld [vmem:[#allocation2 + $0x62] sm:$0xff]
      %v1123 = vld [vmem:[#allocation2 + $0x6a] sm:$0xff]
      %v1124 = vld [vmem:[#allocation2 + $0x7a] sm:$0xff]
      %v1125 = vld [vmem:[#allocation2 + $0x82] sm:$0xff]
      %v1126 = vld [vmem:[#allocation2 + $0x92] sm:$0xff]
      %v1127 = vld [vmem:[#allocation2 + $0x9a] sm:$0xff]
      %v1128 = vld [vmem:[#allocation2 + $0xaa] sm:$0xff]
      %v1129 = vld [vmem:[#allocation2 + $0xb2] sm:$0xff]
      %v1130 = vld [vmem:[#allocation2 + $0xc2] sm:$0xff]
      %v1131 = vld [vmem:[#allocation2 + $0xca] sm:$0xff]
      %v1132 = vld [vmem:[#allocation2 + $0xda] sm:$0xff]
      %v1133 = vld [vmem:[#allocation2 + $0xe2] sm:$0xff]
      %v1134 = vld [vmem:[#allocation2 + $0xf2] sm:$0xff]
      %v1135 = vld [vmem:[#allocation2 + $0xfa] sm:$0xff]
      %v1136 = vld [vmem:[#allocation2 + $0x10a] sm:$0xff]
      %v1137 = vld [vmem:[#allocation2 + $0x112] sm:$0xff]
      %v1138 = vld [vmem:[#allocation2 + $0x122] sm:$0xff]
      %v1139 = vld [vmem:[#allocation2 + $0x12a] sm:$0xff]
      %v1140 = vld [vmem:[#allocation2 + $0x13a] sm:$0xff]
      %v1141 = vld [vmem:[#allocation2 + $0x142] sm:$0xff]
      %v1142 = vld [vmem:[%s1 + $0x2] sm:$0x1]
      %v1143 = vlaneseq
      %v1144 = vshrl.u32 %v1143, 7
      %v1145 = vsub.s32 0, %v1144
      %v1146 = vrot.slane %v1142, %v1145
      %v1147 = vmul.f32 %v1114, %v1146
      %v1148 = vmul.f32 %v1115, %v1146
      %v1149 = vmul.f32 %v1116, %v1146
      %v1150 = vmul.f32 %v1117, %v1146
      %v1151 = vmul.f32 %v1118, %v1146
      %v1152 = vmul.f32 %v1119, %v1146
      %v1153 = vmul.f32 %v1120, %v1146
      %v1154 = vmul.f32 %v1121, %v1146
      %v1155 = vmul.f32 %v1122, %v1146
      %v1156 = vmul.f32 %v1123, %v1146
      %v1157 = vmul.f32 %v1124, %v1146
      %v1158 = vmul.f32 %v1125, %v1146
      %v1159 = vmul.f32 %v1126, %v1146
      %v1160 = vmul.f32 %v1127, %v1146
      %v1161 = vmul.f32 %v1128, %v1146
      %v1162 = vmul.f32 %v1129, %v1146
      %v1163 = vadd.f32 %v1098, %v1147
      %v1164 = vadd.f32 %v1099, %v1148
      %v1165 = vadd.f32 %v1100, %v1149
      %v1166 = vadd.f32 %v1101, %v1150
      %v1167 = vadd.f32 %v1102, %v1151
      %v1168 = vadd.f32 %v1103, %v1152
      %v1169 = vadd.f32 %v1104, %v1153
      %v1170 = vadd.f32 %v1105, %v1154
      %v1171 = vadd.f32 %v1106, %v1155
      %v1172 = vadd.f32 %v1107, %v1156
      %v1173 = vadd.f32 %v1108, %v1157
      %v1174 = vadd.f32 %v1109, %v1158
      %v1175 = vadd.f32 %v1110, %v1159
      %v1176 = vadd.f32 %v1111, %v1160
      %v1177 = vadd.f32 %v1112, %v1161
      %v1178 = vadd.f32 %v1113, %v1162
      %v1179 = vld [vmem:[%s599 + $0x2] sm:$0x1]
      %v1180 = vlaneseq
      %v1181 = vshrl.u32 %v1180, 7
      %v1182 = vsub.s32 0, %v1181
      %v1183 = vrot.slane %v1179, %v1182
      %v1184 = vmul.f32 %v1116, %v1183
      %v1185 = vmul.f32 %v1117, %v1183
      %v1186 = vmul.f32 %v1118, %v1183
      %v1187 = vmul.f32 %v1119, %v1183
      %v1188 = vmul.f32 %v1120, %v1183
      %v1189 = vmul.f32 %v1121, %v1183
      %v1190 = vmul.f32 %v1122, %v1183
      %v1191 = vmul.f32 %v1123, %v1183
      %v1192 = vmul.f32 %v1124, %v1183
      %v1193 = vmul.f32 %v1125, %v1183
      %v1194 = vmul.f32 %v1126, %v1183
      %v1195 = vmul.f32 %v1127, %v1183
      %v1196 = vmul.f32 %v1128, %v1183
      %v1197 = vmul.f32 %v1129, %v1183
      %v1198 = vmul.f32 %v1130, %v1183
      %v1199 = vmul.f32 %v1131, %v1183
      %v1200 = vadd.f32 %v1163, %v1184
      %v1201 = vadd.f32 %v1164, %v1185
      %v1202 = vadd.f32 %v1165, %v1186
      %v1203 = vadd.f32 %v1166, %v1187
      %v1204 = vadd.f32 %v1167, %v1188
      %v1205 = vadd.f32 %v1168, %v1189
      %v1206 = vadd.f32 %v1169, %v1190
      %v1207 = vadd.f32 %v1170, %v1191
      %v1208 = vadd.f32 %v1171, %v1192
      %v1209 = vadd.f32 %v1172, %v1193
      %v1210 = vadd.f32 %v1173, %v1194
      %v1211 = vadd.f32 %v1174, %v1195
      %v1212 = vadd.f32 %v1175, %v1196
      %v1213 = vadd.f32 %v1176, %v1197
      %v1214 = vadd.f32 %v1177, %v1198
      %v1215 = vadd.f32 %v1178, %v1199
      %v1216 = vld [vmem:[%s637 + $0x2] sm:$0x1]
      %v1217 = vlaneseq
      %v1218 = vshrl.u32 %v1217, 7
      %v1219 = vsub.s32 0, %v1218
      %v1220 = vrot.slane %v1216, %v1219
      %v1221 = vmul.f32 %v1118, %v1220
      %v1222 = vmul.f32 %v1119, %v1220
      %v1223 = vmul.f32 %v1120, %v1220
      %v1224 = vmul.f32 %v1121, %v1220
      %v1225 = vmul.f32 %v1122, %v1220
      %v1226 = vmul.f32 %v1123, %v1220
      %v1227 = vmul.f32 %v1124, %v1220
      %v1228 = vmul.f32 %v1125, %v1220
      %v1229 = vmul.f32 %v1126, %v1220
      %v1230 = vmul.f32 %v1127, %v1220
      %v1231 = vmul.f32 %v1128, %v1220
      %v1232 = vmul.f32 %v1129, %v1220
      %v1233 = vmul.f32 %v1130, %v1220
      %v1234 = vmul.f32 %v1131, %v1220
      %v1235 = vmul.f32 %v1132, %v1220
      %v1236 = vmul.f32 %v1133, %v1220
      %v1237 = vadd.f32 %v1200, %v1221
      %v1238 = vadd.f32 %v1201, %v1222
      %v1239 = vadd.f32 %v1202, %v1223
      %v1240 = vadd.f32 %v1203, %v1224
      %v1241 = vadd.f32 %v1204, %v1225
      %v1242 = vadd.f32 %v1205, %v1226
      %v1243 = vadd.f32 %v1206, %v1227
      %v1244 = vadd.f32 %v1207, %v1228
      %v1245 = vadd.f32 %v1208, %v1229
      %v1246 = vadd.f32 %v1209, %v1230
      %v1247 = vadd.f32 %v1210, %v1231
      %v1248 = vadd.f32 %v1211, %v1232
      %v1249 = vadd.f32 %v1212, %v1233
      %v1250 = vadd.f32 %v1213, %v1234
      %v1251 = vadd.f32 %v1214, %v1235
      %v1252 = vadd.f32 %v1215, %v1236
      %v1253 = vld [vmem:[%s675 + $0x2] sm:$0x1]
      %v1254 = vlaneseq
      %v1255 = vshrl.u32 %v1254, 7
      %v1256 = vsub.s32 0, %v1255
      %v1257 = vrot.slane %v1253, %v1256
      %v1258 = vmul.f32 %v1120, %v1257
      %v1259 = vmul.f32 %v1121, %v1257
      %v1260 = vmul.f32 %v1122, %v1257
      %v1261 = vmul.f32 %v1123, %v1257
      %v1262 = vmul.f32 %v1124, %v1257
      %v1263 = vmul.f32 %v1125, %v1257
      %v1264 = vmul.f32 %v1126, %v1257
      %v1265 = vmul.f32 %v1127, %v1257
      %v1266 = vmul.f32 %v1128, %v1257
      %v1267 = vmul.f32 %v1129, %v1257
      %v1268 = vmul.f32 %v1130, %v1257
      %v1269 = vmul.f32 %v1131, %v1257
      %v1270 = vmul.f32 %v1132, %v1257
      %v1271 = vmul.f32 %v1133, %v1257
      %v1272 = vmul.f32 %v1134, %v1257
      %v1273 = vmul.f32 %v1135, %v1257
      %v1274 = vadd.f32 %v1237, %v1258
      %v1275 = vadd.f32 %v1238, %v1259
      %v1276 = vadd.f32 %v1239, %v1260
      %v1277 = vadd.f32 %v1240, %v1261
      %v1278 = vadd.f32 %v1241, %v1262
      %v1279 = vadd.f32 %v1242, %v1263
      %v1280 = vadd.f32 %v1243, %v1264
      %v1281 = vadd.f32 %v1244, %v1265
      %v1282 = vadd.f32 %v1245, %v1266
      %v1283 = vadd.f32 %v1246, %v1267
      %v1284 = vadd.f32 %v1247, %v1268
      %v1285 = vadd.f32 %v1248, %v1269
      %v1286 = vadd.f32 %v1249, %v1270
      %v1287 = vadd.f32 %v1250, %v1271
      %v1288 = vadd.f32 %v1251, %v1272
      %v1289 = vadd.f32 %v1252, %v1273
      %v1290 = vld [vmem:[%s713 + $0x2] sm:$0x1]
      %v1291 = vlaneseq
      %v1292 = vshrl.u32 %v1291, 7
      %v1293 = vsub.s32 0, %v1292
      %v1294 = vrot.slane %v1290, %v1293
      %v1295 = vmul.f32 %v1122, %v1294
      %v1296 = vmul.f32 %v1123, %v1294
      %v1297 = vmul.f32 %v1124, %v1294
      %v1298 = vmul.f32 %v1125, %v1294
      %v1299 = vmul.f32 %v1126, %v1294
      %v1300 = vmul.f32 %v1127, %v1294
      %v1301 = vmul.f32 %v1128, %v1294
      %v1302 = vmul.f32 %v1129, %v1294
      %v1303 = vmul.f32 %v1130, %v1294
      %v1304 = vmul.f32 %v1131, %v1294
      %v1305 = vmul.f32 %v1132, %v1294
      %v1306 = vmul.f32 %v1133, %v1294
      %v1307 = vmul.f32 %v1134, %v1294
      %v1308 = vmul.f32 %v1135, %v1294
      %v1309 = vmul.f32 %v1136, %v1294
      %v1310 = vmul.f32 %v1137, %v1294
      %v1311 = vadd.f32 %v1274, %v1295
      %v1312 = vadd.f32 %v1275, %v1296
      %v1313 = vadd.f32 %v1276, %v1297
      %v1314 = vadd.f32 %v1277, %v1298
      %v1315 = vadd.f32 %v1278, %v1299
      %v1316 = vadd.f32 %v1279, %v1300
      %v1317 = vadd.f32 %v1280, %v1301
      %v1318 = vadd.f32 %v1281, %v1302
      %v1319 = vadd.f32 %v1282, %v1303
      %v1320 = vadd.f32 %v1283, %v1304
      %v1321 = vadd.f32 %v1284, %v1305
      %v1322 = vadd.f32 %v1285, %v1306
      %v1323 = vadd.f32 %v1286, %v1307
      %v1324 = vadd.f32 %v1287, %v1308
      %v1325 = vadd.f32 %v1288, %v1309
      %v1326 = vadd.f32 %v1289, %v1310
      %v1327 = vld [vmem:[%s751 + $0x2] sm:$0x1]
      %v1328 = vlaneseq
      %v1329 = vshrl.u32 %v1328, 7
      %v1330 = vsub.s32 0, %v1329
      %v1331 = vrot.slane %v1327, %v1330
      %v1332 = vmul.f32 %v1124, %v1331
      %v1333 = vmul.f32 %v1125, %v1331
      %v1334 = vmul.f32 %v1126, %v1331
      %v1335 = vmul.f32 %v1127, %v1331
      %v1336 = vmul.f32 %v1128, %v1331
      %v1337 = vmul.f32 %v1129, %v1331
      %v1338 = vmul.f32 %v1130, %v1331
      %v1339 = vmul.f32 %v1131, %v1331
      %v1340 = vmul.f32 %v1132, %v1331
      %v1341 = vmul.f32 %v1133, %v1331
      %v1342 = vmul.f32 %v1134, %v1331
      %v1343 = vmul.f32 %v1135, %v1331
      %v1344 = vmul.f32 %v1136, %v1331
      %v1345 = vmul.f32 %v1137, %v1331
      %v1346 = vmul.f32 %v1138, %v1331
      %v1347 = vmul.f32 %v1139, %v1331
      %v1348 = vadd.f32 %v1311, %v1332
      %v1349 = vadd.f32 %v1312, %v1333
      %v1350 = vadd.f32 %v1313, %v1334
      %v1351 = vadd.f32 %v1314, %v1335
      %v1352 = vadd.f32 %v1315, %v1336
      %v1353 = vadd.f32 %v1316, %v1337
      %v1354 = vadd.f32 %v1317, %v1338
      %v1355 = vadd.f32 %v1318, %v1339
      %v1356 = vadd.f32 %v1319, %v1340
      %v1357 = vadd.f32 %v1320, %v1341
      %v1358 = vadd.f32 %v1321, %v1342
      %v1359 = vadd.f32 %v1322, %v1343
      %v1360 = vadd.f32 %v1323, %v1344
      %v1361 = vadd.f32 %v1324, %v1345
      %v1362 = vadd.f32 %v1325, %v1346
      %v1363 = vadd.f32 %v1326, %v1347
      %v1364 = vld [vmem:[%s789 + $0x2] sm:$0x1]
      %v1365 = vlaneseq
      %v1366 = vshrl.u32 %v1365, 7
      %v1367 = vsub.s32 0, %v1366
      %v1368 = vrot.slane %v1364, %v1367
      %v1369 = vmul.f32 %v1126, %v1368
      %v1370 = vmul.f32 %v1127, %v1368
      %v1371 = vmul.f32 %v1128, %v1368
      %v1372 = vmul.f32 %v1129, %v1368
      %v1373 = vmul.f32 %v1130, %v1368
      %v1374 = vmul.f32 %v1131, %v1368
      %v1375 = vmul.f32 %v1132, %v1368
      %v1376 = vmul.f32 %v1133, %v1368
      %v1377 = vmul.f32 %v1134, %v1368
      %v1378 = vmul.f32 %v1135, %v1368
      %v1379 = vmul.f32 %v1136, %v1368
      %v1380 = vmul.f32 %v1137, %v1368
      %v1381 = vmul.f32 %v1138, %v1368
      %v1382 = vmul.f32 %v1139, %v1368
      %v1383 = vmul.f32 %v1140, %v1368
      %v1384 = vmul.f32 %v1141, %v1368
      %v1385 = vadd.f32 %v1348, %v1369
      %v1386 = vadd.f32 %v1349, %v1370
      %v1387 = vadd.f32 %v1350, %v1371
      %v1388 = vadd.f32 %v1351, %v1372
      %v1389 = vadd.f32 %v1352, %v1373
      %v1390 = vadd.f32 %v1353, %v1374
      %v1391 = vadd.f32 %v1354, %v1375
      %v1392 = vadd.f32 %v1355, %v1376
      %v1393 = vadd.f32 %v1356, %v1377
      %v1394 = vadd.f32 %v1357, %v1378
      %v1395 = vadd.f32 %v1358, %v1379
      %v1396 = vadd.f32 %v1359, %v1380
      %v1397 = vadd.f32 %v1360, %v1381
      %v1398 = vadd.f32 %v1361, %v1382
      %v1399 = vadd.f32 %v1362, %v1383
      %v1400 = vadd.f32 %v1363, %v1384
      %v1401 = vld [vmem:[#allocation2 + $0x3] sm:$0xff]
      %v1402 = vld [vmem:[#allocation2 + $0xb] sm:$0xff]
      %v1403 = vld [vmem:[#allocation2 + $0x1b] sm:$0xff]
      %v1404 = vld [vmem:[#allocation2 + $0x23] sm:$0xff]
      %v1405 = vld [vmem:[#allocation2 + $0x33] sm:$0xff]
      %v1406 = vld [vmem:[#allocation2 + $0x3b] sm:$0xff]
      %v1407 = vld [vmem:[#allocation2 + $0x4b] sm:$0xff]
      %v1408 = vld [vmem:[#allocation2 + $0x53] sm:$0xff]
      %v1409 = vld [vmem:[#allocation2 + $0x63] sm:$0xff]
      %v1410 = vld [vmem:[#allocation2 + $0x6b] sm:$0xff]
      %v1411 = vld [vmem:[#allocation2 + $0x7b] sm:$0xff]
      %v1412 = vld [vmem:[#allocation2 + $0x83] sm:$0xff]
      %v1413 = vld [vmem:[#allocation2 + $0x93] sm:$0xff]
      %v1414 = vld [vmem:[#allocation2 + $0x9b] sm:$0xff]
      %v1415 = vld [vmem:[#allocation2 + $0xab] sm:$0xff]
      %v1416 = vld [vmem:[#allocation2 + $0xb3] sm:$0xff]
      %v1417 = vld [vmem:[#allocation2 + $0xc3] sm:$0xff]
      %v1418 = vld [vmem:[#allocation2 + $0xcb] sm:$0xff]
      %v1419 = vld [vmem:[#allocation2 + $0xdb] sm:$0xff]
      %v1420 = vld [vmem:[#allocation2 + $0xe3] sm:$0xff]
      %v1421 = vld [vmem:[#allocation2 + $0xf3] sm:$0xff]
      %v1422 = vld [vmem:[#allocation2 + $0xfb] sm:$0xff]
      %v1423 = vld [vmem:[#allocation2 + $0x10b] sm:$0xff]
      %v1424 = vld [vmem:[#allocation2 + $0x113] sm:$0xff]
      %v1425 = vld [vmem:[#allocation2 + $0x123] sm:$0xff]
      %v1426 = vld [vmem:[#allocation2 + $0x12b] sm:$0xff]
      %v1427 = vld [vmem:[#allocation2 + $0x13b] sm:$0xff]
      %v1428 = vld [vmem:[#allocation2 + $0x143] sm:$0xff]
      %v1429 = vld [vmem:[%s1 + $0x3] sm:$0x1]
      %v1430 = vlaneseq
      %v1431 = vshrl.u32 %v1430, 7
      %v1432 = vsub.s32 0, %v1431
      %v1433 = vrot.slane %v1429, %v1432
      %v1434 = vmul.f32 %v1401, %v1433
      %v1435 = vmul.f32 %v1402, %v1433
      %v1436 = vmul.f32 %v1403, %v1433
      %v1437 = vmul.f32 %v1404, %v1433
      %v1438 = vmul.f32 %v1405, %v1433
      %v1439 = vmul.f32 %v1406, %v1433
      %v1440 = vmul.f32 %v1407, %v1433
      %v1441 = vmul.f32 %v1408, %v1433
      %v1442 = vmul.f32 %v1409, %v1433
      %v1443 = vmul.f32 %v1410, %v1433
      %v1444 = vmul.f32 %v1411, %v1433
      %v1445 = vmul.f32 %v1412, %v1433
      %v1446 = vmul.f32 %v1413, %v1433
      %v1447 = vmul.f32 %v1414, %v1433
      %v1448 = vmul.f32 %v1415, %v1433
      %v1449 = vmul.f32 %v1416, %v1433
      %v1450 = vadd.f32 %v1385, %v1434
      %v1451 = vadd.f32 %v1386, %v1435
      %v1452 = vadd.f32 %v1387, %v1436
      %v1453 = vadd.f32 %v1388, %v1437
      %v1454 = vadd.f32 %v1389, %v1438
      %v1455 = vadd.f32 %v1390, %v1439
      %v1456 = vadd.f32 %v1391, %v1440
      %v1457 = vadd.f32 %v1392, %v1441
      %v1458 = vadd.f32 %v1393, %v1442
      %v1459 = vadd.f32 %v1394, %v1443
      %v1460 = vadd.f32 %v1395, %v1444
      %v1461 = vadd.f32 %v1396, %v1445
      %v1462 = vadd.f32 %v1397, %v1446
      %v1463 = vadd.f32 %v1398, %v1447
      %v1464 = vadd.f32 %v1399, %v1448
      %v1465 = vadd.f32 %v1400, %v1449
      %v1466 = vld [vmem:[%s599 + $0x3] sm:$0x1]
      %v1467 = vlaneseq
      %v1468 = vshrl.u32 %v1467, 7
      %v1469 = vsub.s32 0, %v1468
      %v1470 = vrot.slane %v1466, %v1469
      %v1471 = vmul.f32 %v1403, %v1470
      %v1472 = vmul.f32 %v1404, %v1470
      %v1473 = vmul.f32 %v1405, %v1470
      %v1474 = vmul.f32 %v1406, %v1470
      %v1475 = vmul.f32 %v1407, %v1470
      %v1476 = vmul.f32 %v1408, %v1470
      %v1477 = vmul.f32 %v1409, %v1470
      %v1478 = vmul.f32 %v1410, %v1470
      %v1479 = vmul.f32 %v1411, %v1470
      %v1480 = vmul.f32 %v1412, %v1470
      %v1481 = vmul.f32 %v1413, %v1470
      %v1482 = vmul.f32 %v1414, %v1470
      %v1483 = vmul.f32 %v1415, %v1470
      %v1484 = vmul.f32 %v1416, %v1470
      %v1485 = vmul.f32 %v1417, %v1470
      %v1486 = vmul.f32 %v1418, %v1470
      %v1487 = vadd.f32 %v1450, %v1471
      %v1488 = vadd.f32 %v1451, %v1472
      %v1489 = vadd.f32 %v1452, %v1473
      %v1490 = vadd.f32 %v1453, %v1474
      %v1491 = vadd.f32 %v1454, %v1475
      %v1492 = vadd.f32 %v1455, %v1476
      %v1493 = vadd.f32 %v1456, %v1477
      %v1494 = vadd.f32 %v1457, %v1478
      %v1495 = vadd.f32 %v1458, %v1479
      %v1496 = vadd.f32 %v1459, %v1480
      %v1497 = vadd.f32 %v1460, %v1481
      %v1498 = vadd.f32 %v1461, %v1482
      %v1499 = vadd.f32 %v1462, %v1483
      %v1500 = vadd.f32 %v1463, %v1484
      %v1501 = vadd.f32 %v1464, %v1485
      %v1502 = vadd.f32 %v1465, %v1486
      %v1503 = vld [vmem:[%s637 + $0x3] sm:$0x1]
      %v1504 = vlaneseq
      %v1505 = vshrl.u32 %v1504, 7
      %v1506 = vsub.s32 0, %v1505
      %v1507 = vrot.slane %v1503, %v1506
      %v1508 = vmul.f32 %v1405, %v1507
      %v1509 = vmul.f32 %v1406, %v1507
      %v1510 = vmul.f32 %v1407, %v1507
      %v1511 = vmul.f32 %v1408, %v1507
      %v1512 = vmul.f32 %v1409, %v1507
      %v1513 = vmul.f32 %v1410, %v1507
      %v1514 = vmul.f32 %v1411, %v1507
      %v1515 = vmul.f32 %v1412, %v1507
      %v1516 = vmul.f32 %v1413, %v1507
      %v1517 = vmul.f32 %v1414, %v1507
      %v1518 = vmul.f32 %v1415, %v1507
      %v1519 = vmul.f32 %v1416, %v1507
      %v1520 = vmul.f32 %v1417, %v1507
      %v1521 = vmul.f32 %v1418, %v1507
      %v1522 = vmul.f32 %v1419, %v1507
      %v1523 = vmul.f32 %v1420, %v1507
      %v1524 = vadd.f32 %v1487, %v1508
      %v1525 = vadd.f32 %v1488, %v1509
      %v1526 = vadd.f32 %v1489, %v1510
      %v1527 = vadd.f32 %v1490, %v1511
      %v1528 = vadd.f32 %v1491, %v1512
      %v1529 = vadd.f32 %v1492, %v1513
      %v1530 = vadd.f32 %v1493, %v1514
      %v1531 = vadd.f32 %v1494, %v1515
      %v1532 = vadd.f32 %v1495, %v1516
      %v1533 = vadd.f32 %v1496, %v1517
      %v1534 = vadd.f32 %v1497, %v1518
      %v1535 = vadd.f32 %v1498, %v1519
      %v1536 = vadd.f32 %v1499, %v1520
      %v1537 = vadd.f32 %v1500, %v1521
      %v1538 = vadd.f32 %v1501, %v1522
      %v1539 = vadd.f32 %v1502, %v1523
      %v1540 = vld [vmem:[%s675 + $0x3] sm:$0x1]
      %v1541 = vlaneseq
      %v1542 = vshrl.u32 %v1541, 7
      %v1543 = vsub.s32 0, %v1542
      %v1544 = vrot.slane %v1540, %v1543
      %v1545 = vmul.f32 %v1407, %v1544
      %v1546 = vmul.f32 %v1408, %v1544
      %v1547 = vmul.f32 %v1409, %v1544
      %v1548 = vmul.f32 %v1410, %v1544
      %v1549 = vmul.f32 %v1411, %v1544
      %v1550 = vmul.f32 %v1412, %v1544
      %v1551 = vmul.f32 %v1413, %v1544
      %v1552 = vmul.f32 %v1414, %v1544
      %v1553 = vmul.f32 %v1415, %v1544
      %v1554 = vmul.f32 %v1416, %v1544
      %v1555 = vmul.f32 %v1417, %v1544
      %v1556 = vmul.f32 %v1418, %v1544
      %v1557 = vmul.f32 %v1419, %v1544
      %v1558 = vmul.f32 %v1420, %v1544
      %v1559 = vmul.f32 %v1421, %v1544
      %v1560 = vmul.f32 %v1422, %v1544
      %v1561 = vadd.f32 %v1524, %v1545
      %v1562 = vadd.f32 %v1525, %v1546
      %v1563 = vadd.f32 %v1526, %v1547
      %v1564 = vadd.f32 %v1527, %v1548
      %v1565 = vadd.f32 %v1528, %v1549
      %v1566 = vadd.f32 %v1529, %v1550
      %v1567 = vadd.f32 %v1530, %v1551
      %v1568 = vadd.f32 %v1531, %v1552
      %v1569 = vadd.f32 %v1532, %v1553
      %v1570 = vadd.f32 %v1533, %v1554
      %v1571 = vadd.f32 %v1534, %v1555
      %v1572 = vadd.f32 %v1535, %v1556
      %v1573 = vadd.f32 %v1536, %v1557
      %v1574 = vadd.f32 %v1537, %v1558
      %v1575 = vadd.f32 %v1538, %v1559
      %v1576 = vadd.f32 %v1539, %v1560
      %v1577 = vld [vmem:[%s713 + $0x3] sm:$0x1]
      %v1578 = vlaneseq
      %v1579 = vshrl.u32 %v1578, 7
      %v1580 = vsub.s32 0, %v1579
      %v1581 = vrot.slane %v1577, %v1580
      %v1582 = vmul.f32 %v1409, %v1581
      %v1583 = vmul.f32 %v1410, %v1581
      %v1584 = vmul.f32 %v1411, %v1581
      %v1585 = vmul.f32 %v1412, %v1581
      %v1586 = vmul.f32 %v1413, %v1581
      %v1587 = vmul.f32 %v1414, %v1581
      %v1588 = vmul.f32 %v1415, %v1581
      %v1589 = vmul.f32 %v1416, %v1581
      %v1590 = vmul.f32 %v1417, %v1581
      %v1591 = vmul.f32 %v1418, %v1581
      %v1592 = vmul.f32 %v1419, %v1581
      %v1593 = vmul.f32 %v1420, %v1581
      %v1594 = vmul.f32 %v1421, %v1581
      %v1595 = vmul.f32 %v1422, %v1581
      %v1596 = vmul.f32 %v1423, %v1581
      %v1597 = vmul.f32 %v1424, %v1581
      %v1598 = vadd.f32 %v1561, %v1582
      %v1599 = vadd.f32 %v1562, %v1583
      %v1600 = vadd.f32 %v1563, %v1584
      %v1601 = vadd.f32 %v1564, %v1585
      %v1602 = vadd.f32 %v1565, %v1586
      %v1603 = vadd.f32 %v1566, %v1587
      %v1604 = vadd.f32 %v1567, %v1588
      %v1605 = vadd.f32 %v1568, %v1589
      %v1606 = vadd.f32 %v1569, %v1590
      %v1607 = vadd.f32 %v1570, %v1591
      %v1608 = vadd.f32 %v1571, %v1592
      %v1609 = vadd.f32 %v1572, %v1593
      %v1610 = vadd.f32 %v1573, %v1594
      %v1611 = vadd.f32 %v1574, %v1595
      %v1612 = vadd.f32 %v1575, %v1596
      %v1613 = vadd.f32 %v1576, %v1597
      %v1614 = vld [vmem:[%s751 + $0x3] sm:$0x1]
      %v1615 = vlaneseq
      %v1616 = vshrl.u32 %v1615, 7
      %v1617 = vsub.s32 0, %v1616
      %v1618 = vrot.slane %v1614, %v1617
      %v1619 = vmul.f32 %v1411, %v1618
      %v1620 = vmul.f32 %v1412, %v1618
      %v1621 = vmul.f32 %v1413, %v1618
      %v1622 = vmul.f32 %v1414, %v1618
      %v1623 = vmul.f32 %v1415, %v1618
      %v1624 = vmul.f32 %v1416, %v1618
      %v1625 = vmul.f32 %v1417, %v1618
      %v1626 = vmul.f32 %v1418, %v1618
      %v1627 = vmul.f32 %v1419, %v1618
      %v1628 = vmul.f32 %v1420, %v1618
      %v1629 = vmul.f32 %v1421, %v1618
      %v1630 = vmul.f32 %v1422, %v1618
      %v1631 = vmul.f32 %v1423, %v1618
      %v1632 = vmul.f32 %v1424, %v1618
      %v1633 = vmul.f32 %v1425, %v1618
      %v1634 = vmul.f32 %v1426, %v1618
      %v1635 = vadd.f32 %v1598, %v1619
      %v1636 = vadd.f32 %v1599, %v1620
      %v1637 = vadd.f32 %v1600, %v1621
      %v1638 = vadd.f32 %v1601, %v1622
      %v1639 = vadd.f32 %v1602, %v1623
      %v1640 = vadd.f32 %v1603, %v1624
      %v1641 = vadd.f32 %v1604, %v1625
      %v1642 = vadd.f32 %v1605, %v1626
      %v1643 = vadd.f32 %v1606, %v1627
      %v1644 = vadd.f32 %v1607, %v1628
      %v1645 = vadd.f32 %v1608, %v1629
      %v1646 = vadd.f32 %v1609, %v1630
      %v1647 = vadd.f32 %v1610, %v1631
      %v1648 = vadd.f32 %v1611, %v1632
      %v1649 = vadd.f32 %v1612, %v1633
      %v1650 = vadd.f32 %v1613, %v1634
      %v1651 = vld [vmem:[%s789 + $0x3] sm:$0x1]
      %v1652 = vlaneseq
      %v1653 = vshrl.u32 %v1652, 7
      %v1654 = vsub.s32 0, %v1653
      %v1655 = vrot.slane %v1651, %v1654
      %v1656 = vmul.f32 %v1413, %v1655
      %v1657 = vmul.f32 %v1414, %v1655
      %v1658 = vmul.f32 %v1415, %v1655
      %v1659 = vmul.f32 %v1416, %v1655
      %v1660 = vmul.f32 %v1417, %v1655
      %v1661 = vmul.f32 %v1418, %v1655
      %v1662 = vmul.f32 %v1419, %v1655
      %v1663 = vmul.f32 %v1420, %v1655
      %v1664 = vmul.f32 %v1421, %v1655
      %v1665 = vmul.f32 %v1422, %v1655
      %v1666 = vmul.f32 %v1423, %v1655
      %v1667 = vmul.f32 %v1424, %v1655
      %v1668 = vmul.f32 %v1425, %v1655
      %v1669 = vmul.f32 %v1426, %v1655
      %v1670 = vmul.f32 %v1427, %v1655
      %v1671 = vmul.f32 %v1428, %v1655
      %v1672 = vadd.f32 %v1635, %v1656
      %v1673 = vadd.f32 %v1636, %v1657
      %v1674 = vadd.f32 %v1637, %v1658
      %v1675 = vadd.f32 %v1638, %v1659
      %v1676 = vadd.f32 %v1639, %v1660
      %v1677 = vadd.f32 %v1640, %v1661
      %v1678 = vadd.f32 %v1641, %v1662
      %v1679 = vadd.f32 %v1642, %v1663
      %v1680 = vadd.f32 %v1643, %v1664
      %v1681 = vadd.f32 %v1644, %v1665
      %v1682 = vadd.f32 %v1645, %v1666
      %v1683 = vadd.f32 %v1646, %v1667
      %v1684 = vadd.f32 %v1647, %v1668
      %v1685 = vadd.f32 %v1648, %v1669
      %v1686 = vadd.f32 %v1649, %v1670
      %v1687 = vadd.f32 %v1650, %v1671
      %v1688 = vld [vmem:[#allocation2 + $0x4] sm:$0xff]
      %v1689 = vld [vmem:[#allocation2 + $0xc] sm:$0xff]
      %v1690 = vld [vmem:[#allocation2 + $0x1c] sm:$0xff]
      %v1691 = vld [vmem:[#allocation2 + $0x24] sm:$0xff]
      %v1692 = vld [vmem:[#allocation2 + $0x34] sm:$0xff]
      %v1693 = vld [vmem:[#allocation2 + $0x3c] sm:$0xff]
      %v1694 = vld [vmem:[#allocation2 + $0x4c] sm:$0xff]
      %v1695 = vld [vmem:[#allocation2 + $0x54] sm:$0xff]
      %v1696 = vld [vmem:[#allocation2 + $0x64] sm:$0xff]
      %v1697 = vld [vmem:[#allocation2 + $0x6c] sm:$0xff]
      %v1698 = vld [vmem:[#allocation2 + $0x7c] sm:$0xff]
      %v1699 = vld [vmem:[#allocation2 + $0x84] sm:$0xff]
      %v1700 = vld [vmem:[#allocation2 + $0x94] sm:$0xff]
      %v1701 = vld [vmem:[#allocation2 + $0x9c] sm:$0xff]
      %v1702 = vld [vmem:[#allocation2 + $0xac] sm:$0xff]
      %v1703 = vld [vmem:[#allocation2 + $0xb4] sm:$0xff]
      %v1704 = vld [vmem:[#allocation2 + $0xc4] sm:$0xff]
      %v1705 = vld [vmem:[#allocation2 + $0xcc] sm:$0xff]
      %v1706 = vld [vmem:[#allocation2 + $0xdc] sm:$0xff]
      %v1707 = vld [vmem:[#allocation2 + $0xe4] sm:$0xff]
      %v1708 = vld [vmem:[#allocation2 + $0xf4] sm:$0xff]
      %v1709 = vld [vmem:[#allocation2 + $0xfc] sm:$0xff]
      %v1710 = vld [vmem:[#allocation2 + $0x10c] sm:$0xff]
      %v1711 = vld [vmem:[#allocation2 + $0x114] sm:$0xff]
      %v1712 = vld [vmem:[#allocation2 + $0x124] sm:$0xff]
      %v1713 = vld [vmem:[#allocation2 + $0x12c] sm:$0xff]
      %v1714 = vld [vmem:[#allocation2 + $0x13c] sm:$0xff]
      %v1715 = vld [vmem:[#allocation2 + $0x144] sm:$0xff]
      %v1716 = vld [vmem:[%s1 + $0x4] sm:$0x1]
      %v1717 = vlaneseq
      %v1718 = vshrl.u32 %v1717, 7
      %v1719 = vsub.s32 0, %v1718
      %v1720 = vrot.slane %v1716, %v1719
      %v1721 = vmul.f32 %v1688, %v1720
      %v1722 = vmul.f32 %v1689, %v1720
      %v1723 = vmul.f32 %v1690, %v1720
      %v1724 = vmul.f32 %v1691, %v1720
      %v1725 = vmul.f32 %v1692, %v1720
      %v1726 = vmul.f32 %v1693, %v1720
      %v1727 = vmul.f32 %v1694, %v1720
      %v1728 = vmul.f32 %v1695, %v1720
      %v1729 = vmul.f32 %v1696, %v1720
      %v1730 = vmul.f32 %v1697, %v1720
      %v1731 = vmul.f32 %v1698, %v1720
      %v1732 = vmul.f32 %v1699, %v1720
      %v1733 = vmul.f32 %v1700, %v1720
      %v1734 = vmul.f32 %v1701, %v1720
      %v1735 = vmul.f32 %v1702, %v1720
      %v1736 = vmul.f32 %v1703, %v1720
      %v1737 = vadd.f32 %v1672, %v1721
      %v1738 = vadd.f32 %v1673, %v1722
      %v1739 = vadd.f32 %v1674, %v1723
      %v1740 = vadd.f32 %v1675, %v1724
      %v1741 = vadd.f32 %v1676, %v1725
      %v1742 = vadd.f32 %v1677, %v1726
      %v1743 = vadd.f32 %v1678, %v1727
      %v1744 = vadd.f32 %v1679, %v1728
      %v1745 = vadd.f32 %v1680, %v1729
      %v1746 = vadd.f32 %v1681, %v1730
      %v1747 = vadd.f32 %v1682, %v1731
      %v1748 = vadd.f32 %v1683, %v1732
      %v1749 = vadd.f32 %v1684, %v1733
      %v1750 = vadd.f32 %v1685, %v1734
      %v1751 = vadd.f32 %v1686, %v1735
      %v1752 = vadd.f32 %v1687, %v1736
      %v1753 = vld [vmem:[%s599 + $0x4] sm:$0x1]
      %v1754 = vlaneseq
      %v1755 = vshrl.u32 %v1754, 7
      %v1756 = vsub.s32 0, %v1755
      %v1757 = vrot.slane %v1753, %v1756
      %v1758 = vmul.f32 %v1690, %v1757
      %v1759 = vmul.f32 %v1691, %v1757
      %v1760 = vmul.f32 %v1692, %v1757
      %v1761 = vmul.f32 %v1693, %v1757
      %v1762 = vmul.f32 %v1694, %v1757
      %v1763 = vmul.f32 %v1695, %v1757
      %v1764 = vmul.f32 %v1696, %v1757
      %v1765 = vmul.f32 %v1697, %v1757
      %v1766 = vmul.f32 %v1698, %v1757
      %v1767 = vmul.f32 %v1699, %v1757
      %v1768 = vmul.f32 %v1700, %v1757
      %v1769 = vmul.f32 %v1701, %v1757
      %v1770 = vmul.f32 %v1702, %v1757
      %v1771 = vmul.f32 %v1703, %v1757
      %v1772 = vmul.f32 %v1704, %v1757
      %v1773 = vmul.f32 %v1705, %v1757
      %v1774 = vadd.f32 %v1737, %v1758
      %v1775 = vadd.f32 %v1738, %v1759
      %v1776 = vadd.f32 %v1739, %v1760
      %v1777 = vadd.f32 %v1740, %v1761
      %v1778 = vadd.f32 %v1741, %v1762
      %v1779 = vadd.f32 %v1742, %v1763
      %v1780 = vadd.f32 %v1743, %v1764
      %v1781 = vadd.f32 %v1744, %v1765
      %v1782 = vadd.f32 %v1745, %v1766
      %v1783 = vadd.f32 %v1746, %v1767
      %v1784 = vadd.f32 %v1747, %v1768
      %v1785 = vadd.f32 %v1748, %v1769
      %v1786 = vadd.f32 %v1749, %v1770
      %v1787 = vadd.f32 %v1750, %v1771
      %v1788 = vadd.f32 %v1751, %v1772
      %v1789 = vadd.f32 %v1752, %v1773
      %v1790 = vld [vmem:[%s637 + $0x4] sm:$0x1]
      %v1791 = vlaneseq
      %v1792 = vshrl.u32 %v1791, 7
      %v1793 = vsub.s32 0, %v1792
      %v1794 = vrot.slane %v1790, %v1793
      %v1795 = vmul.f32 %v1692, %v1794
      %v1796 = vmul.f32 %v1693, %v1794
      %v1797 = vmul.f32 %v1694, %v1794
      %v1798 = vmul.f32 %v1695, %v1794
      %v1799 = vmul.f32 %v1696, %v1794
      %v1800 = vmul.f32 %v1697, %v1794
      %v1801 = vmul.f32 %v1698, %v1794
      %v1802 = vmul.f32 %v1699, %v1794
      %v1803 = vmul.f32 %v1700, %v1794
      %v1804 = vmul.f32 %v1701, %v1794
      %v1805 = vmul.f32 %v1702, %v1794
      %v1806 = vmul.f32 %v1703, %v1794
      %v1807 = vmul.f32 %v1704, %v1794
      %v1808 = vmul.f32 %v1705, %v1794
      %v1809 = vmul.f32 %v1706, %v1794
      %v1810 = vmul.f32 %v1707, %v1794
      %v1811 = vadd.f32 %v1774, %v1795
      %v1812 = vadd.f32 %v1775, %v1796
      %v1813 = vadd.f32 %v1776, %v1797
      %v1814 = vadd.f32 %v1777, %v1798
      %v1815 = vadd.f32 %v1778, %v1799
      %v1816 = vadd.f32 %v1779, %v1800
      %v1817 = vadd.f32 %v1780, %v1801
      %v1818 = vadd.f32 %v1781, %v1802
      %v1819 = vadd.f32 %v1782, %v1803
      %v1820 = vadd.f32 %v1783, %v1804
      %v1821 = vadd.f32 %v1784, %v1805
      %v1822 = vadd.f32 %v1785, %v1806
      %v1823 = vadd.f32 %v1786, %v1807
      %v1824 = vadd.f32 %v1787, %v1808
      %v1825 = vadd.f32 %v1788, %v1809
      %v1826 = vadd.f32 %v1789, %v1810
      %v1827 = vld [vmem:[%s675 + $0x4] sm:$0x1]
      %v1828 = vlaneseq
      %v1829 = vshrl.u32 %v1828, 7
      %v1830 = vsub.s32 0, %v1829
      %v1831 = vrot.slane %v1827, %v1830
      %v1832 = vmul.f32 %v1694, %v1831
      %v1833 = vmul.f32 %v1695, %v1831
      %v1834 = vmul.f32 %v1696, %v1831
      %v1835 = vmul.f32 %v1697, %v1831
      %v1836 = vmul.f32 %v1698, %v1831
      %v1837 = vmul.f32 %v1699, %v1831
      %v1838 = vmul.f32 %v1700, %v1831
      %v1839 = vmul.f32 %v1701, %v1831
      %v1840 = vmul.f32 %v1702, %v1831
      %v1841 = vmul.f32 %v1703, %v1831
      %v1842 = vmul.f32 %v1704, %v1831
      %v1843 = vmul.f32 %v1705, %v1831
      %v1844 = vmul.f32 %v1706, %v1831
      %v1845 = vmul.f32 %v1707, %v1831
      %v1846 = vmul.f32 %v1708, %v1831
      %v1847 = vmul.f32 %v1709, %v1831
      %v1848 = vadd.f32 %v1811, %v1832
      %v1849 = vadd.f32 %v1812, %v1833
      %v1850 = vadd.f32 %v1813, %v1834
      %v1851 = vadd.f32 %v1814, %v1835
      %v1852 = vadd.f32 %v1815, %v1836
      %v1853 = vadd.f32 %v1816, %v1837
      %v1854 = vadd.f32 %v1817, %v1838
      %v1855 = vadd.f32 %v1818, %v1839
      %v1856 = vadd.f32 %v1819, %v1840
      %v1857 = vadd.f32 %v1820, %v1841
      %v1858 = vadd.f32 %v1821, %v1842
      %v1859 = vadd.f32 %v1822, %v1843
      %v1860 = vadd.f32 %v1823, %v1844
      %v1861 = vadd.f32 %v1824, %v1845
      %v1862 = vadd.f32 %v1825, %v1846
      %v1863 = vadd.f32 %v1826, %v1847
      %v1864 = vld [vmem:[%s713 + $0x4] sm:$0x1]
      %v1865 = vlaneseq
      %v1866 = vshrl.u32 %v1865, 7
      %v1867 = vsub.s32 0, %v1866
      %v1868 = vrot.slane %v1864, %v1867
      %v1869 = vmul.f32 %v1696, %v1868
      %v1870 = vmul.f32 %v1697, %v1868
      %v1871 = vmul.f32 %v1698, %v1868
      %v1872 = vmul.f32 %v1699, %v1868
      %v1873 = vmul.f32 %v1700, %v1868
      %v1874 = vmul.f32 %v1701, %v1868
      %v1875 = vmul.f32 %v1702, %v1868
      %v1876 = vmul.f32 %v1703, %v1868
      %v1877 = vmul.f32 %v1704, %v1868
      %v1878 = vmul.f32 %v1705, %v1868
      %v1879 = vmul.f32 %v1706, %v1868
      %v1880 = vmul.f32 %v1707, %v1868
      %v1881 = vmul.f32 %v1708, %v1868
      %v1882 = vmul.f32 %v1709, %v1868
      %v1883 = vmul.f32 %v1710, %v1868
      %v1884 = vmul.f32 %v1711, %v1868
      %v1885 = vadd.f32 %v1848, %v1869
      %v1886 = vadd.f32 %v1849, %v1870
      %v1887 = vadd.f32 %v1850, %v1871
      %v1888 = vadd.f32 %v1851, %v1872
      %v1889 = vadd.f32 %v1852, %v1873
      %v1890 = vadd.f32 %v1853, %v1874
      %v1891 = vadd.f32 %v1854, %v1875
      %v1892 = vadd.f32 %v1855, %v1876
      %v1893 = vadd.f32 %v1856, %v1877
      %v1894 = vadd.f32 %v1857, %v1878
      %v1895 = vadd.f32 %v1858, %v1879
      %v1896 = vadd.f32 %v1859, %v1880
      %v1897 = vadd.f32 %v1860, %v1881
      %v1898 = vadd.f32 %v1861, %v1882
      %v1899 = vadd.f32 %v1862, %v1883
      %v1900 = vadd.f32 %v1863, %v1884
      %v1901 = vld [vmem:[%s751 + $0x4] sm:$0x1]
      %v1902 = vlaneseq
      %v1903 = vshrl.u32 %v1902, 7
      %v1904 = vsub.s32 0, %v1903
      %v1905 = vrot.slane %v1901, %v1904
      %v1906 = vmul.f32 %v1698, %v1905
      %v1907 = vmul.f32 %v1699, %v1905
      %v1908 = vmul.f32 %v1700, %v1905
      %v1909 = vmul.f32 %v1701, %v1905
      %v1910 = vmul.f32 %v1702, %v1905
      %v1911 = vmul.f32 %v1703, %v1905
      %v1912 = vmul.f32 %v1704, %v1905
      %v1913 = vmul.f32 %v1705, %v1905
      %v1914 = vmul.f32 %v1706, %v1905
      %v1915 = vmul.f32 %v1707, %v1905
      %v1916 = vmul.f32 %v1708, %v1905
      %v1917 = vmul.f32 %v1709, %v1905
      %v1918 = vmul.f32 %v1710, %v1905
      %v1919 = vmul.f32 %v1711, %v1905
      %v1920 = vmul.f32 %v1712, %v1905
      %v1921 = vmul.f32 %v1713, %v1905
      %v1922 = vadd.f32 %v1885, %v1906
      %v1923 = vadd.f32 %v1886, %v1907
      %v1924 = vadd.f32 %v1887, %v1908
      %v1925 = vadd.f32 %v1888, %v1909
      %v1926 = vadd.f32 %v1889, %v1910
      %v1927 = vadd.f32 %v1890, %v1911
      %v1928 = vadd.f32 %v1891, %v1912
      %v1929 = vadd.f32 %v1892, %v1913
      %v1930 = vadd.f32 %v1893, %v1914
      %v1931 = vadd.f32 %v1894, %v1915
      %v1932 = vadd.f32 %v1895, %v1916
      %v1933 = vadd.f32 %v1896, %v1917
      %v1934 = vadd.f32 %v1897, %v1918
      %v1935 = vadd.f32 %v1898, %v1919
      %v1936 = vadd.f32 %v1899, %v1920
      %v1937 = vadd.f32 %v1900, %v1921
      %v1938 = vld [vmem:[%s789 + $0x4] sm:$0x1]
      %v1939 = vlaneseq
      %v1940 = vshrl.u32 %v1939, 7
      %v1941 = vsub.s32 0, %v1940
      %v1942 = vrot.slane %v1938, %v1941
      %v1943 = vmul.f32 %v1700, %v1942
      %v1944 = vmul.f32 %v1701, %v1942
      %v1945 = vmul.f32 %v1702, %v1942
      %v1946 = vmul.f32 %v1703, %v1942
      %v1947 = vmul.f32 %v1704, %v1942
      %v1948 = vmul.f32 %v1705, %v1942
      %v1949 = vmul.f32 %v1706, %v1942
      %v1950 = vmul.f32 %v1707, %v1942
      %v1951 = vmul.f32 %v1708, %v1942
      %v1952 = vmul.f32 %v1709, %v1942
      %v1953 = vmul.f32 %v1710, %v1942
      %v1954 = vmul.f32 %v1711, %v1942
      %v1955 = vmul.f32 %v1712, %v1942
      %v1956 = vmul.f32 %v1713, %v1942
      %v1957 = vmul.f32 %v1714, %v1942
      %v1958 = vmul.f32 %v1715, %v1942
      %v1959 = vadd.f32 %v1922, %v1943
      %v1960 = vadd.f32 %v1923, %v1944
      %v1961 = vadd.f32 %v1924, %v1945
      %v1962 = vadd.f32 %v1925, %v1946
      %v1963 = vadd.f32 %v1926, %v1947
      %v1964 = vadd.f32 %v1927, %v1948
      %v1965 = vadd.f32 %v1928, %v1949
      %v1966 = vadd.f32 %v1929, %v1950
      %v1967 = vadd.f32 %v1930, %v1951
      %v1968 = vadd.f32 %v1931, %v1952
      %v1969 = vadd.f32 %v1932, %v1953
      %v1970 = vadd.f32 %v1933, %v1954
      %v1971 = vadd.f32 %v1934, %v1955
      %v1972 = vadd.f32 %v1935, %v1956
      %v1973 = vadd.f32 %v1936, %v1957
      %v1974 = vadd.f32 %v1937, %v1958
      %v1975 = vld [vmem:[#allocation2 + $0x5] sm:$0xff]
      %v1976 = vld [vmem:[#allocation2 + $0xd] sm:$0xff]
      %v1977 = vld [vmem:[#allocation2 + $0x1d] sm:$0xff]
      %v1978 = vld [vmem:[#allocation2 + $0x25] sm:$0xff]
      %v1979 = vld [vmem:[#allocation2 + $0x35] sm:$0xff]
      %v1980 = vld [vmem:[#allocation2 + $0x3d] sm:$0xff]
      %v1981 = vld [vmem:[#allocation2 + $0x4d] sm:$0xff]
      %v1982 = vld [vmem:[#allocation2 + $0x55] sm:$0xff]
      %v1983 = vld [vmem:[#allocation2 + $0x65] sm:$0xff]
      %v1984 = vld [vmem:[#allocation2 + $0x6d] sm:$0xff]
      %v1985 = vld [vmem:[#allocation2 + $0x7d] sm:$0xff]
      %v1986 = vld [vmem:[#allocation2 + $0x85] sm:$0xff]
      %v1987 = vld [vmem:[#allocation2 + $0x95] sm:$0xff]
      %v1988 = vld [vmem:[#allocation2 + $0x9d] sm:$0xff]
      %v1989 = vld [vmem:[#allocation2 + $0xad] sm:$0xff]
      %v1990 = vld [vmem:[#allocation2 + $0xb5] sm:$0xff]
      %v1991 = vld [vmem:[#allocation2 + $0xc5] sm:$0xff]
      %v1992 = vld [vmem:[#allocation2 + $0xcd] sm:$0xff]
      %v1993 = vld [vmem:[#allocation2 + $0xdd] sm:$0xff]
      %v1994 = vld [vmem:[#allocation2 + $0xe5] sm:$0xff]
      %v1995 = vld [vmem:[#allocation2 + $0xf5] sm:$0xff]
      %v1996 = vld [vmem:[#allocation2 + $0xfd] sm:$0xff]
      %v1997 = vld [vmem:[#allocation2 + $0x10d] sm:$0xff]
      %v1998 = vld [vmem:[#allocation2 + $0x115] sm:$0xff]
      %v1999 = vld [vmem:[#allocation2 + $0x125] sm:$0xff]
      %v2000 = vld [vmem:[#allocation2 + $0x12d] sm:$0xff]
      %v2001 = vld [vmem:[#allocation2 + $0x13d] sm:$0xff]
      %v2002 = vld [vmem:[#allocation2 + $0x145] sm:$0xff]
      %v2003 = vld [vmem:[%s1 + $0x5] sm:$0x1]
      %v2004 = vlaneseq
      %v2005 = vshrl.u32 %v2004, 7
      %v2006 = vsub.s32 0, %v2005
      %v2007 = vrot.slane %v2003, %v2006
      %v2008 = vmul.f32 %v1975, %v2007
      %v2009 = vmul.f32 %v1976, %v2007
      %v2010 = vmul.f32 %v1977, %v2007
      %v2011 = vmul.f32 %v1978, %v2007
      %v2012 = vmul.f32 %v1979, %v2007
      %v2013 = vmul.f32 %v1980, %v2007
      %v2014 = vmul.f32 %v1981, %v2007
      %v2015 = vmul.f32 %v1982, %v2007
      %v2016 = vmul.f32 %v1983, %v2007
      %v2017 = vmul.f32 %v1984, %v2007
      %v2018 = vmul.f32 %v1985, %v2007
      %v2019 = vmul.f32 %v1986, %v2007
      %v2020 = vmul.f32 %v1987, %v2007
      %v2021 = vmul.f32 %v1988, %v2007
      %v2022 = vmul.f32 %v1989, %v2007
      %v2023 = vmul.f32 %v1990, %v2007
      %v2024 = vadd.f32 %v1959, %v2008
      %v2025 = vadd.f32 %v1960, %v2009
      %v2026 = vadd.f32 %v1961, %v2010
      %v2027 = vadd.f32 %v1962, %v2011
      %v2028 = vadd.f32 %v1963, %v2012
      %v2029 = vadd.f32 %v1964, %v2013
      %v2030 = vadd.f32 %v1965, %v2014
      %v2031 = vadd.f32 %v1966, %v2015
      %v2032 = vadd.f32 %v1967, %v2016
      %v2033 = vadd.f32 %v1968, %v2017
      %v2034 = vadd.f32 %v1969, %v2018
      %v2035 = vadd.f32 %v1970, %v2019
      %v2036 = vadd.f32 %v1971, %v2020
      %v2037 = vadd.f32 %v1972, %v2021
      %v2038 = vadd.f32 %v1973, %v2022
      %v2039 = vadd.f32 %v1974, %v2023
      %v2040 = vld [vmem:[%s599 + $0x5] sm:$0x1]
      %v2041 = vlaneseq
      %v2042 = vshrl.u32 %v2041, 7
      %v2043 = vsub.s32 0, %v2042
      %v2044 = vrot.slane %v2040, %v2043
      %v2045 = vmul.f32 %v1977, %v2044
      %v2046 = vmul.f32 %v1978, %v2044
      %v2047 = vmul.f32 %v1979, %v2044
      %v2048 = vmul.f32 %v1980, %v2044
      %v2049 = vmul.f32 %v1981, %v2044
      %v2050 = vmul.f32 %v1982, %v2044
      %v2051 = vmul.f32 %v1983, %v2044
      %v2052 = vmul.f32 %v1984, %v2044
      %v2053 = vmul.f32 %v1985, %v2044
      %v2054 = vmul.f32 %v1986, %v2044
      %v2055 = vmul.f32 %v1987, %v2044
      %v2056 = vmul.f32 %v1988, %v2044
      %v2057 = vmul.f32 %v1989, %v2044
      %v2058 = vmul.f32 %v1990, %v2044
      %v2059 = vmul.f32 %v1991, %v2044
      %v2060 = vmul.f32 %v1992, %v2044
      %v2061 = vadd.f32 %v2024, %v2045
      %v2062 = vadd.f32 %v2025, %v2046
      %v2063 = vadd.f32 %v2026, %v2047
      %v2064 = vadd.f32 %v2027, %v2048
      %v2065 = vadd.f32 %v2028, %v2049
      %v2066 = vadd.f32 %v2029, %v2050
      %v2067 = vadd.f32 %v2030, %v2051
      %v2068 = vadd.f32 %v2031, %v2052
      %v2069 = vadd.f32 %v2032, %v2053
      %v2070 = vadd.f32 %v2033, %v2054
      %v2071 = vadd.f32 %v2034, %v2055
      %v2072 = vadd.f32 %v2035, %v2056
      %v2073 = vadd.f32 %v2036, %v2057
      %v2074 = vadd.f32 %v2037, %v2058
      %v2075 = vadd.f32 %v2038, %v2059
      %v2076 = vadd.f32 %v2039, %v2060
      %v2077 = vld [vmem:[%s637 + $0x5] sm:$0x1]
      %v2078 = vlaneseq
      %v2079 = vshrl.u32 %v2078, 7
      %v2080 = vsub.s32 0, %v2079
      %v2081 = vrot.slane %v2077, %v2080
      %v2082 = vmul.f32 %v1979, %v2081
      %v2083 = vmul.f32 %v1980, %v2081
      %v2084 = vmul.f32 %v1981, %v2081
      %v2085 = vmul.f32 %v1982, %v2081
      %v2086 = vmul.f32 %v1983, %v2081
      %v2087 = vmul.f32 %v1984, %v2081
      %v2088 = vmul.f32 %v1985, %v2081
      %v2089 = vmul.f32 %v1986, %v2081
      %v2090 = vmul.f32 %v1987, %v2081
      %v2091 = vmul.f32 %v1988, %v2081
      %v2092 = vmul.f32 %v1989, %v2081
      %v2093 = vmul.f32 %v1990, %v2081
      %v2094 = vmul.f32 %v1991, %v2081
      %v2095 = vmul.f32 %v1992, %v2081
      %v2096 = vmul.f32 %v1993, %v2081
      %v2097 = vmul.f32 %v1994, %v2081
      %v2098 = vadd.f32 %v2061, %v2082
      %v2099 = vadd.f32 %v2062, %v2083
      %v2100 = vadd.f32 %v2063, %v2084
      %v2101 = vadd.f32 %v2064, %v2085
      %v2102 = vadd.f32 %v2065, %v2086
      %v2103 = vadd.f32 %v2066, %v2087
      %v2104 = vadd.f32 %v2067, %v2088
      %v2105 = vadd.f32 %v2068, %v2089
      %v2106 = vadd.f32 %v2069, %v2090
      %v2107 = vadd.f32 %v2070, %v2091
      %v2108 = vadd.f32 %v2071, %v2092
      %v2109 = vadd.f32 %v2072, %v2093
      %v2110 = vadd.f32 %v2073, %v2094
      %v2111 = vadd.f32 %v2074, %v2095
      %v2112 = vadd.f32 %v2075, %v2096
      %v2113 = vadd.f32 %v2076, %v2097
      %v2114 = vld [vmem:[%s675 + $0x5] sm:$0x1]
      %v2115 = vlaneseq
      %v2116 = vshrl.u32 %v2115, 7
      %v2117 = vsub.s32 0, %v2116
      %v2118 = vrot.slane %v2114, %v2117
      %v2119 = vmul.f32 %v1981, %v2118
      %v2120 = vmul.f32 %v1982, %v2118
      %v2121 = vmul.f32 %v1983, %v2118
      %v2122 = vmul.f32 %v1984, %v2118
      %v2123 = vmul.f32 %v1985, %v2118
      %v2124 = vmul.f32 %v1986, %v2118
      %v2125 = vmul.f32 %v1987, %v2118
      %v2126 = vmul.f32 %v1988, %v2118
      %v2127 = vmul.f32 %v1989, %v2118
      %v2128 = vmul.f32 %v1990, %v2118
      %v2129 = vmul.f32 %v1991, %v2118
      %v2130 = vmul.f32 %v1992, %v2118
      %v2131 = vmul.f32 %v1993, %v2118
      %v2132 = vmul.f32 %v1994, %v2118
      %v2133 = vmul.f32 %v1995, %v2118
      %v2134 = vmul.f32 %v1996, %v2118
      %v2135 = vadd.f32 %v2098, %v2119
      %v2136 = vadd.f32 %v2099, %v2120
      %v2137 = vadd.f32 %v2100, %v2121
      %v2138 = vadd.f32 %v2101, %v2122
      %v2139 = vadd.f32 %v2102, %v2123
      %v2140 = vadd.f32 %v2103, %v2124
      %v2141 = vadd.f32 %v2104, %v2125
      %v2142 = vadd.f32 %v2105, %v2126
      %v2143 = vadd.f32 %v2106, %v2127
      %v2144 = vadd.f32 %v2107, %v2128
      %v2145 = vadd.f32 %v2108, %v2129
      %v2146 = vadd.f32 %v2109, %v2130
      %v2147 = vadd.f32 %v2110, %v2131
      %v2148 = vadd.f32 %v2111, %v2132
      %v2149 = vadd.f32 %v2112, %v2133
      %v2150 = vadd.f32 %v2113, %v2134
      %v2151 = vld [vmem:[%s713 + $0x5] sm:$0x1]
      %v2152 = vlaneseq
      %v2153 = vshrl.u32 %v2152, 7
      %v2154 = vsub.s32 0, %v2153
      %v2155 = vrot.slane %v2151, %v2154
      %v2156 = vmul.f32 %v1983, %v2155
      %v2157 = vmul.f32 %v1984, %v2155
      %v2158 = vmul.f32 %v1985, %v2155
      %v2159 = vmul.f32 %v1986, %v2155
      %v2160 = vmul.f32 %v1987, %v2155
      %v2161 = vmul.f32 %v1988, %v2155
      %v2162 = vmul.f32 %v1989, %v2155
      %v2163 = vmul.f32 %v1990, %v2155
      %v2164 = vmul.f32 %v1991, %v2155
      %v2165 = vmul.f32 %v1992, %v2155
      %v2166 = vmul.f32 %v1993, %v2155
      %v2167 = vmul.f32 %v1994, %v2155
      %v2168 = vmul.f32 %v1995, %v2155
      %v2169 = vmul.f32 %v1996, %v2155
      %v2170 = vmul.f32 %v1997, %v2155
      %v2171 = vmul.f32 %v1998, %v2155
      %v2172 = vadd.f32 %v2135, %v2156
      %v2173 = vadd.f32 %v2136, %v2157
      %v2174 = vadd.f32 %v2137, %v2158
      %v2175 = vadd.f32 %v2138, %v2159
      %v2176 = vadd.f32 %v2139, %v2160
      %v2177 = vadd.f32 %v2140, %v2161
      %v2178 = vadd.f32 %v2141, %v2162
      %v2179 = vadd.f32 %v2142, %v2163
      %v2180 = vadd.f32 %v2143, %v2164
      %v2181 = vadd.f32 %v2144, %v2165
      %v2182 = vadd.f32 %v2145, %v2166
      %v2183 = vadd.f32 %v2146, %v2167
      %v2184 = vadd.f32 %v2147, %v2168
      %v2185 = vadd.f32 %v2148, %v2169
      %v2186 = vadd.f32 %v2149, %v2170
      %v2187 = vadd.f32 %v2150, %v2171
      %v2188 = vld [vmem:[%s751 + $0x5] sm:$0x1]
      %v2189 = vlaneseq
      %v2190 = vshrl.u32 %v2189, 7
      %v2191 = vsub.s32 0, %v2190
      %v2192 = vrot.slane %v2188, %v2191
      %v2193 = vmul.f32 %v1985, %v2192
      %v2194 = vmul.f32 %v1986, %v2192
      %v2195 = vmul.f32 %v1987, %v2192
      %v2196 = vmul.f32 %v1988, %v2192
      %v2197 = vmul.f32 %v1989, %v2192
      %v2198 = vmul.f32 %v1990, %v2192
      %v2199 = vmul.f32 %v1991, %v2192
      %v2200 = vmul.f32 %v1992, %v2192
      %v2201 = vmul.f32 %v1993, %v2192
      %v2202 = vmul.f32 %v1994, %v2192
      %v2203 = vmul.f32 %v1995, %v2192
      %v2204 = vmul.f32 %v1996, %v2192
      %v2205 = vmul.f32 %v1997, %v2192
      %v2206 = vmul.f32 %v1998, %v2192
      %v2207 = vmul.f32 %v1999, %v2192
      %v2208 = vmul.f32 %v2000, %v2192
      %v2209 = vadd.f32 %v2172, %v2193
      %v2210 = vadd.f32 %v2173, %v2194
      %v2211 = vadd.f32 %v2174, %v2195
      %v2212 = vadd.f32 %v2175, %v2196
      %v2213 = vadd.f32 %v2176, %v2197
      %v2214 = vadd.f32 %v2177, %v2198
      %v2215 = vadd.f32 %v2178, %v2199
      %v2216 = vadd.f32 %v2179, %v2200
      %v2217 = vadd.f32 %v2180, %v2201
      %v2218 = vadd.f32 %v2181, %v2202
      %v2219 = vadd.f32 %v2182, %v2203
      %v2220 = vadd.f32 %v2183, %v2204
      %v2221 = vadd.f32 %v2184, %v2205
      %v2222 = vadd.f32 %v2185, %v2206
      %v2223 = vadd.f32 %v2186, %v2207
      %v2224 = vadd.f32 %v2187, %v2208
      %v2225 = vld [vmem:[%s789 + $0x5] sm:$0x1]
      %v2226 = vlaneseq
      %v2227 = vshrl.u32 %v2226, 7
      %v2228 = vsub.s32 0, %v2227
      %v2229 = vrot.slane %v2225, %v2228
      %v2230 = vmul.f32 %v1987, %v2229
      %v2231 = vmul.f32 %v1988, %v2229
      %v2232 = vmul.f32 %v1989, %v2229
      %v2233 = vmul.f32 %v1990, %v2229
      %v2234 = vmul.f32 %v1991, %v2229
      %v2235 = vmul.f32 %v1992, %v2229
      %v2236 = vmul.f32 %v1993, %v2229
      %v2237 = vmul.f32 %v1994, %v2229
      %v2238 = vmul.f32 %v1995, %v2229
      %v2239 = vmul.f32 %v1996, %v2229
      %v2240 = vmul.f32 %v1997, %v2229
      %v2241 = vmul.f32 %v1998, %v2229
      %v2242 = vmul.f32 %v1999, %v2229
      %v2243 = vmul.f32 %v2000, %v2229
      %v2244 = vmul.f32 %v2001, %v2229
      %v2245 = vmul.f32 %v2002, %v2229
      %v2246 = vadd.f32 %v2209, %v2230
      %v2247 = vadd.f32 %v2210, %v2231
      %v2248 = vadd.f32 %v2211, %v2232
      %v2249 = vadd.f32 %v2212, %v2233
      %v2250 = vadd.f32 %v2213, %v2234
      %v2251 = vadd.f32 %v2214, %v2235
      %v2252 = vadd.f32 %v2215, %v2236
      %v2253 = vadd.f32 %v2216, %v2237
      %v2254 = vadd.f32 %v2217, %v2238
      %v2255 = vadd.f32 %v2218, %v2239
      %v2256 = vadd.f32 %v2219, %v2240
      %v2257 = vadd.f32 %v2220, %v2241
      %v2258 = vadd.f32 %v2221, %v2242
      %v2259 = vadd.f32 %v2222, %v2243
      %v2260 = vadd.f32 %v2223, %v2244
      %v2261 = vadd.f32 %v2224, %v2245
      %v2262 = vld [vmem:[#allocation2 + $0x6] sm:$0xff]
      %v2263 = vld [vmem:[#allocation2 + $0xe] sm:$0xff]
      %v2264 = vld [vmem:[#allocation2 + $0x1e] sm:$0xff]
      %v2265 = vld [vmem:[#allocation2 + $0x26] sm:$0xff]
      %v2266 = vld [vmem:[#allocation2 + $0x36] sm:$0xff]
      %v2267 = vld [vmem:[#allocation2 + $0x3e] sm:$0xff]
      %v2268 = vld [vmem:[#allocation2 + $0x4e] sm:$0xff]
      %v2269 = vld [vmem:[#allocation2 + $0x56] sm:$0xff]
      %v2270 = vld [vmem:[#allocation2 + $0x66] sm:$0xff]
      %v2271 = vld [vmem:[#allocation2 + $0x6e] sm:$0xff]
      %v2272 = vld [vmem:[#allocation2 + $0x7e] sm:$0xff]
      %v2273 = vld [vmem:[#allocation2 + $0x86] sm:$0xff]
      %v2274 = vld [vmem:[#allocation2 + $0x96] sm:$0xff]
      %v2275 = vld [vmem:[#allocation2 + $0x9e] sm:$0xff]
      %v2276 = vld [vmem:[#allocation2 + $0xae] sm:$0xff]
      %v2277 = vld [vmem:[#allocation2 + $0xb6] sm:$0xff]
      %v2278 = vld [vmem:[#allocation2 + $0xc6] sm:$0xff]
      %v2279 = vld [vmem:[#allocation2 + $0xce] sm:$0xff]
      %v2280 = vld [vmem:[#allocation2 + $0xde] sm:$0xff]
      %v2281 = vld [vmem:[#allocation2 + $0xe6] sm:$0xff]
      %v2282 = vld [vmem:[#allocation2 + $0xf6] sm:$0xff]
      %v2283 = vld [vmem:[#allocation2 + $0xfe] sm:$0xff]
      %v2284 = vld [vmem:[#allocation2 + $0x10e] sm:$0xff]
      %v2285 = vld [vmem:[#allocation2 + $0x116] sm:$0xff]
      %v2286 = vld [vmem:[#allocation2 + $0x126] sm:$0xff]
      %v2287 = vld [vmem:[#allocation2 + $0x12e] sm:$0xff]
      %v2288 = vld [vmem:[#allocation2 + $0x13e] sm:$0xff]
      %v2289 = vld [vmem:[#allocation2 + $0x146] sm:$0xff]
      %v2290 = vld [vmem:[%s1 + $0x6] sm:$0x1]
      %v2291 = vlaneseq
      %v2292 = vshrl.u32 %v2291, 7
      %v2293 = vsub.s32 0, %v2292
      %v2294 = vrot.slane %v2290, %v2293
      %v2295 = vmul.f32 %v2262, %v2294
      %v2296 = vmul.f32 %v2263, %v2294
      %v2297 = vmul.f32 %v2264, %v2294
      %v2298 = vmul.f32 %v2265, %v2294
      %v2299 = vmul.f32 %v2266, %v2294
      %v2300 = vmul.f32 %v2267, %v2294
      %v2301 = vmul.f32 %v2268, %v2294
      %v2302 = vmul.f32 %v2269, %v2294
      %v2303 = vmul.f32 %v2270, %v2294
      %v2304 = vmul.f32 %v2271, %v2294
      %v2305 = vmul.f32 %v2272, %v2294
      %v2306 = vmul.f32 %v2273, %v2294
      %v2307 = vmul.f32 %v2274, %v2294
      %v2308 = vmul.f32 %v2275, %v2294
      %v2309 = vmul.f32 %v2276, %v2294
      %v2310 = vmul.f32 %v2277, %v2294
      %v2311 = vadd.f32 %v2246, %v2295
      %v2312 = vadd.f32 %v2247, %v2296
      %v2313 = vadd.f32 %v2248, %v2297
      %v2314 = vadd.f32 %v2249, %v2298
      %v2315 = vadd.f32 %v2250, %v2299
      %v2316 = vadd.f32 %v2251, %v2300
      %v2317 = vadd.f32 %v2252, %v2301
      %v2318 = vadd.f32 %v2253, %v2302
      %v2319 = vadd.f32 %v2254, %v2303
      %v2320 = vadd.f32 %v2255, %v2304
      %v2321 = vadd.f32 %v2256, %v2305
      %v2322 = vadd.f32 %v2257, %v2306
      %v2323 = vadd.f32 %v2258, %v2307
      %v2324 = vadd.f32 %v2259, %v2308
      %v2325 = vadd.f32 %v2260, %v2309
      %v2326 = vadd.f32 %v2261, %v2310
      %v2327 = vld [vmem:[%s599 + $0x6] sm:$0x1]
      %v2328 = vlaneseq
      %v2329 = vshrl.u32 %v2328, 7
      %v2330 = vsub.s32 0, %v2329
      %v2331 = vrot.slane %v2327, %v2330
      %v2332 = vmul.f32 %v2264, %v2331
      %v2333 = vmul.f32 %v2265, %v2331
      %v2334 = vmul.f32 %v2266, %v2331
      %v2335 = vmul.f32 %v2267, %v2331
      %v2336 = vmul.f32 %v2268, %v2331
      %v2337 = vmul.f32 %v2269, %v2331
      %v2338 = vmul.f32 %v2270, %v2331
      %v2339 = vmul.f32 %v2271, %v2331
      %v2340 = vmul.f32 %v2272, %v2331
      %v2341 = vmul.f32 %v2273, %v2331
      %v2342 = vmul.f32 %v2274, %v2331
      %v2343 = vmul.f32 %v2275, %v2331
      %v2344 = vmul.f32 %v2276, %v2331
      %v2345 = vmul.f32 %v2277, %v2331
      %v2346 = vmul.f32 %v2278, %v2331
      %v2347 = vmul.f32 %v2279, %v2331
      %v2348 = vadd.f32 %v2311, %v2332
      %v2349 = vadd.f32 %v2312, %v2333
      %v2350 = vadd.f32 %v2313, %v2334
      %v2351 = vadd.f32 %v2314, %v2335
      %v2352 = vadd.f32 %v2315, %v2336
      %v2353 = vadd.f32 %v2316, %v2337
      %v2354 = vadd.f32 %v2317, %v2338
      %v2355 = vadd.f32 %v2318, %v2339
      %v2356 = vadd.f32 %v2319, %v2340
      %v2357 = vadd.f32 %v2320, %v2341
      %v2358 = vadd.f32 %v2321, %v2342
      %v2359 = vadd.f32 %v2322, %v2343
      %v2360 = vadd.f32 %v2323, %v2344
      %v2361 = vadd.f32 %v2324, %v2345
      %v2362 = vadd.f32 %v2325, %v2346
      %v2363 = vadd.f32 %v2326, %v2347
      %v2364 = vld [vmem:[%s637 + $0x6] sm:$0x1]
      %v2365 = vlaneseq
      %v2366 = vshrl.u32 %v2365, 7
      %v2367 = vsub.s32 0, %v2366
      %v2368 = vrot.slane %v2364, %v2367
      %v2369 = vmul.f32 %v2266, %v2368
      %v2370 = vmul.f32 %v2267, %v2368
      %v2371 = vmul.f32 %v2268, %v2368
      %v2372 = vmul.f32 %v2269, %v2368
      %v2373 = vmul.f32 %v2270, %v2368
      %v2374 = vmul.f32 %v2271, %v2368
      %v2375 = vmul.f32 %v2272, %v2368
      %v2376 = vmul.f32 %v2273, %v2368
      %v2377 = vmul.f32 %v2274, %v2368
      %v2378 = vmul.f32 %v2275, %v2368
      %v2379 = vmul.f32 %v2276, %v2368
      %v2380 = vmul.f32 %v2277, %v2368
      %v2381 = vmul.f32 %v2278, %v2368
      %v2382 = vmul.f32 %v2279, %v2368
      %v2383 = vmul.f32 %v2280, %v2368
      %v2384 = vmul.f32 %v2281, %v2368
      %v2385 = vadd.f32 %v2348, %v2369
      %v2386 = vadd.f32 %v2349, %v2370
      %v2387 = vadd.f32 %v2350, %v2371
      %v2388 = vadd.f32 %v2351, %v2372
      %v2389 = vadd.f32 %v2352, %v2373
      %v2390 = vadd.f32 %v2353, %v2374
      %v2391 = vadd.f32 %v2354, %v2375
      %v2392 = vadd.f32 %v2355, %v2376
      %v2393 = vadd.f32 %v2356, %v2377
      %v2394 = vadd.f32 %v2357, %v2378
      %v2395 = vadd.f32 %v2358, %v2379
      %v2396 = vadd.f32 %v2359, %v2380
      %v2397 = vadd.f32 %v2360, %v2381
      %v2398 = vadd.f32 %v2361, %v2382
      %v2399 = vadd.f32 %v2362, %v2383
      %v2400 = vadd.f32 %v2363, %v2384
      %v2401 = vld [vmem:[%s675 + $0x6] sm:$0x1]
      %v2402 = vlaneseq
      %v2403 = vshrl.u32 %v2402, 7
      %v2404 = vsub.s32 0, %v2403
      %v2405 = vrot.slane %v2401, %v2404
      %v2406 = vmul.f32 %v2268, %v2405
      %v2407 = vmul.f32 %v2269, %v2405
      %v2408 = vmul.f32 %v2270, %v2405
      %v2409 = vmul.f32 %v2271, %v2405
      %v2410 = vmul.f32 %v2272, %v2405
      %v2411 = vmul.f32 %v2273, %v2405
      %v2412 = vmul.f32 %v2274, %v2405
      %v2413 = vmul.f32 %v2275, %v2405
      %v2414 = vmul.f32 %v2276, %v2405
      %v2415 = vmul.f32 %v2277, %v2405
      %v2416 = vmul.f32 %v2278, %v2405
      %v2417 = vmul.f32 %v2279, %v2405
      %v2418 = vmul.f32 %v2280, %v2405
      %v2419 = vmul.f32 %v2281, %v2405
      %v2420 = vmul.f32 %v2282, %v2405
      %v2421 = vmul.f32 %v2283, %v2405
      %v2422 = vadd.f32 %v2385, %v2406
      %v2423 = vadd.f32 %v2386, %v2407
      %v2424 = vadd.f32 %v2387, %v2408
      %v2425 = vadd.f32 %v2388, %v2409
      %v2426 = vadd.f32 %v2389, %v2410
      %v2427 = vadd.f32 %v2390, %v2411
      %v2428 = vadd.f32 %v2391, %v2412
      %v2429 = vadd.f32 %v2392, %v2413
      %v2430 = vadd.f32 %v2393, %v2414
      %v2431 = vadd.f32 %v2394, %v2415
      %v2432 = vadd.f32 %v2395, %v2416
      %v2433 = vadd.f32 %v2396, %v2417
      %v2434 = vadd.f32 %v2397, %v2418
      %v2435 = vadd.f32 %v2398, %v2419
      %v2436 = vadd.f32 %v2399, %v2420
      %v2437 = vadd.f32 %v2400, %v2421
      %v2438 = vld [vmem:[%s713 + $0x6] sm:$0x1]
      %v2439 = vlaneseq
      %v2440 = vshrl.u32 %v2439, 7
      %v2441 = vsub.s32 0, %v2440
      %v2442 = vrot.slane %v2438, %v2441
      %v2443 = vmul.f32 %v2270, %v2442
      %v2444 = vmul.f32 %v2271, %v2442
      %v2445 = vmul.f32 %v2272, %v2442
      %v2446 = vmul.f32 %v2273, %v2442
      %v2447 = vmul.f32 %v2274, %v2442
      %v2448 = vmul.f32 %v2275, %v2442
      %v2449 = vmul.f32 %v2276, %v2442
      %v2450 = vmul.f32 %v2277, %v2442
      %v2451 = vmul.f32 %v2278, %v2442
      %v2452 = vmul.f32 %v2279, %v2442
      %v2453 = vmul.f32 %v2280, %v2442
      %v2454 = vmul.f32 %v2281, %v2442
      %v2455 = vmul.f32 %v2282, %v2442
      %v2456 = vmul.f32 %v2283, %v2442
      %v2457 = vmul.f32 %v2284, %v2442
      %v2458 = vmul.f32 %v2285, %v2442
      %v2459 = vadd.f32 %v2422, %v2443
      %v2460 = vadd.f32 %v2423, %v2444
      %v2461 = vadd.f32 %v2424, %v2445
      %v2462 = vadd.f32 %v2425, %v2446
      %v2463 = vadd.f32 %v2426, %v2447
      %v2464 = vadd.f32 %v2427, %v2448
      %v2465 = vadd.f32 %v2428, %v2449
      %v2466 = vadd.f32 %v2429, %v2450
      %v2467 = vadd.f32 %v2430, %v2451
      %v2468 = vadd.f32 %v2431, %v2452
      %v2469 = vadd.f32 %v2432, %v2453
      %v2470 = vadd.f32 %v2433, %v2454
      %v2471 = vadd.f32 %v2434, %v2455
      %v2472 = vadd.f32 %v2435, %v2456
      %v2473 = vadd.f32 %v2436, %v2457
      %v2474 = vadd.f32 %v2437, %v2458
      %v2475 = vld [vmem:[%s751 + $0x6] sm:$0x1]
      %v2476 = vlaneseq
      %v2477 = vshrl.u32 %v2476, 7
      %v2478 = vsub.s32 0, %v2477
      %v2479 = vrot.slane %v2475, %v2478
      %v2480 = vmul.f32 %v2272, %v2479
      %v2481 = vmul.f32 %v2273, %v2479
      %v2482 = vmul.f32 %v2274, %v2479
      %v2483 = vmul.f32 %v2275, %v2479
      %v2484 = vmul.f32 %v2276, %v2479
      %v2485 = vmul.f32 %v2277, %v2479
      %v2486 = vmul.f32 %v2278, %v2479
      %v2487 = vmul.f32 %v2279, %v2479
      %v2488 = vmul.f32 %v2280, %v2479
      %v2489 = vmul.f32 %v2281, %v2479
      %v2490 = vmul.f32 %v2282, %v2479
      %v2491 = vmul.f32 %v2283, %v2479
      %v2492 = vmul.f32 %v2284, %v2479
      %v2493 = vmul.f32 %v2285, %v2479
      %v2494 = vmul.f32 %v2286, %v2479
      %v2495 = vmul.f32 %v2287, %v2479
      %v2496 = vadd.f32 %v2459, %v2480
      %v2497 = vadd.f32 %v2460, %v2481
      %v2498 = vadd.f32 %v2461, %v2482
      %v2499 = vadd.f32 %v2462, %v2483
      %v2500 = vadd.f32 %v2463, %v2484
      %v2501 = vadd.f32 %v2464, %v2485
      %v2502 = vadd.f32 %v2465, %v2486
      %v2503 = vadd.f32 %v2466, %v2487
      %v2504 = vadd.f32 %v2467, %v2488
      %v2505 = vadd.f32 %v2468, %v2489
      %v2506 = vadd.f32 %v2469, %v2490
      %v2507 = vadd.f32 %v2470, %v2491
      %v2508 = vadd.f32 %v2471, %v2492
      %v2509 = vadd.f32 %v2472, %v2493
      %v2510 = vadd.f32 %v2473, %v2494
      %v2511 = vadd.f32 %v2474, %v2495
      %v2512 = vld [vmem:[%s789 + $0x6] sm:$0x1]
      %v2513 = vlaneseq
      %v2514 = vshrl.u32 %v2513, 7
      %v2515 = vsub.s32 0, %v2514
      %v2516 = vrot.slane %v2512, %v2515
      %v2517 = vmul.f32 %v2274, %v2516
      %v2518 = vmul.f32 %v2275, %v2516
      %v2519 = vmul.f32 %v2276, %v2516
      %v2520 = vmul.f32 %v2277, %v2516
      %v2521 = vmul.f32 %v2278, %v2516
      %v2522 = vmul.f32 %v2279, %v2516
      %v2523 = vmul.f32 %v2280, %v2516
      %v2524 = vmul.f32 %v2281, %v2516
      %v2525 = vmul.f32 %v2282, %v2516
      %v2526 = vmul.f32 %v2283, %v2516
      %v2527 = vmul.f32 %v2284, %v2516
      %v2528 = vmul.f32 %v2285, %v2516
      %v2529 = vmul.f32 %v2286, %v2516
      %v2530 = vmul.f32 %v2287, %v2516
      %v2531 = vmul.f32 %v2288, %v2516
      %v2532 = vmul.f32 %v2289, %v2516
      %v2533 = vadd.f32 %v2496, %v2517
      %v2534 = vadd.f32 %v2497, %v2518
      %v2535 = vadd.f32 %v2498, %v2519
      %v2536 = vadd.f32 %v2499, %v2520
      %v2537 = vadd.f32 %v2500, %v2521
      %v2538 = vadd.f32 %v2501, %v2522
      %v2539 = vadd.f32 %v2502, %v2523
      %v2540 = vadd.f32 %v2503, %v2524
      %v2541 = vadd.f32 %v2504, %v2525
      %v2542 = vadd.f32 %v2505, %v2526
      %v2543 = vadd.f32 %v2506, %v2527
      %v2544 = vadd.f32 %v2507, %v2528
      %v2545 = vadd.f32 %v2508, %v2529
      %v2546 = vadd.f32 %v2509, %v2530
      %v2547 = vadd.f32 %v2510, %v2531
      %v2548 = vadd.f32 %v2511, %v2532
      %v2549 = vsel %vm385, %v2533, 0.0
      %2550 = vadd.xlane.f32.xlu0 %v2549
      %v2551 = vpop.xlane.xlu0 %2550
      %v2552 = vsel %vm385, %v2534, 0.0
      %2553 = vadd.xlane.f32.xlu0 %v2552
      %v2554 = vpop.xlane.xlu0 %2553
      %v2555 = vsel %vm385, %v2535, 0.0
      %2556 = vadd.xlane.f32.xlu0 %v2555
      %v2557 = vpop.xlane.xlu0 %2556
      %v2558 = vsel %vm385, %v2536, 0.0
      %2559 = vadd.xlane.f32.xlu0 %v2558
      %v2560 = vpop.xlane.xlu0 %2559
      %v2561 = vsel %vm385, %v2537, 0.0
      %2562 = vadd.xlane.f32.xlu0 %v2561
      %v2563 = vpop.xlane.xlu0 %2562
      %v2564 = vsel %vm385, %v2538, 0.0
      %2565 = vadd.xlane.f32.xlu0 %v2564
      %v2566 = vpop.xlane.xlu0 %2565
      %v2567 = vsel %vm385, %v2539, 0.0
      %2568 = vadd.xlane.f32.xlu0 %v2567
      %v2569 = vpop.xlane.xlu0 %2568
      %v2570 = vsel %vm385, %v2540, 0.0
      %2571 = vadd.xlane.f32.xlu0 %v2570
      %v2572 = vpop.xlane.xlu0 %2571
      %v2573 = vsel %vm385, %v2541, 0.0
      %2574 = vadd.xlane.f32.xlu0 %v2573
      %v2575 = vpop.xlane.xlu0 %2574
      %v2576 = vsel %vm385, %v2542, 0.0
      %2577 = vadd.xlane.f32.xlu0 %v2576
      %v2578 = vpop.xlane.xlu0 %2577
      %v2579 = vsel %vm385, %v2543, 0.0
      %2580 = vadd.xlane.f32.xlu0 %v2579
      %v2581 = vpop.xlane.xlu0 %2580
      %v2582 = vsel %vm385, %v2544, 0.0
      %2583 = vadd.xlane.f32.xlu0 %v2582
      %v2584 = vpop.xlane.xlu0 %2583
      %v2585 = vsel %vm385, %v2545, 0.0
      %2586 = vadd.xlane.f32.xlu0 %v2585
      %v2587 = vpop.xlane.xlu0 %2586
      %v2588 = vsel %vm385, %v2546, 0.0
      %2589 = vadd.xlane.f32.xlu0 %v2588
      %v2590 = vpop.xlane.xlu0 %2589
      %v2591 = vsel %vm385, %v2547, 0.0
      %2592 = vadd.xlane.f32.xlu0 %v2591
      %v2593 = vpop.xlane.xlu0 %2592
      %v2594 = vsel %vm385, %v2548, 0.0
      %2595 = vadd.xlane.f32.xlu0 %v2594
      %v2596 = vpop.xlane.xlu0 %2595
      %v2597 = vrcp.pop 4.0
      %v2598 = vmul.f32 %v2551, %v2597
      %v2599 = vmul.f32 %v2554, %v2597
      %v2600 = vmul.f32 %v2557, %v2597
      %v2601 = vmul.f32 %v2560, %v2597
      %v2602 = vmul.f32 %v2563, %v2597
      %v2603 = vmul.f32 %v2566, %v2597
      %v2604 = vmul.f32 %v2569, %v2597
      %v2605 = vmul.f32 %v2572, %v2597
      %v2606 = vmul.f32 %v2575, %v2597
      %v2607 = vmul.f32 %v2578, %v2597
      %v2608 = vmul.f32 %v2581, %v2597
      %v2609 = vmul.f32 %v2584, %v2597
      %v2610 = vmul.f32 %v2587, %v2597
      %v2611 = vmul.f32 %v2590, %v2597
      %v2612 = vmul.f32 %v2593, %v2597
      %v2613 = vmul.f32 %v2596, %v2597
      %v2614 = vsub.f32 %v2533, %v2598
      %v2615 = vsub.f32 %v2534, %v2599
      %v2616 = vsub.f32 %v2535, %v2600
      %v2617 = vsub.f32 %v2536, %v2601
      %v2618 = vsub.f32 %v2537, %v2602
      %v2619 = vsub.f32 %v2538, %v2603
      %v2620 = vsub.f32 %v2539, %v2604
      %v2621 = vsub.f32 %v2540, %v2605
      %v2622 = vsub.f32 %v2541, %v2606
      %v2623 = vsub.f32 %v2542, %v2607
      %v2624 = vsub.f32 %v2543, %v2608
      %v2625 = vsub.f32 %v2544, %v2609
      %v2626 = vsub.f32 %v2545, %v2610
      %v2627 = vsub.f32 %v2546, %v2611
      %v2628 = vsub.f32 %v2547, %v2612
      %v2629 = vsub.f32 %v2548, %v2613
      %v2630 = vmul.f32 %v2614, %v2614
      %v2631 = vmul.f32 %v2615, %v2615
      %v2632 = vmul.f32 %v2616, %v2616
      %v2633 = vmul.f32 %v2617, %v2617
      %v2634 = vmul.f32 %v2618, %v2618
      %v2635 = vmul.f32 %v2619, %v2619
      %v2636 = vmul.f32 %v2620, %v2620
      %v2637 = vmul.f32 %v2621, %v2621
      %v2638 = vmul.f32 %v2622, %v2622
      %v2639 = vmul.f32 %v2623, %v2623
      %v2640 = vmul.f32 %v2624, %v2624
      %v2641 = vmul.f32 %v2625, %v2625
      %v2642 = vmul.f32 %v2626, %v2626
      %v2643 = vmul.f32 %v2627, %v2627
      %v2644 = vmul.f32 %v2628, %v2628
      %v2645 = vmul.f32 %v2629, %v2629
      %v2646 = vsel %vm385, %v2630, 0.0
      %2647 = vadd.xlane.f32.xlu0 %v2646
      %v2648 = vpop.xlane.xlu0 %2647
      %v2649 = vsel %vm385, %v2631, 0.0
      %2650 = vadd.xlane.f32.xlu0 %v2649
      %v2651 = vpop.xlane.xlu0 %2650
      %v2652 = vsel %vm385, %v2632, 0.0
      %2653 = vadd.xlane.f32.xlu0 %v2652
      %v2654 = vpop.xlane.xlu0 %2653
      %v2655 = vsel %vm385, %v2633, 0.0
      %2656 = vadd.xlane.f32.xlu0 %v2655
      %v2657 = vpop.xlane.xlu0 %2656
      %v2658 = vsel %vm385, %v2634, 0.0
      %2659 = vadd.xlane.f32.xlu0 %v2658
      %v2660 = vpop.xlane.xlu0 %2659
      %v2661 = vsel %vm385, %v2635, 0.0
      %2662 = vadd.xlane.f32.xlu0 %v2661
      %v2663 = vpop.xlane.xlu0 %2662
      %v2664 = vsel %vm385, %v2636, 0.0
      %2665 = vadd.xlane.f32.xlu0 %v2664
      %v2666 = vpop.xlane.xlu0 %2665
      %v2667 = vsel %vm385, %v2637, 0.0
      %2668 = vadd.xlane.f32.xlu0 %v2667
      %v2669 = vpop.xlane.xlu0 %2668
      %v2670 = vsel %vm385, %v2638, 0.0
      %2671 = vadd.xlane.f32.xlu0 %v2670
      %v2672 = vpop.xlane.xlu0 %2671
      %v2673 = vsel %vm385, %v2639, 0.0
      %2674 = vadd.xlane.f32.xlu0 %v2673
      %v2675 = vpop.xlane.xlu0 %2674
      %v2676 = vsel %vm385, %v2640, 0.0
      %2677 = vadd.xlane.f32.xlu0 %v2676
      %v2678 = vpop.xlane.xlu0 %2677
      %v2679 = vsel %vm385, %v2641, 0.0
      %2680 = vadd.xlane.f32.xlu0 %v2679
      %v2681 = vpop.xlane.xlu0 %2680
      %v2682 = vsel %vm385, %v2642, 0.0
      %2683 = vadd.xlane.f32.xlu0 %v2682
      %v2684 = vpop.xlane.xlu0 %2683
      %v2685 = vsel %vm385, %v2643, 0.0
      %2686 = vadd.xlane.f32.xlu0 %v2685
      %v2687 = vpop.xlane.xlu0 %2686
      %v2688 = vsel %vm385, %v2644, 0.0
      %2689 = vadd.xlane.f32.xlu0 %v2688
      %v2690 = vpop.xlane.xlu0 %2689
      %v2691 = vsel %vm385, %v2645, 0.0
      %2692 = vadd.xlane.f32.xlu0 %v2691
      %v2693 = vpop.xlane.xlu0 %2692
      %v2694 = vmul.f32 %v2648, %v2597
      %v2695 = vmul.f32 %v2651, %v2597
      %v2696 = vmul.f32 %v2654, %v2597
      %v2697 = vmul.f32 %v2657, %v2597
      %v2698 = vmul.f32 %v2660, %v2597
      %v2699 = vmul.f32 %v2663, %v2597
      %v2700 = vmul.f32 %v2666, %v2597
      %v2701 = vmul.f32 %v2669, %v2597
      %v2702 = vmul.f32 %v2672, %v2597
      %v2703 = vmul.f32 %v2675, %v2597
      %v2704 = vmul.f32 %v2678, %v2597
      %v2705 = vmul.f32 %v2681, %v2597
      %v2706 = vmul.f32 %v2684, %v2597
      %v2707 = vmul.f32 %v2687, %v2597
      %v2708 = vmul.f32 %v2690, %v2597
      %v2709 = vmul.f32 %v2693, %v2597
      %v2710 = vadd.f32 %v2694, 1e-06
      %v2711 = vadd.f32 %v2695, 1e-06
      %v2712 = vadd.f32 %v2696, 1e-06
      %v2713 = vadd.f32 %v2697, 1e-06
      %v2714 = vadd.f32 %v2698, 1e-06
      %v2715 = vadd.f32 %v2699, 1e-06
      %v2716 = vadd.f32 %v2700, 1e-06
      %v2717 = vadd.f32 %v2701, 1e-06
      %v2718 = vadd.f32 %v2702, 1e-06
      %v2719 = vadd.f32 %v2703, 1e-06
      %v2720 = vadd.f32 %v2704, 1e-06
      %v2721 = vadd.f32 %v2705, 1e-06
      %v2722 = vadd.f32 %v2706, 1e-06
      %v2723 = vadd.f32 %v2707, 1e-06
      %v2724 = vadd.f32 %v2708, 1e-06
      %v2725 = vadd.f32 %v2709, 1e-06
      %v2726 = vrsqrt.pop %v2710
      %v2727 = vrsqrt.pop %v2711
      %v2728 = vrsqrt.pop %v2712
      %v2729 = vrsqrt.pop %v2713
      %v2730 = vrsqrt.pop %v2714
      %v2731 = vrsqrt.pop %v2715
      %v2732 = vrsqrt.pop %v2716
      %v2733 = vrsqrt.pop %v2717
      %v2734 = vrsqrt.pop %v2718
      %v2735 = vrsqrt.pop %v2719
      %v2736 = vrsqrt.pop %v2720
      %v2737 = vrsqrt.pop %v2721
      %v2738 = vrsqrt.pop %v2722
      %v2739 = vrsqrt.pop %v2723
      %v2740 = vrsqrt.pop %v2724
      %v2741 = vrsqrt.pop %v2725
      %v2742 = vmul.f32 %v2614, %v2726
      %v2743 = vmul.f32 %v2615, %v2727
      %v2744 = vmul.f32 %v2616, %v2728
      %v2745 = vmul.f32 %v2617, %v2729
      %v2746 = vmul.f32 %v2618, %v2730
      %v2747 = vmul.f32 %v2619, %v2731
      %v2748 = vmul.f32 %v2620, %v2732
      %v2749 = vmul.f32 %v2621, %v2733
      %v2750 = vmul.f32 %v2622, %v2734
      %v2751 = vmul.f32 %v2623, %v2735
      %v2752 = vmul.f32 %v2624, %v2736
      %v2753 = vmul.f32 %v2625, %v2737
      %v2754 = vmul.f32 %v2626, %v2738
      %v2755 = vmul.f32 %v2627, %v2739
      %v2756 = vmul.f32 %v2628, %v2740
      %v2757 = vmul.f32 %v2629, %v2741
      %v2758 = vld [vmem:[%s3] sm:$0x1]
      %v2760 = vlaneseq
      %v2761 = vshrl.u32 %v2760, 7
      %v2762 = vsub.s32 0, %v2761
      %v2763 = vrot.slane %v2758, %v2762
      %v2765 = vmul.f32 %v2742, %v2763
      %v2766 = vmul.f32 %v2743, %v2763
      %v2767 = vmul.f32 %v2744, %v2763
      %v2768 = vmul.f32 %v2745, %v2763
      %v2769 = vmul.f32 %v2746, %v2763
      %v2770 = vmul.f32 %v2747, %v2763
      %v2771 = vmul.f32 %v2748, %v2763
      %v2772 = vmul.f32 %v2749, %v2763
      %v2773 = vmul.f32 %v2750, %v2763
      %v2774 = vmul.f32 %v2751, %v2763
      %v2775 = vmul.f32 %v2752, %v2763
      %v2776 = vmul.f32 %v2753, %v2763
      %v2777 = vmul.f32 %v2754, %v2763
      %v2778 = vmul.f32 %v2755, %v2763
      %v2779 = vmul.f32 %v2756, %v2763
      %v2780 = vmul.f32 %v2757, %v2763
      %v2781 = vld [vmem:[%s4] sm:$0x1]
      %v2783 = vlaneseq
      %v2784 = vshrl.u32 %v2783, 7
      %v2785 = vsub.s32 0, %v2784
      %v2786 = vrot.slane %v2781, %v2785
      %v2788 = vadd.f32 %v2765, %v2786
      %v2789 = vadd.f32 %v2766, %v2786
      %v2790 = vadd.f32 %v2767, %v2786
      %v2791 = vadd.f32 %v2768, %v2786
      %v2792 = vadd.f32 %v2769, %v2786
      %v2793 = vadd.f32 %v2770, %v2786
      %v2794 = vadd.f32 %v2771, %v2786
      %v2795 = vadd.f32 %v2772, %v2786
      %v2796 = vadd.f32 %v2773, %v2786
      %v2797 = vadd.f32 %v2774, %v2786
      %v2798 = vadd.f32 %v2775, %v2786
      %v2799 = vadd.f32 %v2776, %v2786
      %v2800 = vadd.f32 %v2777, %v2786
      %v2801 = vadd.f32 %v2778, %v2786
      %v2802 = vadd.f32 %v2779, %v2786
      %v2803 = vadd.f32 %v2780, %v2786
      %v2804 = vld [vmem:[%s5] sm:$0xf]
      %v2805 = vld [vmem:[%s6] sm:$0x1]
      %v2807 = vlaneseq
      %v2808 = vshrl.u32 %v2807, 7
      %v2809 = vsub.s32 0, %v2808
      %v2810 = vrot.slane %v2805, %v2809
      %v2813 = vsel %vm385, %v2788, 0
      %v2816 = vsel %vm385, %v2789, 0
      %v2819 = vsel %vm385, %v2790, 0
      %v2822 = vsel %vm385, %v2791, 0
      %v2825 = vsel %vm385, %v2792, 0
      %v2828 = vsel %vm385, %v2793, 0
      %v2831 = vsel %vm385, %v2794, 0
      %v2834 = vsel %vm385, %v2795, 0
      %v2837 = vsel %vm385, %v2796, 0
      %v2840 = vsel %vm385, %v2797, 0
      %v2843 = vsel %vm385, %v2798, 0
      %v2846 = vsel %vm385, %v2799, 0
      %v2849 = vsel %vm385, %v2800, 0
      %v2852 = vsel %vm385, %v2801, 0
      %v2855 = vsel %vm385, %v2802, 0
      %v2858 = vsel %vm385, %v2803, 0
      %vm2860 = vcmask 1043456
      %v2862 = vsel %vm2860, %v2804, 0
      %2864 = vmatprep.subr.mxu0 0.0
      %2865 = vmatpush1.msra.mxu0 0.0
      %2866 = vmatprep.subr.mxu0 0.0
      %2867 = vmatpush1.msra.mxu0 0.0
      %2868 = vmatprep.subr.mxu0 0.0
      %2869 = vmatpush1.msra.mxu0 0.0
      %2870 = vmatprep.subr.mxu0 0.0
      %2871 = vmatpush1.msra.mxu0 0.0
      %2872 = vmatprep.subr.mxu0 0.0
      %2873 = vmatpush1.msra.mxu0 0.0
      %2874 = vmatprep.subr.mxu0 0.0
      %2875 = vmatpush1.msra.mxu0 0.0
      %2876 = vmatprep.subr.mxu0 0.0
      %2877 = vmatpush1.msra.mxu0 0.0
      %2878 = vmatprep.subr.mxu0 0.0
      %2879 = vmatpush1.msra.mxu0 0.0
      %2880 = vmatprep.subr.mxu0 0.0
      %2881 = vmatpush1.msra.mxu0 0.0
      %2882 = vmatprep.subr.mxu0 0.0
      %2883 = vmatpush1.msra.mxu0 0.0
      %2884 = vmatprep.subr.mxu0 0.0
      %2885 = vmatpush1.msra.mxu0 0.0
      %2886 = vmatprep.subr.mxu0 0.0
      %2887 = vmatpush1.msra.mxu0 0.0
      %2888 = vmatprep.subr.mxu0 0.0
      %2889 = vmatpush1.msra.mxu0 0.0
      %2890 = vmatprep.subr.mxu0 0.0
      %2891 = vmatpush1.msra.mxu0 0.0
      %2892 = vmatprep.subr.mxu0 0.0
      %2893 = vmatpush1.msra.mxu0 0.0
      %2894 = vmatprep.subr.mxu0 0.0
      %2895 = vmatpush1.msra.mxu0 %v2862
      %2896 = vmatprep.subr.mxu0 0.0
      %2897 = vmatpush2.msra.mxu0 0.0
      %2898 = vmatprep.subr.mxu0 0.0
      %2899 = vmatpush2.msra.mxu0 0.0
      %2900 = vmatprep.subr.mxu0 0.0
      %2901 = vmatpush2.msra.mxu0 0.0
      %2902 = vmatprep.subr.mxu0 0.0
      %2903 = vmatpush2.msra.mxu0 0.0
      %2904 = vmatprep.subr.mxu0 0.0
      %2905 = vmatpush2.msra.mxu0 0.0
      %2906 = vmatprep.subr.mxu0 0.0
      %2907 = vmatpush2.msra.mxu0 0.0
      %2908 = vmatprep.subr.mxu0 0.0
      %2909 = vmatpush2.msra.mxu0 0.0
      %2910 = vmatprep.subr.mxu0 0.0
      %2911 = vmatpush2.msra.mxu0 0.0
      %2912 = vmatprep.subr.mxu0 0.0
      %2913 = vmatpush2.msra.mxu0 0.0
      %2914 = vmatprep.subr.mxu0 0.0
      %2915 = vmatpush2.msra.mxu0 0.0
      %2916 = vmatprep.subr.mxu0 0.0
      %2917 = vmatpush2.msra.mxu0 0.0
      %2918 = vmatprep.subr.mxu0 0.0
      %2919 = vmatpush2.msra.mxu0 0.0
      %2920 = vmatprep.subr.mxu0 0.0
      %2921 = vmatpush2.msra.mxu0 0.0
      %2922 = vmatprep.subr.mxu0 0.0
      %2923 = vmatpush2.msra.mxu0 0.0
      %2924 = vmatprep.subr.mxu0 0.0
      %2925 = vmatpush2.msra.mxu0 0.0
      %2926 = vmatprep.subr.mxu0 0.0
      %2927 = vmatpush2.msra.mxu0 0.0
      %2928 = vmatprep.mubr.f32.mxu0 0.0
      %2929 = vmatmul.mubr.f32.gmra.mxu0 %v2813
      %v2930 = vpop.f32.mrf.mxu0
      %v2931 = vadd.f32 %v2810, %v2930
      %v2932 = vpop.f32.mrf.mxu0
      %2933 = vmatprep.mubr.f32.mxu0 0.0
      %2934 = vmatmul.mubr.f32.gmra.mxu0 %v2816
      %v2935 = vpop.f32.mrf.mxu0
      %v2936 = vadd.f32 %v2810, %v2935
      %v2937 = vpop.f32.mrf.mxu0
      %2938 = vmatprep.mubr.f32.mxu0 0.0
      %2939 = vmatmul.mubr.f32.gmra.mxu0 %v2819
      %v2940 = vpop.f32.mrf.mxu0
      %v2941 = vadd.f32 %v2810, %v2940
      %v2942 = vpop.f32.mrf.mxu0
      %2943 = vmatprep.mubr.f32.mxu0 0.0
      %2944 = vmatmul.mubr.f32.gmra.mxu0 %v2822
      %v2945 = vpop.f32.mrf.mxu0
      %v2946 = vadd.f32 %v2810, %v2945
      %v2947 = vpop.f32.mrf.mxu0
      %2948 = vmatprep.mubr.f32.mxu0 0.0
      %2949 = vmatmul.mubr.f32.gmra.mxu0 %v2825
      %v2950 = vpop.f32.mrf.mxu0
      %v2951 = vadd.f32 %v2810, %v2950
      %v2952 = vpop.f32.mrf.mxu0
      %2953 = vmatprep.mubr.f32.mxu0 0.0
      %2954 = vmatmul.mubr.f32.gmra.mxu0 %v2828
      %v2955 = vpop.f32.mrf.mxu0
      %v2956 = vadd.f32 %v2810, %v2955
      %v2957 = vpop.f32.mrf.mxu0
      %2958 = vmatprep.mubr.f32.mxu0 0.0
      %2959 = vmatmul.mubr.f32.gmra.mxu0 %v2831
      %v2960 = vpop.f32.mrf.mxu0
      %v2961 = vadd.f32 %v2810, %v2960
      %v2962 = vpop.f32.mrf.mxu0
      %2963 = vmatprep.mubr.f32.mxu0 0.0
      %2964 = vmatmul.mubr.f32.gmra.mxu0 %v2834
      %v2965 = vpop.f32.mrf.mxu0
      %v2966 = vadd.f32 %v2810, %v2965
      %v2967 = vpop.f32.mrf.mxu0
      %2968 = vmatprep.mubr.f32.mxu0 0.0
      %2969 = vmatmul.mubr.f32.gmra.mxu0 %v2837
      %v2970 = vpop.f32.mrf.mxu0
      %v2971 = vadd.f32 %v2810, %v2970
      %v2972 = vpop.f32.mrf.mxu0
      %2973 = vmatprep.mubr.f32.mxu0 0.0
      %2974 = vmatmul.mubr.f32.gmra.mxu0 %v2840
      %v2975 = vpop.f32.mrf.mxu0
      %v2976 = vadd.f32 %v2810, %v2975
      %v2977 = vpop.f32.mrf.mxu0
      %2978 = vmatprep.mubr.f32.mxu0 0.0
      %2979 = vmatmul.mubr.f32.gmra.mxu0 %v2843
      %v2980 = vpop.f32.mrf.mxu0
      %v2981 = vadd.f32 %v2810, %v2980
      %v2982 = vpop.f32.mrf.mxu0
      %2983 = vmatprep.mubr.f32.mxu0 0.0
      %2984 = vmatmul.mubr.f32.gmra.mxu0 %v2846
      %v2985 = vpop.f32.mrf.mxu0
      %v2986 = vadd.f32 %v2810, %v2985
      %v2987 = vpop.f32.mrf.mxu0
      %2988 = vmatprep.mubr.f32.mxu0 0.0
      %2989 = vmatmul.mubr.f32.gmra.mxu0 %v2849
      %v2990 = vpop.f32.mrf.mxu0
      %v2991 = vadd.f32 %v2810, %v2990
      %v2992 = vpop.f32.mrf.mxu0
      %2993 = vmatprep.mubr.f32.mxu0 0.0
      %2994 = vmatmul.mubr.f32.gmra.mxu0 %v2852
      %v2995 = vpop.f32.mrf.mxu0
      %v2996 = vadd.f32 %v2810, %v2995
      %v2997 = vpop.f32.mrf.mxu0
      %2998 = vmatprep.mubr.f32.mxu0 0.0
      %2999 = vmatmul.mubr.f32.gmra.mxu0 %v2855
      %v3000 = vpop.f32.mrf.mxu0
      %v3001 = vadd.f32 %v2810, %v3000
      %v3002 = vpop.f32.mrf.mxu0
      %3003 = vmatprep.mubr.f32.mxu0 0.0
      %3004 = vmatmul.mubr.f32.gmra.mxu0 %v2858
      %v3005 = vpop.f32.mrf.mxu0
      %v3006 = vadd.f32 %v2810, %v3005
      %v3007 = vpop.f32.mrf.mxu0
      %3008 = vdwg.mxu0
      %v3009 = vmul.f32 %v2931, 0.5
      %v3010 = vmul.f32 %v2936, 0.5
      %v3011 = vmul.f32 %v2941, 0.5
      %v3012 = vmul.f32 %v2946, 0.5
      %v3013 = vmul.f32 %v2951, 0.5
      %v3014 = vmul.f32 %v2956, 0.5
      %v3015 = vmul.f32 %v2961, 0.5
      %v3016 = vmul.f32 %v2966, 0.5
      %v3017 = vmul.f32 %v2971, 0.5
      %v3018 = vmul.f32 %v2976, 0.5
      %v3019 = vmul.f32 %v2981, 0.5
      %v3020 = vmul.f32 %v2986, 0.5
      %v3021 = vmul.f32 %v2991, 0.5
      %v3022 = vmul.f32 %v2996, 0.5
      %v3023 = vmul.f32 %v3001, 0.5
      %v3024 = vmul.f32 %v3006, 0.5
      %v3025 = vmul.f32 %v2931, 0.70710677
      %v3026 = vmul.f32 %v2936, 0.70710677
      %v3027 = vmul.f32 %v2941, 0.70710677
      %v3028 = vmul.f32 %v2946, 0.70710677
      %v3029 = vmul.f32 %v2951, 0.70710677
      %v3030 = vmul.f32 %v2956, 0.70710677
      %v3031 = vmul.f32 %v2961, 0.70710677
      %v3032 = vmul.f32 %v2966, 0.70710677
      %v3033 = vmul.f32 %v2971, 0.70710677
      %v3034 = vmul.f32 %v2976, 0.70710677
      %v3035 = vmul.f32 %v2981, 0.70710677
      %v3036 = vmul.f32 %v2986, 0.70710677
      %v3037 = vmul.f32 %v2991, 0.70710677
      %v3038 = vmul.f32 %v2996, 0.70710677
      %v3039 = vmul.f32 %v3001, 0.70710677
      %v3040 = vmul.f32 %v3006, 0.70710677
      %v3041 = verf.f32.pop %v3025
      %v3042 = verf.f32.pop %v3026
      %v3043 = verf.f32.pop %v3027
      %v3044 = verf.f32.pop %v3028
      %v3045 = verf.f32.pop %v3029
      %v3046 = verf.f32.pop %v3030
      %v3047 = verf.f32.pop %v3031
      %v3048 = verf.f32.pop %v3032
      %v3049 = verf.f32.pop %v3033
      %v3050 = verf.f32.pop %v3034
      %v3051 = verf.f32.pop %v3035
      %v3052 = verf.f32.pop %v3036
      %v3053 = verf.f32.pop %v3037
      %v3054 = verf.f32.pop %v3038
      %v3055 = verf.f32.pop %v3039
      %v3056 = verf.f32.pop %v3040
      %v3057 = vadd.f32 %v3041, 1.0
      %v3058 = vadd.f32 %v3042, 1.0
      %v3059 = vadd.f32 %v3043, 1.0
      %v3060 = vadd.f32 %v3044, 1.0
      %v3061 = vadd.f32 %v3045, 1.0
      %v3062 = vadd.f32 %v3046, 1.0
      %v3063 = vadd.f32 %v3047, 1.0
      %v3064 = vadd.f32 %v3048, 1.0
      %v3065 = vadd.f32 %v3049, 1.0
      %v3066 = vadd.f32 %v3050, 1.0
      %v3067 = vadd.f32 %v3051, 1.0
      %v3068 = vadd.f32 %v3052, 1.0
      %v3069 = vadd.f32 %v3053, 1.0
      %v3070 = vadd.f32 %v3054, 1.0
      %v3071 = vadd.f32 %v3055, 1.0
      %v3072 = vadd.f32 %v3056, 1.0
      %v3073 = vmul.f32 %v3009, %v3057
      %v3074 = vmul.f32 %v3010, %v3058
      %v3075 = vmul.f32 %v3011, %v3059
      %v3076 = vmul.f32 %v3012, %v3060
      %v3077 = vmul.f32 %v3013, %v3061
      %v3078 = vmul.f32 %v3014, %v3062
      %v3079 = vmul.f32 %v3015, %v3063
      %v3080 = vmul.f32 %v3016, %v3064
      %v3081 = vmul.f32 %v3017, %v3065
      %v3082 = vmul.f32 %v3018, %v3066
      %v3083 = vmul.f32 %v3019, %v3067
      %v3084 = vmul.f32 %v3020, %v3068
      %v3085 = vmul.f32 %v3021, %v3069
      %v3086 = vmul.f32 %v3022, %v3070
      %v3087 = vmul.f32 %v3023, %v3071
      %v3088 = vmul.f32 %v3024, %v3072
      %v3089 = vld [vmem:[%s7] sm:$0xff]
      %v3090 = vld [vmem:[%s7 + $0x8] sm:$0xff]
      %v3091 = vld [vmem:[%s8] sm:$0x1]
      %v3093 = vlaneseq
      %v3094 = vshrl.u32 %v3093, 7
      %v3095 = vsub.s32 0, %v3094
      %v3096 = vrot.slane %v3091, %v3095
      %vm3098 = vcmask 130048
      %v3100 = vsel %vm3098, %v3073, 0
      %v3103 = vsel %vm3098, %v3074, 0
      %v3106 = vsel %vm3098, %v3075, 0
      %v3109 = vsel %vm3098, %v3076, 0
      %v3112 = vsel %vm3098, %v3077, 0
      %v3115 = vsel %vm3098, %v3078, 0
      %v3118 = vsel %vm3098, %v3079, 0
      %v3121 = vsel %vm3098, %v3080, 0
      %v3124 = vsel %vm3098, %v3081, 0
      %v3127 = vsel %vm3098, %v3082, 0
      %v3130 = vsel %vm3098, %v3083, 0
      %v3133 = vsel %vm3098, %v3084, 0
      %v3136 = vsel %vm3098, %v3085, 0
      %v3139 = vsel %vm3098, %v3086, 0
      %v3142 = vsel %vm3098, %v3087, 0
      %v3145 = vsel %vm3098, %v3088, 0
      %3147 = vmatprep.subr.mxu0 0.0
      %3148 = vmatpush1.msra.mxu0 0.0
      %3149 = vmatprep.subr.mxu0 0.0
      %3150 = vmatpush1.msra.mxu0 0.0
      %3151 = vmatprep.subr.mxu0 0.0
      %3152 = vmatpush1.msra.mxu0 0.0
      %3153 = vmatprep.subr.mxu0 0.0
      %3154 = vmatpush1.msra.mxu0 0.0
      %3155 = vmatprep.subr.mxu0 0.0
      %3156 = vmatpush1.msra.mxu0 0.0
      %3157 = vmatprep.subr.mxu0 0.0
      %3158 = vmatpush1.msra.mxu0 0.0
      %3159 = vmatprep.subr.mxu0 0.0
      %3160 = vmatpush1.msra.mxu0 0.0
      %3161 = vmatprep.subr.mxu0 0.0
      %3162 = vmatpush1.msra.mxu0 0.0
      %3163 = vmatprep.subr.mxu0 0.0
      %3164 = vmatpush1.msra.mxu0 0.0
      %3165 = vmatprep.subr.mxu0 0.0
      %3166 = vmatpush1.msra.mxu0 0.0
      %3167 = vmatprep.subr.mxu0 0.0
      %3168 = vmatpush1.msra.mxu0 0.0
      %3169 = vmatprep.subr.mxu0 0.0
      %3170 = vmatpush1.msra.mxu0 0.0
      %3171 = vmatprep.subr.mxu0 0.0
      %3172 = vmatpush1.msra.mxu0 0.0
      %3173 = vmatprep.subr.mxu0 0.0
      %3174 = vmatpush1.msra.mxu0 0.0
      %3175 = vmatprep.subr.mxu0 0.0
      %3176 = vmatpush1.msra.mxu0 %v3090
      %3177 = vmatprep.subr.mxu0 0.0
      %3178 = vmatpush1.msra.mxu0 %v3089
      %3179 = vmatprep.subr.mxu0 0.0
      %3180 = vmatpush2.msra.mxu0 0.0
      %3181 = vmatprep.subr.mxu0 0.0
      %3182 = vmatpush2.msra.mxu0 0.0
      %3183 = vmatprep.subr.mxu0 0.0
      %3184 = vmatpush2.msra.mxu0 0.0
      %3185 = vmatprep.subr.mxu0 0.0
      %3186 = vmatpush2.msra.mxu0 0.0
      %3187 = vmatprep.subr.mxu0 0.0
      %3188 = vmatpush2.msra.mxu0 0.0
      %3189 = vmatprep.subr.mxu0 0.0
      %3190 = vmatpush2.msra.mxu0 0.0
      %3191 = vmatprep.subr.mxu0 0.0
      %3192 = vmatpush2.msra.mxu0 0.0
      %3193 = vmatprep.subr.mxu0 0.0
      %3194 = vmatpush2.msra.mxu0 0.0
      %3195 = vmatprep.subr.mxu0 0.0
      %3196 = vmatpush2.msra.mxu0 0.0
      %3197 = vmatprep.subr.mxu0 0.0
      %3198 = vmatpush2.msra.mxu0 0.0
      %3199 = vmatprep.subr.mxu0 0.0
      %3200 = vmatpush2.msra.mxu0 0.0
      %3201 = vmatprep.subr.mxu0 0.0
      %3202 = vmatpush2.msra.mxu0 0.0
      %3203 = vmatprep.subr.mxu0 0.0
      %3204 = vmatpush2.msra.mxu0 0.0
      %3205 = vmatprep.subr.mxu0 0.0
      %3206 = vmatpush2.msra.mxu0 0.0
      %3207 = vmatprep.subr.mxu0 0.0
      %3208 = vmatpush2.msra.mxu0 0.0
      %3209 = vmatprep.subr.mxu0 0.0
      %3210 = vmatpush2.msra.mxu0 0.0
      %3211 = vmatprep.mubr.f32.mxu0 0.0
      %3212 = vmatmul.mubr.f32.gmra.mxu0 %v3100
      %v3213 = vpop.f32.mrf.mxu0
      %v3214 = vadd.f32 %v3096, %v3213
      %v3215 = vpop.f32.mrf.mxu0
      %3216 = vmatprep.mubr.f32.mxu0 0.0
      %3217 = vmatmul.mubr.f32.gmra.mxu0 %v3103
      %v3218 = vpop.f32.mrf.mxu0
      %v3219 = vadd.f32 %v3096, %v3218
      %v3220 = vpop.f32.mrf.mxu0
      %3221 = vmatprep.mubr.f32.mxu0 0.0
      %3222 = vmatmul.mubr.f32.gmra.mxu0 %v3106
      %v3223 = vpop.f32.mrf.mxu0
      %v3224 = vadd.f32 %v3096, %v3223
      %v3225 = vpop.f32.mrf.mxu0
      %3226 = vmatprep.mubr.f32.mxu0 0.0
      %3227 = vmatmul.mubr.f32.gmra.mxu0 %v3109
      %v3228 = vpop.f32.mrf.mxu0
      %v3229 = vadd.f32 %v3096, %v3228
      %v3230 = vpop.f32.mrf.mxu0
      %3231 = vmatprep.mubr.f32.mxu0 0.0
      %3232 = vmatmul.mubr.f32.gmra.mxu0 %v3112
      %v3233 = vpop.f32.mrf.mxu0
      %v3234 = vadd.f32 %v3096, %v3233
      %v3235 = vpop.f32.mrf.mxu0
      %3236 = vmatprep.mubr.f32.mxu0 0.0
      %3237 = vmatmul.mubr.f32.gmra.mxu0 %v3115
      %v3238 = vpop.f32.mrf.mxu0
      %v3239 = vadd.f32 %v3096, %v3238
      %v3240 = vpop.f32.mrf.mxu0
      %3241 = vmatprep.mubr.f32.mxu0 0.0
      %3242 = vmatmul.mubr.f32.gmra.mxu0 %v3118
      %v3243 = vpop.f32.mrf.mxu0
      %v3244 = vadd.f32 %v3096, %v3243
      %v3245 = vpop.f32.mrf.mxu0
      %3246 = vmatprep.mubr.f32.mxu0 0.0
      %3247 = vmatmul.mubr.f32.gmra.mxu0 %v3121
      %v3248 = vpop.f32.mrf.mxu0
      %v3249 = vadd.f32 %v3096, %v3248
      %v3250 = vpop.f32.mrf.mxu0
      %3251 = vmatprep.mubr.f32.mxu0 0.0
      %3252 = vmatmul.mubr.f32.gmra.mxu0 %v3124
      %v3253 = vpop.f32.mrf.mxu0
      %v3254 = vadd.f32 %v3096, %v3253
      %v3255 = vpop.f32.mrf.mxu0
      %3256 = vmatprep.mubr.f32.mxu0 0.0
      %3257 = vmatmul.mubr.f32.gmra.mxu0 %v3127
      %v3258 = vpop.f32.mrf.mxu0
      %v3259 = vadd.f32 %v3096, %v3258
      %v3260 = vpop.f32.mrf.mxu0
      %3261 = vmatprep.mubr.f32.mxu0 0.0
      %3262 = vmatmul.mubr.f32.gmra.mxu0 %v3130
      %v3263 = vpop.f32.mrf.mxu0
      %v3264 = vadd.f32 %v3096, %v3263
      %v3265 = vpop.f32.mrf.mxu0
      %3266 = vmatprep.mubr.f32.mxu0 0.0
      %3267 = vmatmul.mubr.f32.gmra.mxu0 %v3133
      %v3268 = vpop.f32.mrf.mxu0
      %v3269 = vadd.f32 %v3096, %v3268
      %v3270 = vpop.f32.mrf.mxu0
      %3271 = vmatprep.mubr.f32.mxu0 0.0
      %3272 = vmatmul.mubr.f32.gmra.mxu0 %v3136
      %v3273 = vpop.f32.mrf.mxu0
      %v3274 = vadd.f32 %v3096, %v3273
      %v3275 = vpop.f32.mrf.mxu0
      %3276 = vmatprep.mubr.f32.mxu0 0.0
      %3277 = vmatmul.mubr.f32.gmra.mxu0 %v3139
      %v3278 = vpop.f32.mrf.mxu0
      %v3279 = vadd.f32 %v3096, %v3278
      %v3280 = vpop.f32.mrf.mxu0
      %3281 = vmatprep.mubr.f32.mxu0 0.0
      %3282 = vmatmul.mubr.f32.gmra.mxu0 %v3142
      %v3283 = vpop.f32.mrf.mxu0
      %v3284 = vadd.f32 %v3096, %v3283
      %v3285 = vpop.f32.mrf.mxu0
      %3286 = vmatprep.mubr.f32.mxu0 0.0
      %3287 = vmatmul.mubr.f32.gmra.mxu0 %v3145
      %v3288 = vpop.f32.mrf.mxu0
      %v3289 = vadd.f32 %v3096, %v3288
      %v3290 = vpop.f32.mrf.mxu0
      %3291 = vdwg.mxu0
      %s3292 = smul.u32 %s26, 8
      %s3293 = smul.u32 %s3292, 16
      %s3294 = scalar_lea.vmem %s373, %s3293
      %v3295 = vld [vmem:[%s3294] sm:$0xff]
      %v3296 = vld [vmem:[%s3294 + $0x8] sm:$0xff]
      %v3297 = vld [vmem:[%s3294 + $0x10] sm:$0xff]
      %v3298 = vld [vmem:[%s3294 + $0x18] sm:$0xff]
      %v3299 = vld [vmem:[%s3294 + $0x20] sm:$0xff]
      %v3300 = vld [vmem:[%s3294 + $0x28] sm:$0xff]
      %v3301 = vld [vmem:[%s3294 + $0x30] sm:$0xff]
      %v3302 = vld [vmem:[%s3294 + $0x38] sm:$0xff]
      %v3303 = vld [vmem:[%s3294 + $0x40] sm:$0xff]
      %v3304 = vld [vmem:[%s3294 + $0x48] sm:$0xff]
      %v3305 = vld [vmem:[%s3294 + $0x50] sm:$0xff]
      %v3306 = vld [vmem:[%s3294 + $0x58] sm:$0xff]
      %v3307 = vld [vmem:[%s3294 + $0x60] sm:$0xff]
      %v3308 = vld [vmem:[%s3294 + $0x68] sm:$0xff]
      %v3309 = vld [vmem:[%s3294 + $0x70] sm:$0xff]
      %v3310 = vld [vmem:[%s3294 + $0x78] sm:$0xff]
      %v3311 = vld [vmem:[%s9] sm:$0x1]
      %v3313 = vlaneseq
      %v3314 = vshrl.u32 %v3313, 7
      %v3315 = vsub.s32 0, %v3314
      %v3316 = vrot.slane %v3311, %v3315
      %v3318 = vmul.f32 %v3214, %v3316
      %v3319 = vmul.f32 %v3219, %v3316
      %v3320 = vmul.f32 %v3224, %v3316
      %v3321 = vmul.f32 %v3229, %v3316
      %v3322 = vmul.f32 %v3234, %v3316
      %v3323 = vmul.f32 %v3239, %v3316
      %v3324 = vmul.f32 %v3244, %v3316
      %v3325 = vmul.f32 %v3249, %v3316
      %v3326 = vmul.f32 %v3254, %v3316
      %v3327 = vmul.f32 %v3259, %v3316
      %v3328 = vmul.f32 %v3264, %v3316
      %v3329 = vmul.f32 %v3269, %v3316
      %v3330 = vmul.f32 %v3274, %v3316
      %v3331 = vmul.f32 %v3279, %v3316
      %v3332 = vmul.f32 %v3284, %v3316
      %v3333 = vmul.f32 %v3289, %v3316
      %v3334 = vadd.f32 %v3318, %v3295
      %v3335 = vadd.f32 %v3319, %v3296
      %v3336 = vadd.f32 %v3320, %v3297
      %v3337 = vadd.f32 %v3321, %v3298
      %v3338 = vadd.f32 %v3322, %v3299
      %v3339 = vadd.f32 %v3323, %v3300
      %v3340 = vadd.f32 %v3324, %v3301
      %v3341 = vadd.f32 %v3325, %v3302
      %v3342 = vadd.f32 %v3326, %v3303
      %v3343 = vadd.f32 %v3327, %v3304
      %v3344 = vadd.f32 %v3328, %v3305
      %v3345 = vadd.f32 %v3329, %v3306
      %v3346 = vadd.f32 %v3330, %v3307
      %v3347 = vadd.f32 %v3331, %v3308
      %v3348 = vadd.f32 %v3332, %v3309
      %v3349 = vadd.f32 %v3333, %v3310
      %3350 = vst.msk [vmem:[%s383] sm:$0xff] %vm385, %v3334
      %3351 = vst.msk [vmem:[%s383 + $0x8] sm:$0xff] %vm385, %v3335
      %3352 = vst.msk [vmem:[%s383 + $0x10] sm:$0xff] %vm385, %v3336
      %3353 = vst.msk [vmem:[%s383 + $0x18] sm:$0xff] %vm385, %v3337
      %3354 = vst.msk [vmem:[%s383 + $0x20] sm:$0xff] %vm385, %v3338
      %3355 = vst.msk [vmem:[%s383 + $0x28] sm:$0xff] %vm385, %v3339
      %3356 = vst.msk [vmem:[%s383 + $0x30] sm:$0xff] %vm385, %v3340
      %3357 = vst.msk [vmem:[%s383 + $0x38] sm:$0xff] %vm385, %v3341
      %3358 = vst.msk [vmem:[%s383 + $0x40] sm:$0xff] %vm385, %v3342
      %3359 = vst.msk [vmem:[%s383 + $0x48] sm:$0xff] %vm385, %v3343
      %3360 = vst.msk [vmem:[%s383 + $0x50] sm:$0xff] %vm385, %v3344
      %3361 = vst.msk [vmem:[%s383 + $0x58] sm:$0xff] %vm385, %v3345
      %3362 = vst.msk [vmem:[%s383 + $0x60] sm:$0xff] %vm385, %v3346
      %3363 = vst.msk [vmem:[%s383 + $0x68] sm:$0xff] %vm385, %v3347
      %3364 = vst.msk [vmem:[%s383 + $0x70] sm:$0xff] %vm385, %v3348
      %3365 = vst.msk [vmem:[%s383 + $0x78] sm:$0xff] %vm385, %v3349
      %s3366 = smul.u32 8, %s26
      %p3367 = scmp.lt.s32.totalorder %s25, 1
      %s3368 = scalar_select %p3367, %s25, 1
      %p3369 = scmp.lt.s32.totalorder %s3366, 15
      %s3370 = scalar_select %p3369, %s3366, 15
      %s3371 = smul.addr %s3370, 2
      %s3372 = smul.addr %s3368, 32
      %s3373 = sadd.s32 %s3371, %s3372
      %s3374 = smul.addr %s3373, 8
      %s3375 = scalar_lea.vmem %s10, %s3374
      // Predicated region
      $region69: #{tpu_custom_call.1} parent=59 // pred_check
        %p3376 = pneg %p268
      $region70: #{tpu_custom_call.1} parent=59 // pred_check_branch
        %3378 = sbr.rel (%p3376) target = $region72
      $region71: #{tpu_custom_call.1} parent=59 // pred_region
        %s3379 = smul.u32 8, %s26
      $region72: #{tpu_custom_call.1} parent=59 // pred_fallthru
        _
    $region60: #{tpu_custom_call.1} parent=5 // pred_fallthru
      _
    %p3380 = scmp.le.s32.totalorder 2, %s16
    // Predicated region
    $region73: #{tpu_custom_call.1} parent=5 // pred_check
      %p3381 = pneg %p3380
    $region74: #{tpu_custom_call.1} parent=5 // pred_check_branch
      %3383 = sbr.rel (%p3381) target = $region76
    $region75: #{tpu_custom_call.1} parent=5 // pred_region
      %s3384 = ssub.s32 %s16, 2
      // Predicated region
      $region77: #{tpu_custom_call.1} parent=75 // pred_check
        %p3385 = pneg %p274
      $region78: #{tpu_custom_call.1} parent=75 // pred_check_branch
        %3387 = sbr.rel (%p3385) target = $region80
      $region79: #{tpu_custom_call.1} parent=75 // pred_region
        %s3388 = smul.u32 8, %s28
        %p3389 = scmp.lt.s32.totalorder %s27, 1
        %s3390 = scalar_select %p3389, %s27, 1
        %p3391 = scmp.lt.s32.totalorder %s3388, 15
        %s3392 = scalar_select %p3391, %s3388, 15
        %s3393 = smul.addr %s3392, 2
        %s3394 = smul.addr %s3390, 32
        %s3395 = sadd.s32 %s3393, %s3394
        %s3396 = smul.addr %s3395, 8
        %s3397 = scalar_lea.vmem %s10, %s3396
      $region80: #{tpu_custom_call.1} parent=75 // pred_fallthru
        _
    $region76: #{tpu_custom_call.1} parent=5 // pred_fallthru
      _
  $region6: #{tpu_custom_call.1} parent=0 // loop_footer
    %s20 = sadd.s32 1, %s16
  $region7: #{tpu_custom_call.1} parent=0 // loop_footer_branch
    %15 = sbr.rel target = $region3
  $region8: #{tpu_custom_call.1} parent=0 // loop_exit
    _

</llo_original>
